<compile_context>
chip_gen: v7x
topology: tpu7x:2x2x1
jax: 0.10.0
libtpu: 0.0.40
codegen_flags: <defaults>
</compile_context>

<pallas_src>
import functools

import jax
import jax.numpy as jnp
from jax.experimental import pallas as pl
from jax.experimental.pallas import tpu as pltpu

BG_CENTI = 0.2
BG_CONF = 0.0
DIMP_THRESH = 0.05

_NEG = -1e30          # finite "minus infinity" for lane masking (no inf-inf NaNs)
_MXU_MIN_STATE = 8    # use the MXU contraction only when D >= this many rows


def _round_up(x, m):
    return (x + m - 1) // m * m


def _response_predictor_kernel(cv_ref, state_ref, *rest, dimp_thresh, bg_conf,
                               d_state, k_valid, s_valid, use_mxu):
    """Per grid step (Bn sequences):
         cv_ref    : (Bn, Kp, Sp)  cost volume (zero-padded to Kp/Sp)
         state_ref : (Bn, Kp, D)   state (VPU path)  or  (Bn, D, Kp) (MXU path)
         dimp_ref  : (Bn, 1, Sp)   dimp_score_cur    (only when bg_conf != 0)
       outputs:
         cvp2_ref  : (Bn, Kp, Sp)  cost_volume_processed (double softmax)
         small_ref : bg_conf != 0 -> (Bn, 2D+1, Sp): [fused ; ph ; conf]
                     bg_conf == 0 -> (Bn,  D+1, Sp): [ph ; conf]
    """
    if bg_conf != 0.0:
        dimp_ref, cvp2_ref, small_ref = rest
    else:
        dimp_ref = None
        cvp2_ref, small_ref = rest

    D = d_state
    Bn, Kp, Sp = cv_ref.shape
    pad_s = Sp != s_valid
    pad_k = Kp != k_valid

    # Pad-region masks (only materialized for non-aligned shapes).  Built as
    # f32 operands so every broadcast below is a plain (.., X, 1)/(.., 1, X)
    # elementwise broadcast (same patterns as the inv1/inv2 normalizations).
    s_neg = None
    if pad_s:
        s_idx = jax.lax.broadcasted_iota(jnp.int32, (Bn, 1, Sp), 2)
        s_neg = jnp.where(s_idx < s_valid, 0.0, _NEG)            # (Bn, 1, Sp)
    if pad_k:
        k_idx = jax.lax.broadcasted_iota(jnp.int32, (Bn, Kp, 1), 1)
        k_keep = (k_idx < k_valid).astype(jnp.float32)           # (Bn, Kp, 1)

    cv = cv_ref[...]                                             # (Bn, Kp, Sp)
    if pad_s:
        cv = cv + s_neg                                          # pad lanes -> -1e30

    # softmax #1 over the current-frame spatial dim (lane axis)
    # == F.softmax(cost_volume.view(-1, H*W), dim=1)
    m1 = jnp.max(cv, axis=-1, keepdims=True)
    e1 = jnp.exp(cv - m1)
    inv1 = pl.reciprocal(jnp.sum(e1, axis=-1, keepdims=True))    # (Bn, Kp, 1)
    p1 = e1 * inv1                                               # (Bn, Kp, Sp)

    # softmax #2 over K (prev-frame positions, sublane axis).
    # p1 in [0, 1] -> exp cannot overflow: skip the max subtraction.
    # Denominator: VPU vreg adds over the K sublane groups + one intra-vreg
    # XLU reduce — no MXU weight load on the inv2 critical path.
    e2 = jnp.exp(p1)
    if pad_k:
        e2 = e2 * k_keep                                         # zero pad rows
    inv2 = pl.reciprocal(jnp.sum(e2, axis=1, keepdims=True))     # (Bn, 1, Sp)
    p2 = e2 * inv2                                               # (Bn, Kp, Sp)
    cvp2_ref[...] = p2.astype(cvp2_ref.dtype)

    # propagation confidence: entropy over K (keep the module's +1e-4 inside
    # the log for exact parity).  Pad K rows contribute exactly 0.
    conf = -jnp.sum(p2 * jnp.log(p2 + 1e-4), axis=1, keepdims=True)   # (Bn,1,Sp)

    off = D if bg_conf != 0.0 else 0        # row offset of the ph rows
    small_ref[:, off + D:off + D + 1, :] = conf

    if bg_conf != 0.0:
        dimp = dimp_ref[...]                                     # (Bn, 1, Sp)
        gate = (dimp > dimp_thresh).astype(jnp.float32) * bg_conf

    def _softmax_lanes(x):
        if pad_s:
            x = x + s_neg
        m = jnp.max(x, axis=-1, keepdims=True)
        e = jnp.exp(x - m)
        return e * pl.reciprocal(jnp.sum(e, axis=-1, keepdims=True))

    if use_mxu:
        # Large state depth: one batched MXU contraction.
        prop = jnp.einsum('ndk,nks->nds', state_ref[...], p2,
                          preferred_element_type=jnp.float32)    # (Bn, D, Sp)
        ph = _softmax_lanes(prop)
        small_ref[:, off:off + D, :] = ph
        if bg_conf != 0.0:
            small_ref[:, 0:D, :] = dimp + gate * ph
    else:
        # Small state depth (typical D == 1): per-row VPU multiply-add over the
        # K sublane groups + one intra-vreg XLU reduce.
        state_t = state_ref[...]                                 # (Bn, Kp, D)
        for d in range(D):
            w = state_t[:, :, d:d + 1]                           # (Bn, Kp, 1)
            prop_d = jnp.sum(p2 * w, axis=1, keepdims=True)      # (Bn, 1, Sp)
            ph_d = _softmax_lanes(prop_d)
            small_ref[:, off + d:off + d + 1, :] = ph_d
            if bg_conf != 0.0:
                small_ref[:, d:d + 1, :] = dimp + gate * ph_d


def _tpu_generation():
    try:
        kind = jax.devices()[0].device_kind.lower()
    except Exception:
        return None
    for gen, tags in (("v7", ("v7", "tpu7")),
                      ("v6", ("v6", "tpu6")),
                      ("v5", ("v5", "tpu5"))):
        if any(t in kind for t in tags):
            return gen
    return None


def _pick_bn(n, per_seq_bytes, gen):
    """Sequences per grid step (amortize ~0.35us/step overhead).
    v5e/v6e (128 MiB VMEM, 1 TC): large resident target, no step-count
    constraint.  v7x (64 MiB VMEM, 2 TCs): smaller target and prefer an EVEN
    step count so megacore sharding of the single parallel axis is balanced."""
    if gen == "v7":
        resident_target, prefer_even_steps = 24 << 20, True
    elif gen in ("v5", "v6"):
        resident_target, prefer_even_steps = 48 << 20, False
    else:
        resident_target, prefer_even_steps = 24 << 20, False
    cap = int(max(1, min(resident_target // max(per_seq_bytes, 1), n)))
    divisors = [d for d in range(1, cap + 1) if n % d == 0]
    if prefer_even_steps:
        even = [d for d in divisors if (n // d) % 2 == 0]
        if even:
            return even[-1]
    return divisors[-1]


def _vmem_limit_bytes(gen, resident_bytes):
    if gen in ("v5", "v6"):
        base, hard = 96 << 20, 112 << 20
    else:                       # v7x / unknown: stay inside 64 MiB physical
        base, hard = 32 << 20, 48 << 20
    return int(min(hard, max(base, 2 * resident_bytes)))


def response_predictor(cost_volume, state_prev, dimp_score_cur, init_label=None,
                       prev_scores_dimp=None, dimp_thresh=None,
                       output_window=None, bg_conf=BG_CONF,
                       cvp2_dtype=jnp.float32):
    """JAX/Pallas equivalent of ResponsePredictor.forward."""
    if dimp_thresh is None:
        dimp_thresh = DIMP_THRESH

    N, K, H, W = cost_volume.shape
    S = H * W
    assert K == S, "cost volume channel dim must equal H*W"

    # --- state_new branch logic (mirrors the module's python-level /
    # --- data-dependent branching, folded into jnp.where) --------------------
    if state_prev is None:
        state_new = init_label
    else:
        prev_max = jnp.max(prev_scores_dimp)     # global max, as in the module
        bg_thr = prev_max * BG_CENTI
        cand = jnp.where(init_label > 0.1, init_label,
                         -(prev_scores_dimp > bg_thr).astype(jnp.float32))
        state_new = jnp.where(prev_max < 0.2,
                              jnp.zeros(state_prev.shape, state_prev.dtype),
                              cand)

    state_flat = state_new.reshape(N, -1, S).astype(jnp.float32)   # (N, D, K)
    D = state_flat.shape[1]
    use_mxu = D >= _MXU_MIN_STATE

    # --- pad to TPU-friendly extents: lanes (S) -> x128, sublanes (K) -> x8 --
    Kp = _round_up(K, 8)
    Sp = _round_up(S, 128)

    cv_flat = cost_volume.reshape(N, K, S).astype(jnp.float32)
    if (Kp, Sp) != (K, S):
        cv_flat = jnp.pad(cv_flat, ((0, 0), (0, Kp - K), (0, Sp - S)))

    if use_mxu:
        state_in = state_flat                                      # (N, D, K)
        if Kp != K:
            state_in = jnp.pad(state_in, ((0, 0), (0, 0), (0, Kp - K)))
    else:
        state_in = jnp.swapaxes(state_flat, 1, 2)                  # (N, K, D)
        if Kp != K:
            state_in = jnp.pad(state_in, ((0, 0), (0, Kp - K), (0, 0)))

    # --- generation-aware grid / VMEM budgeting ------------------------------
    gen = _tpu_generation()
    per_seq_bytes = Kp * Sp * 4 * 8   # cv + cvp2 (double-buffered) + temporaries
    Bn = _pick_bn(N, per_seq_bytes, gen)
    grid = (N // Bn,)

    n_small = (2 * D + 1) if bg_conf != 0.0 else (D + 1)
    state_block = (Bn, D, Kp) if use_mxu else (Bn, Kp, D)

    inputs = [cv_flat, state_in]
    in_specs = [
        pl.BlockSpec((Bn, Kp, Sp), lambda n: (n, 0, 0)),
        pl.BlockSpec(state_block, lambda n: (n, 0, 0)),
    ]
    if bg_conf != 0.0:
        dimp_flat = dimp_score_cur.reshape(N, 1, S).astype(jnp.float32)
        if Sp != S:
            dimp_flat = jnp.pad(dimp_flat, ((0, 0), (0, 0), (0, Sp - S)))
        inputs.append(dimp_flat)
        in_specs.append(pl.BlockSpec((Bn, 1, Sp), lambda n: (n, 0, 0)))

    kernel = functools.partial(_response_predictor_kernel,
                               dimp_thresh=float(dimp_thresh),
                               bg_conf=float(bg_conf),
                               d_state=D, k_valid=K, s_valid=S,
                               use_mxu=use_mxu)

    cvp2_p, small = pl.pallas_call(
        kernel,
        out_shape=(
            jax.ShapeDtypeStruct((N, Kp, Sp), cvp2_dtype),        # cost_volume_processed
            jax.ShapeDtypeStruct((N, n_small, Sp), jnp.float32),  # [fused;] ph ; conf
        ),
        grid_spec=pltpu.PrefetchScalarGridSpec(
            num_scalar_prefetch=0,
            grid=grid,
            in_specs=in_specs,
            out_specs=[
                pl.BlockSpec((Bn, Kp, Sp), lambda n: (n, 0, 0)),
                pl.BlockSpec((Bn, n_small, Sp), lambda n: (n, 0, 0)),
            ]),
        compiler_params=pltpu.CompilerParams(
            dimension_semantics=("parallel",),
            vmem_limit_bytes=_vmem_limit_bytes(gen, per_seq_bytes * Bn)),
    )(*inputs)

    # --- crop pad, unpack slab, reshape back to NCHW -------------------------
    cvp2 = cvp2_p[:, :K, :S]
    if bg_conf != 0.0:
        fused = small[:, 0:D, :S]
        ph = small[:, D:2 * D, :S]
        conf = small[:, 2 * D:2 * D + 1, :S]
    else:
        ph = small[:, 0:D, :S]
        conf = small[:, D:D + 1, :S]
        # fused = dimp + 0 * (...)  ==  pure broadcast of dimp_score_cur; no
        # kernel compute or output DMA needed.
        fused = jnp.broadcast_to(
            dimp_score_cur.reshape(N, 1, S).astype(ph.dtype), (N, D, S))

    cvp2_4d = cvp2.reshape(N, K, H, W)
    ph_4d = ph.reshape(N, D, H, W)
    conf_4d = conf.reshape(N, 1, H, W)
    fused_4d = fused.reshape(N, D, H, W)

    auxiliary_outputs = {
        'cost_volume_processed': cvp2_4d,
        'propagation_weights': cvp2_4d.reshape(N, K, 1, H, W),
        'propagated_h': ph_4d,
        'propagation_conf': conf_4d,
        # In the module fused_score_orig is captured BEFORE the dimp-thresh
        # masking and before the dimp add, i.e. it equals propagated_h.
        'fused_score_orig': ph_4d,
    }
    return fused_4d, state_new, auxiliary_outputs


# ------------------------- pure-JAX reference (for verification) -------------
def _reference(cost_volume, state_prev, dimp_score_cur, init_label,
               prev_scores_dimp, dimp_thresh=DIMP_THRESH, bg_conf=BG_CONF):
    N, K, H, W = cost_volume.shape
    S = H * W
    p1 = jax.nn.softmax(cost_volume.reshape(-1, S), axis=1).reshape(N, K, H, W)
    p2 = jax.nn.softmax(p1, axis=1)
    prev_max = jnp.max(prev_scores_dimp)
    bg_thr = prev_max * BG_CENTI
    cand = jnp.where(init_label > 0.1, init_label,
                     -(prev_scores_dimp > bg_thr).astype(jnp.float32))
    state_new = jnp.where(prev_max < 0.2, jnp.zeros_like(state_prev), cand)
    state_flat = state_new.reshape(N, -1, S)
    conf = -jnp.sum(p2 * jnp.log(p2 + 1e-4), axis=1, keepdims=True)
    prop = jnp.einsum('ndk,nks->nds', state_flat, p2.reshape(N, K, S))
    ph = jax.nn.softmax(prop, axis=-1).reshape(N, -1, H, W)
    fused = ph * (dimp_score_cur > dimp_thresh).astype(jnp.float32)
    fused = dimp_score_cur + bg_conf * fused
    return fused, state_new, p2, ph, conf


if __name__ == "__main__":
    import numpy as np

    def _run_case(N, H, W):
        K = H * W
        key = jax.random.PRNGKey(0)
        k1, k2, k3, k4, k5 = jax.random.split(key, 5)
        cost_volume = jax.random.normal(k1, (N, K, H, W), dtype=jnp.float32)
        state_prev = jax.random.normal(k2, (N, 1, H, W), dtype=jnp.float32)
        dimp_score_cur = jax.random.uniform(k3, (N, 1, H, W), dtype=jnp.float32)
        init_label = jax.random.uniform(k4, (N, 1, H, W), dtype=jnp.float32)
        prev_scores_dimp = jax.random.uniform(k5, (N, 1, H, W), dtype=jnp.float32)

        fused, state_new, aux = response_predictor(
            cost_volume, state_prev, dimp_score_cur,
            init_label=init_label, prev_scores_dimp=prev_scores_dimp)
        jax.block_until_ready((fused, state_new, aux))

        r_fused, r_state, r_p2, r_ph, r_conf = _reference(
            cost_volume, state_prev, dimp_score_cur, init_label, prev_scores_dimp)
        np.testing.assert_allclose(np.asarray(fused), np.asarray(r_fused),
                                   rtol=1e-3, atol=1e-5)
        np.testing.assert_allclose(np.asarray(state_new), np.asarray(r_state),
                                   rtol=1e-3, atol=1e-5)
        np.testing.assert_allclose(np.asarray(aux['cost_volume_processed']),
                                   np.asarray(r_p2), rtol=1e-3, atol=1e-5)
        np.testing.assert_allclose(np.asarray(aux['propagated_h']),
                                   np.asarray(r_ph), rtol=1e-3, atol=1e-5)
        np.testing.assert_allclose(np.asarray(aux['propagation_conf']),
                                   np.asarray(r_conf), rtol=1e-3, atol=1e-5)

    # aligned shape (H*W multiple of 128): lane-dense fast path, no masking
    _run_case(N=2, H=16, W=16)
    # non-aligned production-like shape: exercises pad + in-kernel tail masking
    _run_case(N=2, H=10, W=10)

    print("KERNEL_OK")
</pallas_src>

<mosaic_0001>
module attributes {stable_mosaic.version = 11 : i64} {
  func.func @_response_predictor_kernel(%arg0: i32, %arg1: memref<2x256x256xf32, #tpu.memory_space<vmem>>, %arg2: memref<2x256x1xf32, #tpu.memory_space<vmem>>, %arg3: memref<2x256x256xf32, #tpu.memory_space<vmem>>, %arg4: memref<2x2x256xf32, #tpu.memory_space<vmem>>) attributes {dimension_semantics = [#tpu.dimension_semantics<parallel>], iteration_bounds = array<i64: 1>, scalar_prefetch = 0 : i64, scratch_operands = 0 : i64, tpu.core_type = #tpu.core_type<tc>, window_params = [{transform_indices = @transform_0, window_bounds = array<i64: 2, 256, 256>}, {transform_indices = @transform_1, window_bounds = array<i64: 2, 256, 1>}, {transform_indices = @transform_2, window_bounds = array<i64: 2, 256, 256>}, {transform_indices = @transform_3, window_bounds = array<i64: 2, 2, 256>}]} {
    %c0 = arith.constant 0 : index
    %c0_0 = arith.constant 0 : index
    %c0_1 = arith.constant 0 : index
    %0 = vector.load %arg1[%c0, %c0_0, %c0_1] : memref<2x256x256xf32, #tpu.memory_space<vmem>>, vector<2x256x256xf32>
    %cst = arith.constant dense<0xFF800000> : vector<2x256xf32>
    %1 = vector.multi_reduction <maximumf>, %0, %cst [2] : vector<2x256x256xf32> to vector<2x256xf32>
    %2 = vector.shape_cast %1 : vector<2x256xf32> to vector<2x256x1xf32>
    %3 = vector.broadcast %2 : vector<2x256x1xf32> to vector<2x256x256xf32>
    %4 = arith.subf %0, %3 : vector<2x256x256xf32>
    %5 = math.exp %4 : vector<2x256x256xf32>
    %cst_2 = arith.constant dense<0.000000e+00> : vector<2x256xf32>
    %6 = vector.multi_reduction <add>, %5, %cst_2 [2] : vector<2x256x256xf32> to vector<2x256xf32>
    %7 = vector.shape_cast %6 : vector<2x256xf32> to vector<2x256x1xf32>
    %8 = tpu.reciprocal %7 : vector<2x256x1xf32> -> vector<2x256x1xf32>
    %9 = vector.broadcast %8 : vector<2x256x1xf32> to vector<2x256x256xf32>
    %10 = arith.mulf %5, %9 : vector<2x256x256xf32>
    %11 = math.exp %10 : vector<2x256x256xf32>
    %cst_3 = arith.constant dense<0.000000e+00> : vector<2x256xf32>
    %12 = vector.multi_reduction <add>, %11, %cst_3 [1] : vector<2x256x256xf32> to vector<2x256xf32>
    %13 = vector.shape_cast %12 : vector<2x256xf32> to vector<2x1x256xf32>
    %14 = tpu.reciprocal %13 : vector<2x1x256xf32> -> vector<2x1x256xf32>
    %15 = vector.broadcast %14 : vector<2x1x256xf32> to vector<2x256x256xf32>
    %16 = arith.mulf %11, %15 : vector<2x256x256xf32>
    %c0_4 = arith.constant 0 : index
    %c0_5 = arith.constant 0 : index
    %c0_6 = arith.constant 0 : index
    %17 = vector.load %arg3[%c0_4, %c0_5, %c0_6] : memref<2x256x256xf32, #tpu.memory_space<vmem>>, vector<2x256x256xf32>
    tpu.vector_store %arg3[%c0_4, %c0_5, %c0_6], %16 {strides = array<i32>} : memref<2x256x256xf32, #tpu.memory_space<vmem>>, vector<2x256x256xf32>,
    %cst_7 = arith.constant 9.99999974E-5 : f32
    %18 = vector.broadcast %cst_7 : f32 to vector<2x256x256xf32>
    %19 = arith.addf %16, %18 : vector<2x256x256xf32>
    %20 = math.log %19 : vector<2x256x256xf32>
    %21 = arith.mulf %16, %20 : vector<2x256x256xf32>
    %cst_8 = arith.constant dense<0.000000e+00> : vector<2x256xf32>
    %22 = vector.multi_reduction <add>, %21, %cst_8 [1] : vector<2x256x256xf32> to vector<2x256xf32>
    %23 = vector.shape_cast %22 : vector<2x256xf32> to vector<2x1x256xf32>
    %cst_9 = arith.constant 0.000000e+00 : f32
    %24 = vector.broadcast %cst_9 : f32 to vector<2x1x256xf32>
    %25 = arith.subf %24, %23 : vector<2x1x256xf32>
    %c0_10 = arith.constant 0 : index
    %c1 = arith.constant 1 : index
    %c0_11 = arith.constant 0 : index
    %26 = vector.load %arg4[%c0_10, %c1, %c0_11] : memref<2x2x256xf32, #tpu.memory_space<vmem>>, vector<2x1x256xf32>
    tpu.vector_store %arg4[%c0_10, %c1, %c0_11], %25 {strides = array<i32>} : memref<2x2x256xf32, #tpu.memory_space<vmem>>, vector<2x1x256xf32>,
    %c0_12 = arith.constant 0 : index
    %c0_13 = arith.constant 0 : index
    %c0_14 = arith.constant 0 : index
    %27 = vector.load %arg2[%c0_12, %c0_13, %c0_14] : memref<2x256x1xf32, #tpu.memory_space<vmem>>, vector<2x256x1xf32>
    %28 = vector.broadcast %27 : vector<2x256x1xf32> to vector<2x256x256xf32>
    %29 = arith.mulf %16, %28 : vector<2x256x256xf32>
    %cst_15 = arith.constant dense<0.000000e+00> : vector<2x256xf32>
    %30 = vector.multi_reduction <add>, %29, %cst_15 [1] : vector<2x256x256xf32> to vector<2x256xf32>
    %31 = vector.shape_cast %30 : vector<2x256xf32> to vector<2x1x256xf32>
    %cst_16 = arith.constant dense<0xFF800000> : vector<2x1xf32>
    %32 = vector.multi_reduction <maximumf>, %31, %cst_16 [2] : vector<2x1x256xf32> to vector<2x1xf32>
    %33 = vector.shape_cast %32 : vector<2x1xf32> to vector<2x1x1xf32>
    %34 = vector.broadcast %33 : vector<2x1x1xf32> to vector<2x1x256xf32>
    %35 = arith.subf %31, %34 : vector<2x1x256xf32>
    %36 = math.exp %35 : vector<2x1x256xf32>
    %cst_17 = arith.constant dense<0.000000e+00> : vector<2x1xf32>
    %37 = vector.multi_reduction <add>, %36, %cst_17 [2] : vector<2x1x256xf32> to vector<2x1xf32>
    %38 = vector.shape_cast %37 : vector<2x1xf32> to vector<2x1x1xf32>
    %39 = tpu.reciprocal %38 : vector<2x1x1xf32> -> vector<2x1x1xf32>
    %40 = vector.broadcast %39 : vector<2x1x1xf32> to vector<2x1x256xf32>
    %41 = arith.mulf %36, %40 : vector<2x1x256xf32>
    %c0_18 = arith.constant 0 : index
    %c0_19 = arith.constant 0 : index
    %c0_20 = arith.constant 0 : index
    %42 = vector.load %arg4[%c0_18, %c0_19, %c0_20] : memref<2x2x256xf32, #tpu.memory_space<vmem>>, vector<2x1x256xf32>
    tpu.vector_store %arg4[%c0_18, %c0_19, %c0_20], %41 {strides = array<i32>} : memref<2x2x256xf32, #tpu.memory_space<vmem>>, vector<2x1x256xf32>,
    return
  }
  func.func @transform_0(%arg0: i32) -> (i32, i32, i32) {
    %c0_i32 = arith.constant 0 : i32
    %c0_i32_0 = arith.constant 0 : i32
    %c0_i32_1 = arith.constant 0 : i32
    return %arg0, %c0_i32, %c0_i32_0 : i32, i32, i32
  }
  func.func @transform_1(%arg0: i32) -> (i32, i32, i32) {
    %c0_i32 = arith.constant 0 : i32
    %c0_i32_0 = arith.constant 0 : i32
    %c0_i32_1 = arith.constant 0 : i32
    return %arg0, %c0_i32, %c0_i32_0 : i32, i32, i32
  }
  func.func @transform_2(%arg0: i32) -> (i32, i32, i32) {
    %c0_i32 = arith.constant 0 : i32
    %c0_i32_0 = arith.constant 0 : i32
    %c0_i32_1 = arith.constant 0 : i32
    return %arg0, %c0_i32, %c0_i32_0 : i32, i32, i32
  }
  func.func @transform_3(%arg0: i32) -> (i32, i32, i32) {
    %c0_i32 = arith.constant 0 : i32
    %c0_i32_0 = arith.constant 0 : i32
    %c0_i32_1 = arith.constant 0 : i32
    return %arg0, %c0_i32, %c0_i32_0 : i32, i32, i32
  }
}

</mosaic_0001>

<llo_original>
// kernel: tpu_custom_call.1
$region0: #{tpu_custom_call.1}
  #allocation0 [shape = 'u32[]', space=smem, size = 0x4, offset = 0x4, fixed_abs, tag = 'smem constant byte address 0x4 - core index']
  #allocation1 [shape = 'u32[144,128]{1,0:T(1,128)}', space=vmem, size = 0x12000, scoped, tag = 'internal scratch']
  %s0 = inlined_call_operand.hbm [shape: f32[2,256,256], index: 0, kind: input, shape index: {}]
  %s1 = inlined_call_operand.vmem [shape: f32[2,256,1], index: 1, kind: input, shape index: {}]
  %s2 = inlined_call_operand.hbm [shape: f32[2,256,256], index: 2, kind: output, shape index: {0}]
  %s3 = inlined_call_operand.hbm [shape: f32[2,2,256], index: 3, kind: output, shape index: {1}]
  %4 = xla_tuple %s2, %s3
  %s5 = sld [smem:[#allocation0]]
  $region30: #{tpu_custom_call.1} parent=0
    _
  %s7 = ssub.s32 1, %s5
  %s8 = scalar_select 0, %s7, %s5
  $region1: #{tpu_custom_call.1} parent=0
    #allocation2 [shape = 'u8[524288]{0}', space=vmem, size = 0x80000, scoped, tag = 'input window, operand 0, single buffered']
    #allocation3 [shape = 's32[1]{0}', space=sflag, size = 0x4, scoped, tag = 'scoped memory for tpu_custom_call.1']
    #allocation4 [shape = 's32[1]{0}', space=sflag, size = 0x4, scoped, tag = 'scoped memory for tpu_custom_call.1']
    #allocation5 [shape = 'u8[524288]{0}', space=vmem, size = 0x80000, scoped, tag = 'output window, operand 0, single buffered']
    #allocation6 [shape = 'u8[4096]{0}', space=vmem, size = 0x1000, scoped, tag = 'output window, operand 1, single buffered']
    #allocation7 [shape = 's32[1]{0}', space=sflag, size = 0x4, scoped, tag = 'scoped memory for tpu_custom_call.1']
    %9 = vsyncpa [#allocation3], 0
    %10 = vsyncpa [#allocation4], 0
    %11 = vsyncpa [#allocation7], 0
    // Predicated region
    $region2: #{tpu_custom_call.1} parent=1 // pred_check
      _
    $region3: #{tpu_custom_call.1} parent=1 // pred_check_branch
      %13 = sbr.rel (0) target = $region5
    $region4: #{tpu_custom_call.1} parent=1 // pred_region
      %s15 = ssub.s32 16384, 16384
      %16 = vsyncadd [#allocation3], %s15
      %s17 = sshll.u32 [#allocation2], 4
      %s18 = int_to_ptr.vmem [resolvable:$true] %s17
      %23 = dma.hbm_to_vmem [thread:$0]  %s0, 16384, %s18, [#allocation3], 256, 256, 16
    $region5: #{tpu_custom_call.1} parent=1 // pred_fallthru
      _
    // Predicated region
    $region6: #{tpu_custom_call.1} parent=1 // pred_check
      _
    $region7: #{tpu_custom_call.1} parent=1 // pred_check_branch
      %25 = sbr.rel (0) target = $region9
    $region8: #{tpu_custom_call.1} parent=1 // pred_region
      _
    $region9: #{tpu_custom_call.1} parent=1 // pred_fallthru
      _
    // Predicated region
    $region10: #{tpu_custom_call.1} parent=1 // pred_check
      _
    $region11: #{tpu_custom_call.1} parent=1 // pred_check_branch
      %27 = sbr.rel (0) target = $region13
    $region12: #{tpu_custom_call.1} parent=1 // pred_region
      %28 = dma.done [#allocation3], 16384
    $region13: #{tpu_custom_call.1} parent=1 // pred_fallthru
      _
    %v29 = vld [vmem:[#allocation2] sm:$0xff]
    %v30 = vld [vmem:[#allocation2 + $0x8] sm:$0xff]
    %v31 = vld [vmem:[#allocation2 + $0x10] sm:$0xff]
    %v32 = vld [vmem:[#allocation2 + $0x18] sm:$0xff]
    %v33 = vld [vmem:[#allocation2 + $0x20] sm:$0xff]
    %v34 = vld [vmem:[#allocation2 + $0x28] sm:$0xff]
    %v35 = vld [vmem:[#allocation2 + $0x30] sm:$0xff]
    %v36 = vld [vmem:[#allocation2 + $0x38] sm:$0xff]
    %v37 = vld [vmem:[#allocation2 + $0x40] sm:$0xff]
    %v38 = vld [vmem:[#allocation2 + $0x48] sm:$0xff]
    %v39 = vld [vmem:[#allocation2 + $0x50] sm:$0xff]
    %v40 = vld [vmem:[#allocation2 + $0x58] sm:$0xff]
    %v41 = vld [vmem:[#allocation2 + $0x60] sm:$0xff]
    %v42 = vld [vmem:[#allocation2 + $0x68] sm:$0xff]
    %v43 = vld [vmem:[#allocation2 + $0x70] sm:$0xff]
    %v44 = vld [vmem:[#allocation2 + $0x78] sm:$0xff]
    %v45 = vld [vmem:[#allocation2 + $0x80] sm:$0xff]
    %v46 = vld [vmem:[#allocation2 + $0x88] sm:$0xff]
    %v47 = vld [vmem:[#allocation2 + $0x90] sm:$0xff]
    %v48 = vld [vmem:[#allocation2 + $0x98] sm:$0xff]
    %v49 = vld [vmem:[#allocation2 + $0xa0] sm:$0xff]
    %v50 = vld [vmem:[#allocation2 + $0xa8] sm:$0xff]
    %v51 = vld [vmem:[#allocation2 + $0xb0] sm:$0xff]
    %v52 = vld [vmem:[#allocation2 + $0xb8] sm:$0xff]
    %v53 = vld [vmem:[#allocation2 + $0xc0] sm:$0xff]
    %v54 = vld [vmem:[#allocation2 + $0xc8] sm:$0xff]
    %v55 = vld [vmem:[#allocation2 + $0xd0] sm:$0xff]
    %v56 = vld [vmem:[#allocation2 + $0xd8] sm:$0xff]
    %v57 = vld [vmem:[#allocation2 + $0xe0] sm:$0xff]
    %v58 = vld [vmem:[#allocation2 + $0xe8] sm:$0xff]
    %v59 = vld [vmem:[#allocation2 + $0xf0] sm:$0xff]
    %v60 = vld [vmem:[#allocation2 + $0xf8] sm:$0xff]
    %v61 = vld [vmem:[#allocation2 + $0x100] sm:$0xff]
    %v62 = vld [vmem:[#allocation2 + $0x108] sm:$0xff]
    %v63 = vld [vmem:[#allocation2 + $0x110] sm:$0xff]
    %v64 = vld [vmem:[#allocation2 + $0x118] sm:$0xff]
    %v65 = vld [vmem:[#allocation2 + $0x120] sm:$0xff]
    %v66 = vld [vmem:[#allocation2 + $0x128] sm:$0xff]
    %v67 = vld [vmem:[#allocation2 + $0x130] sm:$0xff]
    %v68 = vld [vmem:[#allocation2 + $0x138] sm:$0xff]
    %v69 = vld [vmem:[#allocation2 + $0x140] sm:$0xff]
    %v70 = vld [vmem:[#allocation2 + $0x148] sm:$0xff]
    %v71 = vld [vmem:[#allocation2 + $0x150] sm:$0xff]
    %v72 = vld [vmem:[#allocation2 + $0x158] sm:$0xff]
    %v73 = vld [vmem:[#allocation2 + $0x160] sm:$0xff]
    %v74 = vld [vmem:[#allocation2 + $0x168] sm:$0xff]
    %v75 = vld [vmem:[#allocation2 + $0x170] sm:$0xff]
    %v76 = vld [vmem:[#allocation2 + $0x178] sm:$0xff]
    %v77 = vld [vmem:[#allocation2 + $0x180] sm:$0xff]
    %v78 = vld [vmem:[#allocation2 + $0x188] sm:$0xff]
    %v79 = vld [vmem:[#allocation2 + $0x190] sm:$0xff]
    %v80 = vld [vmem:[#allocation2 + $0x198] sm:$0xff]
    %v81 = vld [vmem:[#allocation2 + $0x1a0] sm:$0xff]
    %v82 = vld [vmem:[#allocation2 + $0x1a8] sm:$0xff]
    %v83 = vld [vmem:[#allocation2 + $0x1b0] sm:$0xff]
    %v84 = vld [vmem:[#allocation2 + $0x1b8] sm:$0xff]
    %v85 = vld [vmem:[#allocation2 + $0x1c0] sm:$0xff]
    %v86 = vld [vmem:[#allocation2 + $0x1c8] sm:$0xff]
    %v87 = vld [vmem:[#allocation2 + $0x1d0] sm:$0xff]
    %v88 = vld [vmem:[#allocation2 + $0x1d8] sm:$0xff]
    %v89 = vld [vmem:[#allocation2 + $0x1e0] sm:$0xff]
    %v90 = vld [vmem:[#allocation2 + $0x1e8] sm:$0xff]
    %v91 = vld [vmem:[#allocation2 + $0x1f0] sm:$0xff]
    %v92 = vld [vmem:[#allocation2 + $0x1f8] sm:$0xff]
    %v93 = vld [vmem:[#allocation2 + $0x200] sm:$0xff]
    %v94 = vld [vmem:[#allocation2 + $0x208] sm:$0xff]
    %v95 = vld [vmem:[#allocation2 + $0x210] sm:$0xff]
    %v96 = vld [vmem:[#allocation2 + $0x218] sm:$0xff]
    %v97 = vld [vmem:[#allocation2 + $0x220] sm:$0xff]
    %v98 = vld [vmem:[#allocation2 + $0x228] sm:$0xff]
    %v99 = vld [vmem:[#allocation2 + $0x230] sm:$0xff]
    %v100 = vld [vmem:[#allocation2 + $0x238] sm:$0xff]
    %v101 = vld [vmem:[#allocation2 + $0x240] sm:$0xff]
    %v102 = vld [vmem:[#allocation2 + $0x248] sm:$0xff]
    %v103 = vld [vmem:[#allocation2 + $0x250] sm:$0xff]
    %v104 = vld [vmem:[#allocation2 + $0x258] sm:$0xff]
    %v105 = vld [vmem:[#allocation2 + $0x260] sm:$0xff]
    %v106 = vld [vmem:[#allocation2 + $0x268] sm:$0xff]
    %v107 = vld [vmem:[#allocation2 + $0x270] sm:$0xff]
    %v108 = vld [vmem:[#allocation2 + $0x278] sm:$0xff]
    %v109 = vld [vmem:[#allocation2 + $0x280] sm:$0xff]
    %v110 = vld [vmem:[#allocation2 + $0x288] sm:$0xff]
    %v111 = vld [vmem:[#allocation2 + $0x290] sm:$0xff]
    %v112 = vld [vmem:[#allocation2 + $0x298] sm:$0xff]
    %v113 = vld [vmem:[#allocation2 + $0x2a0] sm:$0xff]
    %v114 = vld [vmem:[#allocation2 + $0x2a8] sm:$0xff]
    %v115 = vld [vmem:[#allocation2 + $0x2b0] sm:$0xff]
    %v116 = vld [vmem:[#allocation2 + $0x2b8] sm:$0xff]
    %v117 = vld [vmem:[#allocation2 + $0x2c0] sm:$0xff]
    %v118 = vld [vmem:[#allocation2 + $0x2c8] sm:$0xff]
    %v119 = vld [vmem:[#allocation2 + $0x2d0] sm:$0xff]
    %v120 = vld [vmem:[#allocation2 + $0x2d8] sm:$0xff]
    %v121 = vld [vmem:[#allocation2 + $0x2e0] sm:$0xff]
    %v122 = vld [vmem:[#allocation2 + $0x2e8] sm:$0xff]
    %v123 = vld [vmem:[#allocation2 + $0x2f0] sm:$0xff]
    %v124 = vld [vmem:[#allocation2 + $0x2f8] sm:$0xff]
    %v125 = vld [vmem:[#allocation2 + $0x300] sm:$0xff]
    %v126 = vld [vmem:[#allocation2 + $0x308] sm:$0xff]
    %v127 = vld [vmem:[#allocation2 + $0x310] sm:$0xff]
    %v128 = vld [vmem:[#allocation2 + $0x318] sm:$0xff]
    %v129 = vld [vmem:[#allocation2 + $0x320] sm:$0xff]
    %v130 = vld [vmem:[#allocation2 + $0x328] sm:$0xff]
    %v131 = vld [vmem:[#allocation2 + $0x330] sm:$0xff]
    %v132 = vld [vmem:[#allocation2 + $0x338] sm:$0xff]
    %v133 = vld [vmem:[#allocation2 + $0x340] sm:$0xff]
    %v134 = vld [vmem:[#allocation2 + $0x348] sm:$0xff]
    %v135 = vld [vmem:[#allocation2 + $0x350] sm:$0xff]
    %v136 = vld [vmem:[#allocation2 + $0x358] sm:$0xff]
    %v137 = vld [vmem:[#allocation2 + $0x360] sm:$0xff]
    %v138 = vld [vmem:[#allocation2 + $0x368] sm:$0xff]
    %v139 = vld [vmem:[#allocation2 + $0x370] sm:$0xff]
    %v140 = vld [vmem:[#allocation2 + $0x378] sm:$0xff]
    %v141 = vld [vmem:[#allocation2 + $0x380] sm:$0xff]
    %v142 = vld [vmem:[#allocation2 + $0x388] sm:$0xff]
    %v143 = vld [vmem:[#allocation2 + $0x390] sm:$0xff]
    %v144 = vld [vmem:[#allocation2 + $0x398] sm:$0xff]
    %v145 = vld [vmem:[#allocation2 + $0x3a0] sm:$0xff]
    %v146 = vld [vmem:[#allocation2 + $0x3a8] sm:$0xff]
    %v147 = vld [vmem:[#allocation2 + $0x3b0] sm:$0xff]
    %v148 = vld [vmem:[#allocation2 + $0x3b8] sm:$0xff]
    %v149 = vld [vmem:[#allocation2 + $0x3c0] sm:$0xff]
    %v150 = vld [vmem:[#allocation2 + $0x3c8] sm:$0xff]
    %v151 = vld [vmem:[#allocation2 + $0x3d0] sm:$0xff]
    %v152 = vld [vmem:[#allocation2 + $0x3d8] sm:$0xff]
    %v153 = vld [vmem:[#allocation2 + $0x3e0] sm:$0xff]
    %v154 = vld [vmem:[#allocation2 + $0x3e8] sm:$0xff]
    %v155 = vld [vmem:[#allocation2 + $0x3f0] sm:$0xff]
    %v156 = vld [vmem:[#allocation2 + $0x3f8] sm:$0xff]
    %v157 = vmax.f32 %v29, %v30
    %158 = vmax.xlane.f32.xlu0 %v157
    %v159 = vpop.xlane.xlu0 %158
    %v160 = vmax.f32 %v31, %v32
    %161 = vmax.xlane.f32.xlu0 %v160
    %v162 = vpop.xlane.xlu0 %161
    %v163 = vmax.f32 %v33, %v34
    %164 = vmax.xlane.f32.xlu0 %v163
    %v165 = vpop.xlane.xlu0 %164
    %v166 = vmax.f32 %v35, %v36
    %167 = vmax.xlane.f32.xlu0 %v166
    %v168 = vpop.xlane.xlu0 %167
    %v169 = vmax.f32 %v37, %v38
    %170 = vmax.xlane.f32.xlu0 %v169
    %v171 = vpop.xlane.xlu0 %170
    %v172 = vmax.f32 %v39, %v40
    %173 = vmax.xlane.f32.xlu0 %v172
    %v174 = vpop.xlane.xlu0 %173
    %v175 = vmax.f32 %v41, %v42
    %176 = vmax.xlane.f32.xlu0 %v175
    %v177 = vpop.xlane.xlu0 %176
    %v178 = vmax.f32 %v43, %v44
    %179 = vmax.xlane.f32.xlu0 %v178
    %v180 = vpop.xlane.xlu0 %179
    %v181 = vmax.f32 %v45, %v46
    %182 = vmax.xlane.f32.xlu0 %v181
    %v183 = vpop.xlane.xlu0 %182
    %v184 = vmax.f32 %v47, %v48
    %185 = vmax.xlane.f32.xlu0 %v184
    %v186 = vpop.xlane.xlu0 %185
    %v187 = vmax.f32 %v49, %v50
    %188 = vmax.xlane.f32.xlu0 %v187
    %v189 = vpop.xlane.xlu0 %188
    %v190 = vmax.f32 %v51, %v52
    %191 = vmax.xlane.f32.xlu0 %v190
    %v192 = vpop.xlane.xlu0 %191
    %v193 = vmax.f32 %v53, %v54
    %194 = vmax.xlane.f32.xlu0 %v193
    %v195 = vpop.xlane.xlu0 %194
    %v196 = vmax.f32 %v55, %v56
    %197 = vmax.xlane.f32.xlu0 %v196
    %v198 = vpop.xlane.xlu0 %197
    %v199 = vmax.f32 %v57, %v58
    %200 = vmax.xlane.f32.xlu0 %v199
    %v201 = vpop.xlane.xlu0 %200
    %v202 = vmax.f32 %v59, %v60
    %203 = vmax.xlane.f32.xlu0 %v202
    %v204 = vpop.xlane.xlu0 %203
    %v205 = vmax.f32 %v61, %v62
    %206 = vmax.xlane.f32.xlu0 %v205
    %v207 = vpop.xlane.xlu0 %206
    %v208 = vmax.f32 %v63, %v64
    %209 = vmax.xlane.f32.xlu0 %v208
    %v210 = vpop.xlane.xlu0 %209
    %v211 = vmax.f32 %v65, %v66
    %212 = vmax.xlane.f32.xlu0 %v211
    %v213 = vpop.xlane.xlu0 %212
    %v214 = vmax.f32 %v67, %v68
    %215 = vmax.xlane.f32.xlu0 %v214
    %v216 = vpop.xlane.xlu0 %215
    %v217 = vmax.f32 %v69, %v70
    %218 = vmax.xlane.f32.xlu0 %v217
    %v219 = vpop.xlane.xlu0 %218
    %v220 = vmax.f32 %v71, %v72
    %221 = vmax.xlane.f32.xlu0 %v220
    %v222 = vpop.xlane.xlu0 %221
    %v223 = vmax.f32 %v73, %v74
    %224 = vmax.xlane.f32.xlu0 %v223
    %v225 = vpop.xlane.xlu0 %224
    %v226 = vmax.f32 %v75, %v76
    %227 = vmax.xlane.f32.xlu0 %v226
    %v228 = vpop.xlane.xlu0 %227
    %v229 = vmax.f32 %v77, %v78
    %230 = vmax.xlane.f32.xlu0 %v229
    %v231 = vpop.xlane.xlu0 %230
    %v232 = vmax.f32 %v79, %v80
    %233 = vmax.xlane.f32.xlu0 %v232
    %v234 = vpop.xlane.xlu0 %233
    %v235 = vmax.f32 %v81, %v82
    %236 = vmax.xlane.f32.xlu0 %v235
    %v237 = vpop.xlane.xlu0 %236
    %v238 = vmax.f32 %v83, %v84
    %239 = vmax.xlane.f32.xlu0 %v238
    %v240 = vpop.xlane.xlu0 %239
    %v241 = vmax.f32 %v85, %v86
    %242 = vmax.xlane.f32.xlu0 %v241
    %v243 = vpop.xlane.xlu0 %242
    %v244 = vmax.f32 %v87, %v88
    %245 = vmax.xlane.f32.xlu0 %v244
    %v246 = vpop.xlane.xlu0 %245
    %v247 = vmax.f32 %v89, %v90
    %248 = vmax.xlane.f32.xlu0 %v247
    %v249 = vpop.xlane.xlu0 %248
    %v250 = vmax.f32 %v91, %v92
    %251 = vmax.xlane.f32.xlu0 %v250
    %v252 = vpop.xlane.xlu0 %251
    %v253 = vmax.f32 %v93, %v94
    %254 = vmax.xlane.f32.xlu0 %v253
    %v255 = vpop.xlane.xlu0 %254
    %v256 = vmax.f32 %v95, %v96
    %257 = vmax.xlane.f32.xlu0 %v256
    %v258 = vpop.xlane.xlu0 %257
    %v259 = vmax.f32 %v97, %v98
    %260 = vmax.xlane.f32.xlu0 %v259
    %v261 = vpop.xlane.xlu0 %260
    %v262 = vmax.f32 %v99, %v100
    %263 = vmax.xlane.f32.xlu0 %v262
    %v264 = vpop.xlane.xlu0 %263
    %v265 = vmax.f32 %v101, %v102
    %266 = vmax.xlane.f32.xlu0 %v265
    %v267 = vpop.xlane.xlu0 %266
    %v268 = vmax.f32 %v103, %v104
    %269 = vmax.xlane.f32.xlu0 %v268
    %v270 = vpop.xlane.xlu0 %269
    %v271 = vmax.f32 %v105, %v106
    %272 = vmax.xlane.f32.xlu0 %v271
    %v273 = vpop.xlane.xlu0 %272
    %v274 = vmax.f32 %v107, %v108
    %275 = vmax.xlane.f32.xlu0 %v274
    %v276 = vpop.xlane.xlu0 %275
    %v277 = vmax.f32 %v109, %v110
    %278 = vmax.xlane.f32.xlu0 %v277
    %v279 = vpop.xlane.xlu0 %278
    %v280 = vmax.f32 %v111, %v112
    %281 = vmax.xlane.f32.xlu0 %v280
    %v282 = vpop.xlane.xlu0 %281
    %v283 = vmax.f32 %v113, %v114
    %284 = vmax.xlane.f32.xlu0 %v283
    %v285 = vpop.xlane.xlu0 %284
    %v286 = vmax.f32 %v115, %v116
    %287 = vmax.xlane.f32.xlu0 %v286
    %v288 = vpop.xlane.xlu0 %287
    %v289 = vmax.f32 %v117, %v118
    %290 = vmax.xlane.f32.xlu0 %v289
    %v291 = vpop.xlane.xlu0 %290
    %v292 = vmax.f32 %v119, %v120
    %293 = vmax.xlane.f32.xlu0 %v292
    %v294 = vpop.xlane.xlu0 %293
    %v295 = vmax.f32 %v121, %v122
    %296 = vmax.xlane.f32.xlu0 %v295
    %v297 = vpop.xlane.xlu0 %296
    %v298 = vmax.f32 %v123, %v124
    %299 = vmax.xlane.f32.xlu0 %v298
    %v300 = vpop.xlane.xlu0 %299
    %v301 = vmax.f32 %v125, %v126
    %302 = vmax.xlane.f32.xlu0 %v301
    %v303 = vpop.xlane.xlu0 %302
    %v304 = vmax.f32 %v127, %v128
    %305 = vmax.xlane.f32.xlu0 %v304
    %v306 = vpop.xlane.xlu0 %305
    %v307 = vmax.f32 %v129, %v130
    %308 = vmax.xlane.f32.xlu0 %v307
    %v309 = vpop.xlane.xlu0 %308
    %v310 = vmax.f32 %v131, %v132
    %311 = vmax.xlane.f32.xlu0 %v310
    %v312 = vpop.xlane.xlu0 %311
    %v313 = vmax.f32 %v133, %v134
    %314 = vmax.xlane.f32.xlu0 %v313
    %v315 = vpop.xlane.xlu0 %314
    %v316 = vmax.f32 %v135, %v136
    %317 = vmax.xlane.f32.xlu0 %v316
    %v318 = vpop.xlane.xlu0 %317
    %v319 = vmax.f32 %v137, %v138
    %320 = vmax.xlane.f32.xlu0 %v319
    %v321 = vpop.xlane.xlu0 %320
    %v322 = vmax.f32 %v139, %v140
    %323 = vmax.xlane.f32.xlu0 %v322
    %v324 = vpop.xlane.xlu0 %323
    %v325 = vmax.f32 %v141, %v142
    %326 = vmax.xlane.f32.xlu0 %v325
    %v327 = vpop.xlane.xlu0 %326
    %v328 = vmax.f32 %v143, %v144
    %329 = vmax.xlane.f32.xlu0 %v328
    %v330 = vpop.xlane.xlu0 %329
    %v331 = vmax.f32 %v145, %v146
    %332 = vmax.xlane.f32.xlu0 %v331
    %v333 = vpop.xlane.xlu0 %332
    %v334 = vmax.f32 %v147, %v148
    %335 = vmax.xlane.f32.xlu0 %v334
    %v336 = vpop.xlane.xlu0 %335
    %v337 = vmax.f32 %v149, %v150
    %338 = vmax.xlane.f32.xlu0 %v337
    %v339 = vpop.xlane.xlu0 %338
    %v340 = vmax.f32 %v151, %v152
    %341 = vmax.xlane.f32.xlu0 %v340
    %v342 = vpop.xlane.xlu0 %341
    %v343 = vmax.f32 %v153, %v154
    %344 = vmax.xlane.f32.xlu0 %v343
    %v345 = vpop.xlane.xlu0 %344
    %v346 = vmax.f32 %v155, %v156
    %347 = vmax.xlane.f32.xlu0 %v346
    %v348 = vpop.xlane.xlu0 %347
    %v349 = vsub.f32 %v29, %v159
    %v350 = vsub.f32 %v30, %v159
    %v351 = vsub.f32 %v31, %v162
    %v352 = vsub.f32 %v32, %v162
    %v353 = vsub.f32 %v33, %v165
    %v354 = vsub.f32 %v34, %v165
    %v355 = vsub.f32 %v35, %v168
    %v356 = vsub.f32 %v36, %v168
    %v357 = vsub.f32 %v37, %v171
    %v358 = vsub.f32 %v38, %v171
    %v359 = vsub.f32 %v39, %v174
    %v360 = vsub.f32 %v40, %v174
    %v361 = vsub.f32 %v41, %v177
    %v362 = vsub.f32 %v42, %v177
    %v363 = vsub.f32 %v43, %v180
    %v364 = vsub.f32 %v44, %v180
    %v365 = vsub.f32 %v45, %v183
    %v366 = vsub.f32 %v46, %v183
    %v367 = vsub.f32 %v47, %v186
    %v368 = vsub.f32 %v48, %v186
    %v369 = vsub.f32 %v49, %v189
    %v370 = vsub.f32 %v50, %v189
    %v371 = vsub.f32 %v51, %v192
    %v372 = vsub.f32 %v52, %v192
    %v373 = vsub.f32 %v53, %v195
    %v374 = vsub.f32 %v54, %v195
    %v375 = vsub.f32 %v55, %v198
    %v376 = vsub.f32 %v56, %v198
    %v377 = vsub.f32 %v57, %v201
    %v378 = vsub.f32 %v58, %v201
    %v379 = vsub.f32 %v59, %v204
    %v380 = vsub.f32 %v60, %v204
    %v381 = vsub.f32 %v61, %v207
    %v382 = vsub.f32 %v62, %v207
    %v383 = vsub.f32 %v63, %v210
    %v384 = vsub.f32 %v64, %v210
    %v385 = vsub.f32 %v65, %v213
    %v386 = vsub.f32 %v66, %v213
    %v387 = vsub.f32 %v67, %v216
    %v388 = vsub.f32 %v68, %v216
    %v389 = vsub.f32 %v69, %v219
    %v390 = vsub.f32 %v70, %v219
    %v391 = vsub.f32 %v71, %v222
    %v392 = vsub.f32 %v72, %v222
    %v393 = vsub.f32 %v73, %v225
    %v394 = vsub.f32 %v74, %v225
    %v395 = vsub.f32 %v75, %v228
    %v396 = vsub.f32 %v76, %v228
    %v397 = vsub.f32 %v77, %v231
    %v398 = vsub.f32 %v78, %v231
    %v399 = vsub.f32 %v79, %v234
    %v400 = vsub.f32 %v80, %v234
    %v401 = vsub.f32 %v81, %v237
    %v402 = vsub.f32 %v82, %v237
    %v403 = vsub.f32 %v83, %v240
    %v404 = vsub.f32 %v84, %v240
    %v405 = vsub.f32 %v85, %v243
    %v406 = vsub.f32 %v86, %v243
    %v407 = vsub.f32 %v87, %v246
    %v408 = vsub.f32 %v88, %v246
    %v409 = vsub.f32 %v89, %v249
    %v410 = vsub.f32 %v90, %v249
    %v411 = vsub.f32 %v91, %v252
    %v412 = vsub.f32 %v92, %v252
    %v413 = vsub.f32 %v93, %v255
    %v414 = vsub.f32 %v94, %v255
    %v415 = vsub.f32 %v95, %v258
    %v416 = vsub.f32 %v96, %v258
    %v417 = vsub.f32 %v97, %v261
    %v418 = vsub.f32 %v98, %v261
    %v419 = vsub.f32 %v99, %v264
    %v420 = vsub.f32 %v100, %v264
    %v421 = vsub.f32 %v101, %v267
    %v422 = vsub.f32 %v102, %v267
    %v423 = vsub.f32 %v103, %v270
    %v424 = vsub.f32 %v104, %v270
    %v425 = vsub.f32 %v105, %v273
    %v426 = vsub.f32 %v106, %v273
    %v427 = vsub.f32 %v107, %v276
    %v428 = vsub.f32 %v108, %v276
    %v429 = vsub.f32 %v109, %v279
    %v430 = vsub.f32 %v110, %v279
    %v431 = vsub.f32 %v111, %v282
    %v432 = vsub.f32 %v112, %v282
    %v433 = vsub.f32 %v113, %v285
    %v434 = vsub.f32 %v114, %v285
    %v435 = vsub.f32 %v115, %v288
    %v436 = vsub.f32 %v116, %v288
    %v437 = vsub.f32 %v117, %v291
    %v438 = vsub.f32 %v118, %v291
    %v439 = vsub.f32 %v119, %v294
    %v440 = vsub.f32 %v120, %v294
    %v441 = vsub.f32 %v121, %v297
    %v442 = vsub.f32 %v122, %v297
    %v443 = vsub.f32 %v123, %v300
    %v444 = vsub.f32 %v124, %v300
    %v445 = vsub.f32 %v125, %v303
    %v446 = vsub.f32 %v126, %v303
    %v447 = vsub.f32 %v127, %v306
    %v448 = vsub.f32 %v128, %v306
    %v449 = vsub.f32 %v129, %v309
    %v450 = vsub.f32 %v130, %v309
    %v451 = vsub.f32 %v131, %v312
    %v452 = vsub.f32 %v132, %v312
    %v453 = vsub.f32 %v133, %v315
    %v454 = vsub.f32 %v134, %v315
    %v455 = vsub.f32 %v135, %v318
    %v456 = vsub.f32 %v136, %v318
    %v457 = vsub.f32 %v137, %v321
    %v458 = vsub.f32 %v138, %v321
    %v459 = vsub.f32 %v139, %v324
    %v460 = vsub.f32 %v140, %v324
    %v461 = vsub.f32 %v141, %v327
    %v462 = vsub.f32 %v142, %v327
    %v463 = vsub.f32 %v143, %v330
    %v464 = vsub.f32 %v144, %v330
    %v465 = vsub.f32 %v145, %v333
    %v466 = vsub.f32 %v146, %v333
    %v467 = vsub.f32 %v147, %v336
    %v468 = vsub.f32 %v148, %v336
    %v469 = vsub.f32 %v149, %v339
    %v470 = vsub.f32 %v150, %v339
    %v471 = vsub.f32 %v151, %v342
    %v472 = vsub.f32 %v152, %v342
    %v473 = vsub.f32 %v153, %v345
    %v474 = vsub.f32 %v154, %v345
    %v475 = vsub.f32 %v155, %v348
    %v476 = vsub.f32 %v156, %v348
    %v477 = vmul.f32 %v349, 1.442695
    %v478 = vpow.pop %v477
    %v479 = vmul.f32 %v350, 1.442695
    %v480 = vpow.pop %v479
    %v481 = vmul.f32 %v351, 1.442695
    %v482 = vpow.pop %v481
    %v483 = vmul.f32 %v352, 1.442695
    %v484 = vpow.pop %v483
    %v485 = vmul.f32 %v353, 1.442695
    %v486 = vpow.pop %v485
    %v487 = vmul.f32 %v354, 1.442695
    %v488 = vpow.pop %v487
    %v489 = vmul.f32 %v355, 1.442695
    %v490 = vpow.pop %v489
    %v491 = vmul.f32 %v356, 1.442695
    %v492 = vpow.pop %v491
    %v493 = vmul.f32 %v357, 1.442695
    %v494 = vpow.pop %v493
    %v495 = vmul.f32 %v358, 1.442695
    %v496 = vpow.pop %v495
    %v497 = vmul.f32 %v359, 1.442695
    %v498 = vpow.pop %v497
    %v499 = vmul.f32 %v360, 1.442695
    %v500 = vpow.pop %v499
    %v501 = vmul.f32 %v361, 1.442695
    %v502 = vpow.pop %v501
    %v503 = vmul.f32 %v362, 1.442695
    %v504 = vpow.pop %v503
    %v505 = vmul.f32 %v363, 1.442695
    %v506 = vpow.pop %v505
    %v507 = vmul.f32 %v364, 1.442695
    %v508 = vpow.pop %v507
    %v509 = vmul.f32 %v365, 1.442695
    %v510 = vpow.pop %v509
    %v511 = vmul.f32 %v366, 1.442695
    %v512 = vpow.pop %v511
    %v513 = vmul.f32 %v367, 1.442695
    %v514 = vpow.pop %v513
    %v515 = vmul.f32 %v368, 1.442695
    %v516 = vpow.pop %v515
    %v517 = vmul.f32 %v369, 1.442695
    %v518 = vpow.pop %v517
    %v519 = vmul.f32 %v370, 1.442695
    %v520 = vpow.pop %v519
    %v521 = vmul.f32 %v371, 1.442695
    %v522 = vpow.pop %v521
    %v523 = vmul.f32 %v372, 1.442695
    %v524 = vpow.pop %v523
    %v525 = vmul.f32 %v373, 1.442695
    %v526 = vpow.pop %v525
    %v527 = vmul.f32 %v374, 1.442695
    %v528 = vpow.pop %v527
    %v529 = vmul.f32 %v375, 1.442695
    %v530 = vpow.pop %v529
    %v531 = vmul.f32 %v376, 1.442695
    %v532 = vpow.pop %v531
    %v533 = vmul.f32 %v377, 1.442695
    %v534 = vpow.pop %v533
    %v535 = vmul.f32 %v378, 1.442695
    %v536 = vpow.pop %v535
    %v537 = vmul.f32 %v379, 1.442695
    %v538 = vpow.pop %v537
    %v539 = vmul.f32 %v380, 1.442695
    %v540 = vpow.pop %v539
    %v541 = vmul.f32 %v381, 1.442695
    %v542 = vpow.pop %v541
    %v543 = vmul.f32 %v382, 1.442695
    %v544 = vpow.pop %v543
    %v545 = vmul.f32 %v383, 1.442695
    %v546 = vpow.pop %v545
    %v547 = vmul.f32 %v384, 1.442695
    %v548 = vpow.pop %v547
    %v549 = vmul.f32 %v385, 1.442695
    %v550 = vpow.pop %v549
    %v551 = vmul.f32 %v386, 1.442695
    %v552 = vpow.pop %v551
    %v553 = vmul.f32 %v387, 1.442695
    %v554 = vpow.pop %v553
    %v555 = vmul.f32 %v388, 1.442695
    %v556 = vpow.pop %v555
    %v557 = vmul.f32 %v389, 1.442695
    %v558 = vpow.pop %v557
    %v559 = vmul.f32 %v390, 1.442695
    %v560 = vpow.pop %v559
    %v561 = vmul.f32 %v391, 1.442695
    %v562 = vpow.pop %v561
    %v563 = vmul.f32 %v392, 1.442695
    %v564 = vpow.pop %v563
    %v565 = vmul.f32 %v393, 1.442695
    %v566 = vpow.pop %v565
    %v567 = vmul.f32 %v394, 1.442695
    %v568 = vpow.pop %v567
    %v569 = vmul.f32 %v395, 1.442695
    %v570 = vpow.pop %v569
    %v571 = vmul.f32 %v396, 1.442695
    %v572 = vpow.pop %v571
    %v573 = vmul.f32 %v397, 1.442695
    %v574 = vpow.pop %v573
    %v575 = vmul.f32 %v398, 1.442695
    %v576 = vpow.pop %v575
    %v577 = vmul.f32 %v399, 1.442695
    %v578 = vpow.pop %v577
    %v579 = vmul.f32 %v400, 1.442695
    %v580 = vpow.pop %v579
    %v581 = vmul.f32 %v401, 1.442695
    %v582 = vpow.pop %v581
    %v583 = vmul.f32 %v402, 1.442695
    %v584 = vpow.pop %v583
    %v585 = vmul.f32 %v403, 1.442695
    %v586 = vpow.pop %v585
    %v587 = vmul.f32 %v404, 1.442695
    %v588 = vpow.pop %v587
    %v589 = vmul.f32 %v405, 1.442695
    %v590 = vpow.pop %v589
    %v591 = vmul.f32 %v406, 1.442695
    %v592 = vpow.pop %v591
    %v593 = vmul.f32 %v407, 1.442695
    %v594 = vpow.pop %v593
    %v595 = vmul.f32 %v408, 1.442695
    %v596 = vpow.pop %v595
    %v597 = vmul.f32 %v409, 1.442695
    %v598 = vpow.pop %v597
    %v599 = vmul.f32 %v410, 1.442695
    %v600 = vpow.pop %v599
    %v601 = vmul.f32 %v411, 1.442695
    %v602 = vpow.pop %v601
    %v603 = vmul.f32 %v412, 1.442695
    %v604 = vpow.pop %v603
    %v605 = vmul.f32 %v413, 1.442695
    %v606 = vpow.pop %v605
    %v607 = vmul.f32 %v414, 1.442695
    %v608 = vpow.pop %v607
    %v609 = vmul.f32 %v415, 1.442695
    %v610 = vpow.pop %v609
    %v611 = vmul.f32 %v416, 1.442695
    %v612 = vpow.pop %v611
    %v613 = vmul.f32 %v417, 1.442695
    %v614 = vpow.pop %v613
    %v615 = vmul.f32 %v418, 1.442695
    %v616 = vpow.pop %v615
    %v617 = vmul.f32 %v419, 1.442695
    %v618 = vpow.pop %v617
    %v619 = vmul.f32 %v420, 1.442695
    %v620 = vpow.pop %v619
    %v621 = vmul.f32 %v421, 1.442695
    %v622 = vpow.pop %v621
    %v623 = vmul.f32 %v422, 1.442695
    %v624 = vpow.pop %v623
    %v625 = vmul.f32 %v423, 1.442695
    %v626 = vpow.pop %v625
    %v627 = vmul.f32 %v424, 1.442695
    %v628 = vpow.pop %v627
    %v629 = vmul.f32 %v425, 1.442695
    %v630 = vpow.pop %v629
    %v631 = vmul.f32 %v426, 1.442695
    %v632 = vpow.pop %v631
    %v633 = vmul.f32 %v427, 1.442695
    %v634 = vpow.pop %v633
    %v635 = vmul.f32 %v428, 1.442695
    %v636 = vpow.pop %v635
    %v637 = vmul.f32 %v429, 1.442695
    %v638 = vpow.pop %v637
    %v639 = vmul.f32 %v430, 1.442695
    %v640 = vpow.pop %v639
    %v641 = vmul.f32 %v431, 1.442695
    %v642 = vpow.pop %v641
    %v643 = vmul.f32 %v432, 1.442695
    %v644 = vpow.pop %v643
    %v645 = vmul.f32 %v433, 1.442695
    %v646 = vpow.pop %v645
    %v647 = vmul.f32 %v434, 1.442695
    %v648 = vpow.pop %v647
    %v649 = vmul.f32 %v435, 1.442695
    %v650 = vpow.pop %v649
    %v651 = vmul.f32 %v436, 1.442695
    %v652 = vpow.pop %v651
    %v653 = vmul.f32 %v437, 1.442695
    %v654 = vpow.pop %v653
    %v655 = vmul.f32 %v438, 1.442695
    %v656 = vpow.pop %v655
    %v657 = vmul.f32 %v439, 1.442695
    %v658 = vpow.pop %v657
    %v659 = vmul.f32 %v440, 1.442695
    %v660 = vpow.pop %v659
    %v661 = vmul.f32 %v441, 1.442695
    %v662 = vpow.pop %v661
    %v663 = vmul.f32 %v442, 1.442695
    %v664 = vpow.pop %v663
    %v665 = vmul.f32 %v443, 1.442695
    %v666 = vpow.pop %v665
    %v667 = vmul.f32 %v444, 1.442695
    %v668 = vpow.pop %v667
    %v669 = vmul.f32 %v445, 1.442695
    %v670 = vpow.pop %v669
    %v671 = vmul.f32 %v446, 1.442695
    %v672 = vpow.pop %v671
    %v673 = vmul.f32 %v447, 1.442695
    %v674 = vpow.pop %v673
    %v675 = vmul.f32 %v448, 1.442695
    %v676 = vpow.pop %v675
    %v677 = vmul.f32 %v449, 1.442695
    %v678 = vpow.pop %v677
    %v679 = vmul.f32 %v450, 1.442695
    %v680 = vpow.pop %v679
    %v681 = vmul.f32 %v451, 1.442695
    %v682 = vpow.pop %v681
    %v683 = vmul.f32 %v452, 1.442695
    %v684 = vpow.pop %v683
    %v685 = vmul.f32 %v453, 1.442695
    %v686 = vpow.pop %v685
    %v687 = vmul.f32 %v454, 1.442695
    %v688 = vpow.pop %v687
    %v689 = vmul.f32 %v455, 1.442695
    %v690 = vpow.pop %v689
    %v691 = vmul.f32 %v456, 1.442695
    %v692 = vpow.pop %v691
    %v693 = vmul.f32 %v457, 1.442695
    %v694 = vpow.pop %v693
    %v695 = vmul.f32 %v458, 1.442695
    %v696 = vpow.pop %v695
    %v697 = vmul.f32 %v459, 1.442695
    %v698 = vpow.pop %v697
    %v699 = vmul.f32 %v460, 1.442695
    %v700 = vpow.pop %v699
    %v701 = vmul.f32 %v461, 1.442695
    %v702 = vpow.pop %v701
    %v703 = vmul.f32 %v462, 1.442695
    %v704 = vpow.pop %v703
    %v705 = vmul.f32 %v463, 1.442695
    %v706 = vpow.pop %v705
    %v707 = vmul.f32 %v464, 1.442695
    %v708 = vpow.pop %v707
    %v709 = vmul.f32 %v465, 1.442695
    %v710 = vpow.pop %v709
    %v711 = vmul.f32 %v466, 1.442695
    %v712 = vpow.pop %v711
    %v713 = vmul.f32 %v467, 1.442695
    %v714 = vpow.pop %v713
    %v715 = vmul.f32 %v468, 1.442695
    %v716 = vpow.pop %v715
    %v717 = vmul.f32 %v469, 1.442695
    %v718 = vpow.pop %v717
    %v719 = vmul.f32 %v470, 1.442695
    %v720 = vpow.pop %v719
    %v721 = vmul.f32 %v471, 1.442695
    %v722 = vpow.pop %v721
    %v723 = vmul.f32 %v472, 1.442695
    %v724 = vpow.pop %v723
    %v725 = vmul.f32 %v473, 1.442695
    %v726 = vpow.pop %v725
    %v727 = vmul.f32 %v474, 1.442695
    %v728 = vpow.pop %v727
    %v729 = vmul.f32 %v475, 1.442695
    %v730 = vpow.pop %v729
    %v731 = vmul.f32 %v476, 1.442695
    %v732 = vpow.pop %v731
    %v733 = vadd.f32 %v478, %v480
    %734 = vadd.xlane.f32.xlu0 %v733
    %v735 = vpop.xlane.xlu0 %734
    %v736 = vadd.f32 %v482, %v484
    %737 = vadd.xlane.f32.xlu0 %v736
    %v738 = vpop.xlane.xlu0 %737
    %v739 = vadd.f32 %v486, %v488
    %740 = vadd.xlane.f32.xlu0 %v739
    %v741 = vpop.xlane.xlu0 %740
    %v742 = vadd.f32 %v490, %v492
    %743 = vadd.xlane.f32.xlu0 %v742
    %v744 = vpop.xlane.xlu0 %743
    %v745 = vadd.f32 %v494, %v496
    %746 = vadd.xlane.f32.xlu0 %v745
    %v747 = vpop.xlane.xlu0 %746
    %v748 = vadd.f32 %v498, %v500
    %749 = vadd.xlane.f32.xlu0 %v748
    %v750 = vpop.xlane.xlu0 %749
    %v751 = vadd.f32 %v502, %v504
    %752 = vadd.xlane.f32.xlu0 %v751
    %v753 = vpop.xlane.xlu0 %752
    %v754 = vadd.f32 %v506, %v508
    %755 = vadd.xlane.f32.xlu0 %v754
    %v756 = vpop.xlane.xlu0 %755
    %v757 = vadd.f32 %v510, %v512
    %758 = vadd.xlane.f32.xlu0 %v757
    %v759 = vpop.xlane.xlu0 %758
    %v760 = vadd.f32 %v514, %v516
    %761 = vadd.xlane.f32.xlu0 %v760
    %v762 = vpop.xlane.xlu0 %761
    %v763 = vadd.f32 %v518, %v520
    %764 = vadd.xlane.f32.xlu0 %v763
    %v765 = vpop.xlane.xlu0 %764
    %v766 = vadd.f32 %v522, %v524
    %767 = vadd.xlane.f32.xlu0 %v766
    %v768 = vpop.xlane.xlu0 %767
    %v769 = vadd.f32 %v526, %v528
    %770 = vadd.xlane.f32.xlu0 %v769
    %v771 = vpop.xlane.xlu0 %770
    %v772 = vadd.f32 %v530, %v532
    %773 = vadd.xlane.f32.xlu0 %v772
    %v774 = vpop.xlane.xlu0 %773
    %v775 = vadd.f32 %v534, %v536
    %776 = vadd.xlane.f32.xlu0 %v775
    %v777 = vpop.xlane.xlu0 %776
    %v778 = vadd.f32 %v538, %v540
    %779 = vadd.xlane.f32.xlu0 %v778
    %v780 = vpop.xlane.xlu0 %779
    %v781 = vadd.f32 %v542, %v544
    %782 = vadd.xlane.f32.xlu0 %v781
    %v783 = vpop.xlane.xlu0 %782
    %v784 = vadd.f32 %v546, %v548
    %785 = vadd.xlane.f32.xlu0 %v784
    %v786 = vpop.xlane.xlu0 %785
    %v787 = vadd.f32 %v550, %v552
    %788 = vadd.xlane.f32.xlu0 %v787
    %v789 = vpop.xlane.xlu0 %788
    %v790 = vadd.f32 %v554, %v556
    %791 = vadd.xlane.f32.xlu0 %v790
    %v792 = vpop.xlane.xlu0 %791
    %v793 = vadd.f32 %v558, %v560
    %794 = vadd.xlane.f32.xlu0 %v793
    %v795 = vpop.xlane.xlu0 %794
    %v796 = vadd.f32 %v562, %v564
    %797 = vadd.xlane.f32.xlu0 %v796
    %v798 = vpop.xlane.xlu0 %797
    %v799 = vadd.f32 %v566, %v568
    %800 = vadd.xlane.f32.xlu0 %v799
    %v801 = vpop.xlane.xlu0 %800
    %v802 = vadd.f32 %v570, %v572
    %803 = vadd.xlane.f32.xlu0 %v802
    %v804 = vpop.xlane.xlu0 %803
    %v805 = vadd.f32 %v574, %v576
    %806 = vadd.xlane.f32.xlu0 %v805
    %v807 = vpop.xlane.xlu0 %806
    %v808 = vadd.f32 %v578, %v580
    %809 = vadd.xlane.f32.xlu0 %v808
    %v810 = vpop.xlane.xlu0 %809
    %v811 = vadd.f32 %v582, %v584
    %812 = vadd.xlane.f32.xlu0 %v811
    %v813 = vpop.xlane.xlu0 %812
    %v814 = vadd.f32 %v586, %v588
    %815 = vadd.xlane.f32.xlu0 %v814
    %v816 = vpop.xlane.xlu0 %815
    %v817 = vadd.f32 %v590, %v592
    %818 = vadd.xlane.f32.xlu0 %v817
    %v819 = vpop.xlane.xlu0 %818
    %v820 = vadd.f32 %v594, %v596
    %821 = vadd.xlane.f32.xlu0 %v820
    %v822 = vpop.xlane.xlu0 %821
    %v823 = vadd.f32 %v598, %v600
    %824 = vadd.xlane.f32.xlu0 %v823
    %v825 = vpop.xlane.xlu0 %824
    %v826 = vadd.f32 %v602, %v604
    %827 = vadd.xlane.f32.xlu0 %v826
    %v828 = vpop.xlane.xlu0 %827
    %v829 = vadd.f32 %v606, %v608
    %830 = vadd.xlane.f32.xlu0 %v829
    %v831 = vpop.xlane.xlu0 %830
    %v832 = vadd.f32 %v610, %v612
    %833 = vadd.xlane.f32.xlu0 %v832
    %v834 = vpop.xlane.xlu0 %833
    %v835 = vadd.f32 %v614, %v616
    %836 = vadd.xlane.f32.xlu0 %v835
    %v837 = vpop.xlane.xlu0 %836
    %v838 = vadd.f32 %v618, %v620
    %839 = vadd.xlane.f32.xlu0 %v838
    %v840 = vpop.xlane.xlu0 %839
    %v841 = vadd.f32 %v622, %v624
    %842 = vadd.xlane.f32.xlu0 %v841
    %v843 = vpop.xlane.xlu0 %842
    %v844 = vadd.f32 %v626, %v628
    %845 = vadd.xlane.f32.xlu0 %v844
    %v846 = vpop.xlane.xlu0 %845
    %v847 = vadd.f32 %v630, %v632
    %848 = vadd.xlane.f32.xlu0 %v847
    %v849 = vpop.xlane.xlu0 %848
    %v850 = vadd.f32 %v634, %v636
    %851 = vadd.xlane.f32.xlu0 %v850
    %v852 = vpop.xlane.xlu0 %851
    %v853 = vadd.f32 %v638, %v640
    %854 = vadd.xlane.f32.xlu0 %v853
    %v855 = vpop.xlane.xlu0 %854
    %v856 = vadd.f32 %v642, %v644
    %857 = vadd.xlane.f32.xlu0 %v856
    %v858 = vpop.xlane.xlu0 %857
    %v859 = vadd.f32 %v646, %v648
    %860 = vadd.xlane.f32.xlu0 %v859
    %v861 = vpop.xlane.xlu0 %860
    %v862 = vadd.f32 %v650, %v652
    %863 = vadd.xlane.f32.xlu0 %v862
    %v864 = vpop.xlane.xlu0 %863
    %v865 = vadd.f32 %v654, %v656
    %866 = vadd.xlane.f32.xlu0 %v865
    %v867 = vpop.xlane.xlu0 %866
    %v868 = vadd.f32 %v658, %v660
    %869 = vadd.xlane.f32.xlu0 %v868
    %v870 = vpop.xlane.xlu0 %869
    %v871 = vadd.f32 %v662, %v664
    %872 = vadd.xlane.f32.xlu0 %v871
    %v873 = vpop.xlane.xlu0 %872
    %v874 = vadd.f32 %v666, %v668
    %875 = vadd.xlane.f32.xlu0 %v874
    %v876 = vpop.xlane.xlu0 %875
    %v877 = vadd.f32 %v670, %v672
    %878 = vadd.xlane.f32.xlu0 %v877
    %v879 = vpop.xlane.xlu0 %878
    %v880 = vadd.f32 %v674, %v676
    %881 = vadd.xlane.f32.xlu0 %v880
    %v882 = vpop.xlane.xlu0 %881
    %v883 = vadd.f32 %v678, %v680
    %884 = vadd.xlane.f32.xlu0 %v883
    %v885 = vpop.xlane.xlu0 %884
    %v886 = vadd.f32 %v682, %v684
    %887 = vadd.xlane.f32.xlu0 %v886
    %v888 = vpop.xlane.xlu0 %887
    %v889 = vadd.f32 %v686, %v688
    %890 = vadd.xlane.f32.xlu0 %v889
    %v891 = vpop.xlane.xlu0 %890
    %v892 = vadd.f32 %v690, %v692
    %893 = vadd.xlane.f32.xlu0 %v892
    %v894 = vpop.xlane.xlu0 %893
    %v895 = vadd.f32 %v694, %v696
    %896 = vadd.xlane.f32.xlu0 %v895
    %v897 = vpop.xlane.xlu0 %896
    %v898 = vadd.f32 %v698, %v700
    %899 = vadd.xlane.f32.xlu0 %v898
    %v900 = vpop.xlane.xlu0 %899
    %v901 = vadd.f32 %v702, %v704
    %902 = vadd.xlane.f32.xlu0 %v901
    %v903 = vpop.xlane.xlu0 %902
    %v904 = vadd.f32 %v706, %v708
    %905 = vadd.xlane.f32.xlu0 %v904
    %v906 = vpop.xlane.xlu0 %905
    %v907 = vadd.f32 %v710, %v712
    %908 = vadd.xlane.f32.xlu0 %v907
    %v909 = vpop.xlane.xlu0 %908
    %v910 = vadd.f32 %v714, %v716
    %911 = vadd.xlane.f32.xlu0 %v910
    %v912 = vpop.xlane.xlu0 %911
    %v913 = vadd.f32 %v718, %v720
    %914 = vadd.xlane.f32.xlu0 %v913
    %v915 = vpop.xlane.xlu0 %914
    %v916 = vadd.f32 %v722, %v724
    %917 = vadd.xlane.f32.xlu0 %v916
    %v918 = vpop.xlane.xlu0 %917
    %v919 = vadd.f32 %v726, %v728
    %920 = vadd.xlane.f32.xlu0 %v919
    %v921 = vpop.xlane.xlu0 %920
    %v922 = vadd.f32 %v730, %v732
    %923 = vadd.xlane.f32.xlu0 %v922
    %v924 = vpop.xlane.xlu0 %923
    %v925 = vrcp.pop %v735
    %v926 = vrcp.pop %v738
    %v927 = vrcp.pop %v741
    %v928 = vrcp.pop %v744
    %v929 = vrcp.pop %v747
    %v930 = vrcp.pop %v750
    %v931 = vrcp.pop %v753
    %v932 = vrcp.pop %v756
    %v933 = vrcp.pop %v759
    %v934 = vrcp.pop %v762
    %v935 = vrcp.pop %v765
    %v936 = vrcp.pop %v768
    %v937 = vrcp.pop %v771
    %v938 = vrcp.pop %v774
    %v939 = vrcp.pop %v777
    %v940 = vrcp.pop %v780
    %v941 = vrcp.pop %v783
    %v942 = vrcp.pop %v786
    %v943 = vrcp.pop %v789
    %v944 = vrcp.pop %v792
    %v945 = vrcp.pop %v795
    %v946 = vrcp.pop %v798
    %v947 = vrcp.pop %v801
    %v948 = vrcp.pop %v804
    %v949 = vrcp.pop %v807
    %v950 = vrcp.pop %v810
    %v951 = vrcp.pop %v813
    %v952 = vrcp.pop %v816
    %v953 = vrcp.pop %v819
    %v954 = vrcp.pop %v822
    %v955 = vrcp.pop %v825
    %v956 = vrcp.pop %v828
    %v957 = vrcp.pop %v831
    %v958 = vrcp.pop %v834
    %v959 = vrcp.pop %v837
    %v960 = vrcp.pop %v840
    %v961 = vrcp.pop %v843
    %v962 = vrcp.pop %v846
    %v963 = vrcp.pop %v849
    %v964 = vrcp.pop %v852
    %v965 = vrcp.pop %v855
    %v966 = vrcp.pop %v858
    %v967 = vrcp.pop %v861
    %v968 = vrcp.pop %v864
    %v969 = vrcp.pop %v867
    %v970 = vrcp.pop %v870
    %v971 = vrcp.pop %v873
    %v972 = vrcp.pop %v876
    %v973 = vrcp.pop %v879
    %v974 = vrcp.pop %v882
    %v975 = vrcp.pop %v885
    %v976 = vrcp.pop %v888
    %v977 = vrcp.pop %v891
    %v978 = vrcp.pop %v894
    %v979 = vrcp.pop %v897
    %v980 = vrcp.pop %v900
    %v981 = vrcp.pop %v903
    %v982 = vrcp.pop %v906
    %v983 = vrcp.pop %v909
    %v984 = vrcp.pop %v912
    %v985 = vrcp.pop %v915
    %v986 = vrcp.pop %v918
    %v987 = vrcp.pop %v921
    %v988 = vrcp.pop %v924
    %v989 = vmul.f32 %v478, %v925
    %v990 = vmul.f32 %v480, %v925
    %v991 = vmul.f32 %v482, %v926
    %v992 = vmul.f32 %v484, %v926
    %v993 = vmul.f32 %v486, %v927
    %v994 = vmul.f32 %v488, %v927
    %v995 = vmul.f32 %v490, %v928
    %v996 = vmul.f32 %v492, %v928
    %v997 = vmul.f32 %v494, %v929
    %v998 = vmul.f32 %v496, %v929
    %v999 = vmul.f32 %v498, %v930
    %v1000 = vmul.f32 %v500, %v930
    %v1001 = vmul.f32 %v502, %v931
    %v1002 = vmul.f32 %v504, %v931
    %v1003 = vmul.f32 %v506, %v932
    %v1004 = vmul.f32 %v508, %v932
    %v1005 = vmul.f32 %v510, %v933
    %v1006 = vmul.f32 %v512, %v933
    %v1007 = vmul.f32 %v514, %v934
    %v1008 = vmul.f32 %v516, %v934
    %v1009 = vmul.f32 %v518, %v935
    %v1010 = vmul.f32 %v520, %v935
    %v1011 = vmul.f32 %v522, %v936
    %v1012 = vmul.f32 %v524, %v936
    %v1013 = vmul.f32 %v526, %v937
    %v1014 = vmul.f32 %v528, %v937
    %v1015 = vmul.f32 %v530, %v938
    %v1016 = vmul.f32 %v532, %v938
    %v1017 = vmul.f32 %v534, %v939
    %v1018 = vmul.f32 %v536, %v939
    %v1019 = vmul.f32 %v538, %v940
    %v1020 = vmul.f32 %v540, %v940
    %v1021 = vmul.f32 %v542, %v941
    %v1022 = vmul.f32 %v544, %v941
    %v1023 = vmul.f32 %v546, %v942
    %v1024 = vmul.f32 %v548, %v942
    %v1025 = vmul.f32 %v550, %v943
    %v1026 = vmul.f32 %v552, %v943
    %v1027 = vmul.f32 %v554, %v944
    %v1028 = vmul.f32 %v556, %v944
    %v1029 = vmul.f32 %v558, %v945
    %v1030 = vmul.f32 %v560, %v945
    %v1031 = vmul.f32 %v562, %v946
    %v1032 = vmul.f32 %v564, %v946
    %v1033 = vmul.f32 %v566, %v947
    %v1034 = vmul.f32 %v568, %v947
    %v1035 = vmul.f32 %v570, %v948
    %v1036 = vmul.f32 %v572, %v948
    %v1037 = vmul.f32 %v574, %v949
    %v1038 = vmul.f32 %v576, %v949
    %v1039 = vmul.f32 %v578, %v950
    %v1040 = vmul.f32 %v580, %v950
    %v1041 = vmul.f32 %v582, %v951
    %v1042 = vmul.f32 %v584, %v951
    %v1043 = vmul.f32 %v586, %v952
    %v1044 = vmul.f32 %v588, %v952
    %v1045 = vmul.f32 %v590, %v953
    %v1046 = vmul.f32 %v592, %v953
    %v1047 = vmul.f32 %v594, %v954
    %v1048 = vmul.f32 %v596, %v954
    %v1049 = vmul.f32 %v598, %v955
    %v1050 = vmul.f32 %v600, %v955
    %v1051 = vmul.f32 %v602, %v956
    %v1052 = vmul.f32 %v604, %v956
    %v1053 = vmul.f32 %v606, %v957
    %v1054 = vmul.f32 %v608, %v957
    %v1055 = vmul.f32 %v610, %v958
    %v1056 = vmul.f32 %v612, %v958
    %v1057 = vmul.f32 %v614, %v959
    %v1058 = vmul.f32 %v616, %v959
    %v1059 = vmul.f32 %v618, %v960
    %v1060 = vmul.f32 %v620, %v960
    %v1061 = vmul.f32 %v622, %v961
    %v1062 = vmul.f32 %v624, %v961
    %v1063 = vmul.f32 %v626, %v962
    %v1064 = vmul.f32 %v628, %v962
    %v1065 = vmul.f32 %v630, %v963
    %v1066 = vmul.f32 %v632, %v963
    %v1067 = vmul.f32 %v634, %v964
    %v1068 = vmul.f32 %v636, %v964
    %v1069 = vmul.f32 %v638, %v965
    %v1070 = vmul.f32 %v640, %v965
    %v1071 = vmul.f32 %v642, %v966
    %v1072 = vmul.f32 %v644, %v966
    %v1073 = vmul.f32 %v646, %v967
    %v1074 = vmul.f32 %v648, %v967
    %v1075 = vmul.f32 %v650, %v968
    %v1076 = vmul.f32 %v652, %v968
    %v1077 = vmul.f32 %v654, %v969
    %v1078 = vmul.f32 %v656, %v969
    %v1079 = vmul.f32 %v658, %v970
    %v1080 = vmul.f32 %v660, %v970
    %v1081 = vmul.f32 %v662, %v971
    %v1082 = vmul.f32 %v664, %v971
    %v1083 = vmul.f32 %v666, %v972
    %v1084 = vmul.f32 %v668, %v972
    %v1085 = vmul.f32 %v670, %v973
    %v1086 = vmul.f32 %v672, %v973
    %v1087 = vmul.f32 %v674, %v974
    %v1088 = vmul.f32 %v676, %v974
    %v1089 = vmul.f32 %v678, %v975
    %v1090 = vmul.f32 %v680, %v975
    %v1091 = vmul.f32 %v682, %v976
    %v1092 = vmul.f32 %v684, %v976
    %v1093 = vmul.f32 %v686, %v977
    %v1094 = vmul.f32 %v688, %v977
    %v1095 = vmul.f32 %v690, %v978
    %v1096 = vmul.f32 %v692, %v978
    %v1097 = vmul.f32 %v694, %v979
    %v1098 = vmul.f32 %v696, %v979
    %v1099 = vmul.f32 %v698, %v980
    %v1100 = vmul.f32 %v700, %v980
    %v1101 = vmul.f32 %v702, %v981
    %v1102 = vmul.f32 %v704, %v981
    %v1103 = vmul.f32 %v706, %v982
    %v1104 = vmul.f32 %v708, %v982
    %v1105 = vmul.f32 %v710, %v983
    %v1106 = vmul.f32 %v712, %v983
    %v1107 = vmul.f32 %v714, %v984
    %v1108 = vmul.f32 %v716, %v984
    %v1109 = vmul.f32 %v718, %v985
    %v1110 = vmul.f32 %v720, %v985
    %v1111 = vmul.f32 %v722, %v986
    %v1112 = vmul.f32 %v724, %v986
    %v1113 = vmul.f32 %v726, %v987
    %v1114 = vmul.f32 %v728, %v987
    %v1115 = vmul.f32 %v730, %v988
    %v1116 = vmul.f32 %v732, %v988
    %v1117 = vmul.f32 %v989, 1.442695
    %v1118 = vpow.pop %v1117
    %v1119 = vmul.f32 %v990, 1.442695
    %v1120 = vpow.pop %v1119
    %v1121 = vmul.f32 %v991, 1.442695
    %v1122 = vpow.pop %v1121
    %v1123 = vmul.f32 %v992, 1.442695
    %v1124 = vpow.pop %v1123
    %v1125 = vmul.f32 %v993, 1.442695
    %v1126 = vpow.pop %v1125
    %v1127 = vmul.f32 %v994, 1.442695
    %v1128 = vpow.pop %v1127
    %v1129 = vmul.f32 %v995, 1.442695
    %v1130 = vpow.pop %v1129
    %v1131 = vmul.f32 %v996, 1.442695
    %v1132 = vpow.pop %v1131
    %v1133 = vmul.f32 %v997, 1.442695
    %v1134 = vpow.pop %v1133
    %v1135 = vmul.f32 %v998, 1.442695
    %v1136 = vpow.pop %v1135
    %v1137 = vmul.f32 %v999, 1.442695
    %v1138 = vpow.pop %v1137
    %v1139 = vmul.f32 %v1000, 1.442695
    %v1140 = vpow.pop %v1139
    %v1141 = vmul.f32 %v1001, 1.442695
    %v1142 = vpow.pop %v1141
    %v1143 = vmul.f32 %v1002, 1.442695
    %v1144 = vpow.pop %v1143
    %v1145 = vmul.f32 %v1003, 1.442695
    %v1146 = vpow.pop %v1145
    %v1147 = vmul.f32 %v1004, 1.442695
    %v1148 = vpow.pop %v1147
    %v1149 = vmul.f32 %v1005, 1.442695
    %v1150 = vpow.pop %v1149
    %v1151 = vmul.f32 %v1006, 1.442695
    %v1152 = vpow.pop %v1151
    %v1153 = vmul.f32 %v1007, 1.442695
    %v1154 = vpow.pop %v1153
    %v1155 = vmul.f32 %v1008, 1.442695
    %v1156 = vpow.pop %v1155
    %v1157 = vmul.f32 %v1009, 1.442695
    %v1158 = vpow.pop %v1157
    %v1159 = vmul.f32 %v1010, 1.442695
    %v1160 = vpow.pop %v1159
    %v1161 = vmul.f32 %v1011, 1.442695
    %v1162 = vpow.pop %v1161
    %v1163 = vmul.f32 %v1012, 1.442695
    %v1164 = vpow.pop %v1163
    %v1165 = vmul.f32 %v1013, 1.442695
    %v1166 = vpow.pop %v1165
    %v1167 = vmul.f32 %v1014, 1.442695
    %v1168 = vpow.pop %v1167
    %v1169 = vmul.f32 %v1015, 1.442695
    %v1170 = vpow.pop %v1169
    %v1171 = vmul.f32 %v1016, 1.442695
    %v1172 = vpow.pop %v1171
    %v1173 = vmul.f32 %v1017, 1.442695
    %v1174 = vpow.pop %v1173
    %v1175 = vmul.f32 %v1018, 1.442695
    %v1176 = vpow.pop %v1175
    %v1177 = vmul.f32 %v1019, 1.442695
    %v1178 = vpow.pop %v1177
    %v1179 = vmul.f32 %v1020, 1.442695
    %v1180 = vpow.pop %v1179
    %v1181 = vmul.f32 %v1021, 1.442695
    %v1182 = vpow.pop %v1181
    %v1183 = vmul.f32 %v1022, 1.442695
    %v1184 = vpow.pop %v1183
    %v1185 = vmul.f32 %v1023, 1.442695
    %v1186 = vpow.pop %v1185
    %v1187 = vmul.f32 %v1024, 1.442695
    %v1188 = vpow.pop %v1187
    %v1189 = vmul.f32 %v1025, 1.442695
    %v1190 = vpow.pop %v1189
    %v1191 = vmul.f32 %v1026, 1.442695
    %v1192 = vpow.pop %v1191
    %v1193 = vmul.f32 %v1027, 1.442695
    %v1194 = vpow.pop %v1193
    %v1195 = vmul.f32 %v1028, 1.442695
    %v1196 = vpow.pop %v1195
    %v1197 = vmul.f32 %v1029, 1.442695
    %v1198 = vpow.pop %v1197
    %v1199 = vmul.f32 %v1030, 1.442695
    %v1200 = vpow.pop %v1199
    %v1201 = vmul.f32 %v1031, 1.442695
    %v1202 = vpow.pop %v1201
    %v1203 = vmul.f32 %v1032, 1.442695
    %v1204 = vpow.pop %v1203
    %v1205 = vmul.f32 %v1033, 1.442695
    %v1206 = vpow.pop %v1205
    %v1207 = vmul.f32 %v1034, 1.442695
    %v1208 = vpow.pop %v1207
    %v1209 = vmul.f32 %v1035, 1.442695
    %v1210 = vpow.pop %v1209
    %v1211 = vmul.f32 %v1036, 1.442695
    %v1212 = vpow.pop %v1211
    %v1213 = vmul.f32 %v1037, 1.442695
    %v1214 = vpow.pop %v1213
    %v1215 = vmul.f32 %v1038, 1.442695
    %v1216 = vpow.pop %v1215
    %v1217 = vmul.f32 %v1039, 1.442695
    %v1218 = vpow.pop %v1217
    %v1219 = vmul.f32 %v1040, 1.442695
    %v1220 = vpow.pop %v1219
    %v1221 = vmul.f32 %v1041, 1.442695
    %v1222 = vpow.pop %v1221
    %v1223 = vmul.f32 %v1042, 1.442695
    %v1224 = vpow.pop %v1223
    %v1225 = vmul.f32 %v1043, 1.442695
    %v1226 = vpow.pop %v1225
    %v1227 = vmul.f32 %v1044, 1.442695
    %v1228 = vpow.pop %v1227
    %v1229 = vmul.f32 %v1045, 1.442695
    %v1230 = vpow.pop %v1229
    %v1231 = vmul.f32 %v1046, 1.442695
    %v1232 = vpow.pop %v1231
    %v1233 = vmul.f32 %v1047, 1.442695
    %v1234 = vpow.pop %v1233
    %v1235 = vmul.f32 %v1048, 1.442695
    %v1236 = vpow.pop %v1235
    %v1237 = vmul.f32 %v1049, 1.442695
    %v1238 = vpow.pop %v1237
    %v1239 = vmul.f32 %v1050, 1.442695
    %v1240 = vpow.pop %v1239
    %v1241 = vmul.f32 %v1051, 1.442695
    %v1242 = vpow.pop %v1241
    %v1243 = vmul.f32 %v1052, 1.442695
    %v1244 = vpow.pop %v1243
    %v1245 = vmul.f32 %v1053, 1.442695
    %v1246 = vpow.pop %v1245
    %v1247 = vmul.f32 %v1054, 1.442695
    %v1248 = vpow.pop %v1247
    %v1249 = vmul.f32 %v1055, 1.442695
    %v1250 = vpow.pop %v1249
    %v1251 = vmul.f32 %v1056, 1.442695
    %v1252 = vpow.pop %v1251
    %v1253 = vmul.f32 %v1057, 1.442695
    %v1254 = vpow.pop %v1253
    %v1255 = vmul.f32 %v1058, 1.442695
    %v1256 = vpow.pop %v1255
    %v1257 = vmul.f32 %v1059, 1.442695
    %v1258 = vpow.pop %v1257
    %v1259 = vmul.f32 %v1060, 1.442695
    %v1260 = vpow.pop %v1259
    %v1261 = vmul.f32 %v1061, 1.442695
    %v1262 = vpow.pop %v1261
    %v1263 = vmul.f32 %v1062, 1.442695
    %v1264 = vpow.pop %v1263
    %v1265 = vmul.f32 %v1063, 1.442695
    %v1266 = vpow.pop %v1265
    %v1267 = vmul.f32 %v1064, 1.442695
    %v1268 = vpow.pop %v1267
    %v1269 = vmul.f32 %v1065, 1.442695
    %v1270 = vpow.pop %v1269
    %v1271 = vmul.f32 %v1066, 1.442695
    %v1272 = vpow.pop %v1271
    %v1273 = vmul.f32 %v1067, 1.442695
    %v1274 = vpow.pop %v1273
    %v1275 = vmul.f32 %v1068, 1.442695
    %v1276 = vpow.pop %v1275
    %v1277 = vmul.f32 %v1069, 1.442695
    %v1278 = vpow.pop %v1277
    %v1279 = vmul.f32 %v1070, 1.442695
    %v1280 = vpow.pop %v1279
    %v1281 = vmul.f32 %v1071, 1.442695
    %v1282 = vpow.pop %v1281
    %v1283 = vmul.f32 %v1072, 1.442695
    %v1284 = vpow.pop %v1283
    %v1285 = vmul.f32 %v1073, 1.442695
    %v1286 = vpow.pop %v1285
    %v1287 = vmul.f32 %v1074, 1.442695
    %v1288 = vpow.pop %v1287
    %v1289 = vmul.f32 %v1075, 1.442695
    %v1290 = vpow.pop %v1289
    %v1291 = vmul.f32 %v1076, 1.442695
    %v1292 = vpow.pop %v1291
    %v1293 = vmul.f32 %v1077, 1.442695
    %v1294 = vpow.pop %v1293
    %v1295 = vmul.f32 %v1078, 1.442695
    %v1296 = vpow.pop %v1295
    %v1297 = vmul.f32 %v1079, 1.442695
    %v1298 = vpow.pop %v1297
    %v1299 = vmul.f32 %v1080, 1.442695
    %v1300 = vpow.pop %v1299
    %v1301 = vmul.f32 %v1081, 1.442695
    %v1302 = vpow.pop %v1301
    %v1303 = vmul.f32 %v1082, 1.442695
    %v1304 = vpow.pop %v1303
    %v1305 = vmul.f32 %v1083, 1.442695
    %v1306 = vpow.pop %v1305
    %v1307 = vmul.f32 %v1084, 1.442695
    %v1308 = vpow.pop %v1307
    %v1309 = vmul.f32 %v1085, 1.442695
    %v1310 = vpow.pop %v1309
    %v1311 = vmul.f32 %v1086, 1.442695
    %v1312 = vpow.pop %v1311
    %v1313 = vmul.f32 %v1087, 1.442695
    %v1314 = vpow.pop %v1313
    %v1315 = vmul.f32 %v1088, 1.442695
    %v1316 = vpow.pop %v1315
    %v1317 = vmul.f32 %v1089, 1.442695
    %v1318 = vpow.pop %v1317
    %v1319 = vmul.f32 %v1090, 1.442695
    %v1320 = vpow.pop %v1319
    %v1321 = vmul.f32 %v1091, 1.442695
    %v1322 = vpow.pop %v1321
    %v1323 = vmul.f32 %v1092, 1.442695
    %v1324 = vpow.pop %v1323
    %v1325 = vmul.f32 %v1093, 1.442695
    %v1326 = vpow.pop %v1325
    %v1327 = vmul.f32 %v1094, 1.442695
    %v1328 = vpow.pop %v1327
    %v1329 = vmul.f32 %v1095, 1.442695
    %v1330 = vpow.pop %v1329
    %v1331 = vmul.f32 %v1096, 1.442695
    %v1332 = vpow.pop %v1331
    %v1333 = vmul.f32 %v1097, 1.442695
    %v1334 = vpow.pop %v1333
    %v1335 = vmul.f32 %v1098, 1.442695
    %v1336 = vpow.pop %v1335
    %v1337 = vmul.f32 %v1099, 1.442695
    %v1338 = vpow.pop %v1337
    %v1339 = vmul.f32 %v1100, 1.442695
    %v1340 = vpow.pop %v1339
    %v1341 = vmul.f32 %v1101, 1.442695
    %v1342 = vpow.pop %v1341
    %v1343 = vmul.f32 %v1102, 1.442695
    %v1344 = vpow.pop %v1343
    %v1345 = vmul.f32 %v1103, 1.442695
    %v1346 = vpow.pop %v1345
    %v1347 = vmul.f32 %v1104, 1.442695
    %v1348 = vpow.pop %v1347
    %v1349 = vmul.f32 %v1105, 1.442695
    %v1350 = vpow.pop %v1349
    %v1351 = vmul.f32 %v1106, 1.442695
    %v1352 = vpow.pop %v1351
    %v1353 = vmul.f32 %v1107, 1.442695
    %v1354 = vpow.pop %v1353
    %v1355 = vmul.f32 %v1108, 1.442695
    %v1356 = vpow.pop %v1355
    %v1357 = vmul.f32 %v1109, 1.442695
    %v1358 = vpow.pop %v1357
    %v1359 = vmul.f32 %v1110, 1.442695
    %v1360 = vpow.pop %v1359
    %v1361 = vmul.f32 %v1111, 1.442695
    %v1362 = vpow.pop %v1361
    %v1363 = vmul.f32 %v1112, 1.442695
    %v1364 = vpow.pop %v1363
    %v1365 = vmul.f32 %v1113, 1.442695
    %v1366 = vpow.pop %v1365
    %v1367 = vmul.f32 %v1114, 1.442695
    %v1368 = vpow.pop %v1367
    %v1369 = vmul.f32 %v1115, 1.442695
    %v1370 = vpow.pop %v1369
    %v1371 = vmul.f32 %v1116, 1.442695
    %v1372 = vpow.pop %v1371
    %v1373 = vadd.f32 %v1118, %v1122
    %v1374 = vadd.f32 %v1373, %v1126
    %v1375 = vadd.f32 %v1374, %v1130
    %v1376 = vadd.f32 %v1375, %v1134
    %v1377 = vadd.f32 %v1376, %v1138
    %v1378 = vadd.f32 %v1377, %v1142
    %v1379 = vadd.f32 %v1378, %v1146
    %v1380 = vadd.f32 %v1379, %v1150
    %v1381 = vadd.f32 %v1380, %v1154
    %v1382 = vadd.f32 %v1381, %v1158
    %v1383 = vadd.f32 %v1382, %v1162
    %v1384 = vadd.f32 %v1383, %v1166
    %v1385 = vadd.f32 %v1384, %v1170
    %v1386 = vadd.f32 %v1385, %v1174
    %v1387 = vadd.f32 %v1386, %v1178
    %v1388 = vadd.f32 %v1387, %v1182
    %v1389 = vadd.f32 %v1388, %v1186
    %v1390 = vadd.f32 %v1389, %v1190
    %v1391 = vadd.f32 %v1390, %v1194
    %v1392 = vadd.f32 %v1391, %v1198
    %v1393 = vadd.f32 %v1392, %v1202
    %v1394 = vadd.f32 %v1393, %v1206
    %v1395 = vadd.f32 %v1394, %v1210
    %v1396 = vadd.f32 %v1395, %v1214
    %v1397 = vadd.f32 %v1396, %v1218
    %v1398 = vadd.f32 %v1397, %v1222
    %v1399 = vadd.f32 %v1398, %v1226
    %v1400 = vadd.f32 %v1399, %v1230
    %v1401 = vadd.f32 %v1400, %v1234
    %v1402 = vadd.f32 %v1401, %v1238
    %v1403 = vadd.f32 %v1402, %v1242
    %v1404 = vrot.slane %v1403, 4
    %v1405 = vadd.f32 %v1403, %v1404
    %v1406 = vrot.slane %v1405, 2
    %v1407 = vadd.f32 %v1405, %v1406
    %v1408 = vrot.slane %v1407, 1
    %v1409 = vadd.f32 %v1407, %v1408
    %v1410 = vadd.f32 %v1120, %v1124
    %v1411 = vadd.f32 %v1410, %v1128
    %v1412 = vadd.f32 %v1411, %v1132
    %v1413 = vadd.f32 %v1412, %v1136
    %v1414 = vadd.f32 %v1413, %v1140
    %v1415 = vadd.f32 %v1414, %v1144
    %v1416 = vadd.f32 %v1415, %v1148
    %v1417 = vadd.f32 %v1416, %v1152
    %v1418 = vadd.f32 %v1417, %v1156
    %v1419 = vadd.f32 %v1418, %v1160
    %v1420 = vadd.f32 %v1419, %v1164
    %v1421 = vadd.f32 %v1420, %v1168
    %v1422 = vadd.f32 %v1421, %v1172
    %v1423 = vadd.f32 %v1422, %v1176
    %v1424 = vadd.f32 %v1423, %v1180
    %v1425 = vadd.f32 %v1424, %v1184
    %v1426 = vadd.f32 %v1425, %v1188
    %v1427 = vadd.f32 %v1426, %v1192
    %v1428 = vadd.f32 %v1427, %v1196
    %v1429 = vadd.f32 %v1428, %v1200
    %v1430 = vadd.f32 %v1429, %v1204
    %v1431 = vadd.f32 %v1430, %v1208
    %v1432 = vadd.f32 %v1431, %v1212
    %v1433 = vadd.f32 %v1432, %v1216
    %v1434 = vadd.f32 %v1433, %v1220
    %v1435 = vadd.f32 %v1434, %v1224
    %v1436 = vadd.f32 %v1435, %v1228
    %v1437 = vadd.f32 %v1436, %v1232
    %v1438 = vadd.f32 %v1437, %v1236
    %v1439 = vadd.f32 %v1438, %v1240
    %v1440 = vadd.f32 %v1439, %v1244
    %v1441 = vrot.slane %v1440, 4
    %v1442 = vadd.f32 %v1440, %v1441
    %v1443 = vrot.slane %v1442, 2
    %v1444 = vadd.f32 %v1442, %v1443
    %v1445 = vrot.slane %v1444, 1
    %v1446 = vadd.f32 %v1444, %v1445
    %v1447 = vadd.f32 %v1246, %v1250
    %v1448 = vadd.f32 %v1447, %v1254
    %v1449 = vadd.f32 %v1448, %v1258
    %v1450 = vadd.f32 %v1449, %v1262
    %v1451 = vadd.f32 %v1450, %v1266
    %v1452 = vadd.f32 %v1451, %v1270
    %v1453 = vadd.f32 %v1452, %v1274
    %v1454 = vadd.f32 %v1453, %v1278
    %v1455 = vadd.f32 %v1454, %v1282
    %v1456 = vadd.f32 %v1455, %v1286
    %v1457 = vadd.f32 %v1456, %v1290
    %v1458 = vadd.f32 %v1457, %v1294
    %v1459 = vadd.f32 %v1458, %v1298
    %v1460 = vadd.f32 %v1459, %v1302
    %v1461 = vadd.f32 %v1460, %v1306
    %v1462 = vadd.f32 %v1461, %v1310
    %v1463 = vadd.f32 %v1462, %v1314
    %v1464 = vadd.f32 %v1463, %v1318
    %v1465 = vadd.f32 %v1464, %v1322
    %v1466 = vadd.f32 %v1465, %v1326
    %v1467 = vadd.f32 %v1466, %v1330
    %v1468 = vadd.f32 %v1467, %v1334
    %v1469 = vadd.f32 %v1468, %v1338
    %v1470 = vadd.f32 %v1469, %v1342
    %v1471 = vadd.f32 %v1470, %v1346
    %v1472 = vadd.f32 %v1471, %v1350
    %v1473 = vadd.f32 %v1472, %v1354
    %v1474 = vadd.f32 %v1473, %v1358
    %v1475 = vadd.f32 %v1474, %v1362
    %v1476 = vadd.f32 %v1475, %v1366
    %v1477 = vadd.f32 %v1476, %v1370
    %v1478 = vrot.slane %v1477, 4
    %v1479 = vadd.f32 %v1477, %v1478
    %v1480 = vrot.slane %v1479, 2
    %v1481 = vadd.f32 %v1479, %v1480
    %v1482 = vrot.slane %v1481, 1
    %v1483 = vadd.f32 %v1481, %v1482
    %v1484 = vadd.f32 %v1248, %v1252
    %v1485 = vadd.f32 %v1484, %v1256
    %v1486 = vadd.f32 %v1485, %v1260
    %v1487 = vadd.f32 %v1486, %v1264
    %v1488 = vadd.f32 %v1487, %v1268
    %v1489 = vadd.f32 %v1488, %v1272
    %v1490 = vadd.f32 %v1489, %v1276
    %v1491 = vadd.f32 %v1490, %v1280
    %v1492 = vadd.f32 %v1491, %v1284
    %v1493 = vadd.f32 %v1492, %v1288
    %v1494 = vadd.f32 %v1493, %v1292
    %v1495 = vadd.f32 %v1494, %v1296
    %v1496 = vadd.f32 %v1495, %v1300
    %v1497 = vadd.f32 %v1496, %v1304
    %v1498 = vadd.f32 %v1497, %v1308
    %v1499 = vadd.f32 %v1498, %v1312
    %v1500 = vadd.f32 %v1499, %v1316
    %v1501 = vadd.f32 %v1500, %v1320
    %v1502 = vadd.f32 %v1501, %v1324
    %v1503 = vadd.f32 %v1502, %v1328
    %v1504 = vadd.f32 %v1503, %v1332
    %v1505 = vadd.f32 %v1504, %v1336
    %v1506 = vadd.f32 %v1505, %v1340
    %v1507 = vadd.f32 %v1506, %v1344
    %v1508 = vadd.f32 %v1507, %v1348
    %v1509 = vadd.f32 %v1508, %v1352
    %v1510 = vadd.f32 %v1509, %v1356
    %v1511 = vadd.f32 %v1510, %v1360
    %v1512 = vadd.f32 %v1511, %v1364
    %v1513 = vadd.f32 %v1512, %v1368
    %v1514 = vadd.f32 %v1513, %v1372
    %v1515 = vrot.slane %v1514, 4
    %v1516 = vadd.f32 %v1514, %v1515
    %v1517 = vrot.slane %v1516, 2
    %v1518 = vadd.f32 %v1516, %v1517
    %v1519 = vrot.slane %v1518, 1
    %v1520 = vadd.f32 %v1518, %v1519
    %v1521 = vrcp.pop %v1409
    %v1522 = vrcp.pop %v1446
    %v1523 = vrcp.pop %v1483
    %v1524 = vrcp.pop %v1520
    %v1525 = vmul.f32 %v1118, %v1521
    %v1526 = vmul.f32 %v1120, %v1522
    %v1527 = vmul.f32 %v1122, %v1521
    %v1528 = vmul.f32 %v1124, %v1522
    %v1529 = vmul.f32 %v1126, %v1521
    %v1530 = vmul.f32 %v1128, %v1522
    %v1531 = vmul.f32 %v1130, %v1521
    %v1532 = vmul.f32 %v1132, %v1522
    %v1533 = vmul.f32 %v1134, %v1521
    %v1534 = vmul.f32 %v1136, %v1522
    %v1535 = vmul.f32 %v1138, %v1521
    %v1536 = vmul.f32 %v1140, %v1522
    %v1537 = vmul.f32 %v1142, %v1521
    %v1538 = vmul.f32 %v1144, %v1522
    %v1539 = vmul.f32 %v1146, %v1521
    %v1540 = vmul.f32 %v1148, %v1522
    %v1541 = vmul.f32 %v1150, %v1521
    %v1542 = vmul.f32 %v1152, %v1522
    %v1543 = vmul.f32 %v1154, %v1521
    %v1544 = vmul.f32 %v1156, %v1522
    %v1545 = vmul.f32 %v1158, %v1521
    %v1546 = vmul.f32 %v1160, %v1522
    %v1547 = vmul.f32 %v1162, %v1521
    %v1548 = vmul.f32 %v1164, %v1522
    %v1549 = vmul.f32 %v1166, %v1521
    %v1550 = vmul.f32 %v1168, %v1522
    %v1551 = vmul.f32 %v1170, %v1521
    %v1552 = vmul.f32 %v1172, %v1522
    %v1553 = vmul.f32 %v1174, %v1521
    %v1554 = vmul.f32 %v1176, %v1522
    %v1555 = vmul.f32 %v1178, %v1521
    %v1556 = vmul.f32 %v1180, %v1522
    %v1557 = vmul.f32 %v1182, %v1521
    %v1558 = vmul.f32 %v1184, %v1522
    %v1559 = vmul.f32 %v1186, %v1521
    %v1560 = vmul.f32 %v1188, %v1522
    %v1561 = vmul.f32 %v1190, %v1521
    %v1562 = vmul.f32 %v1192, %v1522
    %v1563 = vmul.f32 %v1194, %v1521
    %v1564 = vmul.f32 %v1196, %v1522
    %v1565 = vmul.f32 %v1198, %v1521
    %v1566 = vmul.f32 %v1200, %v1522
    %v1567 = vmul.f32 %v1202, %v1521
    %v1568 = vmul.f32 %v1204, %v1522
    %v1569 = vmul.f32 %v1206, %v1521
    %v1570 = vmul.f32 %v1208, %v1522
    %v1571 = vmul.f32 %v1210, %v1521
    %v1572 = vmul.f32 %v1212, %v1522
    %v1573 = vmul.f32 %v1214, %v1521
    %v1574 = vmul.f32 %v1216, %v1522
    %v1575 = vmul.f32 %v1218, %v1521
    %v1576 = vmul.f32 %v1220, %v1522
    %v1577 = vmul.f32 %v1222, %v1521
    %v1578 = vmul.f32 %v1224, %v1522
    %v1579 = vmul.f32 %v1226, %v1521
    %v1580 = vmul.f32 %v1228, %v1522
    %v1581 = vmul.f32 %v1230, %v1521
    %v1582 = vmul.f32 %v1232, %v1522
    %v1583 = vmul.f32 %v1234, %v1521
    %v1584 = vmul.f32 %v1236, %v1522
    %v1585 = vmul.f32 %v1238, %v1521
    %v1586 = vmul.f32 %v1240, %v1522
    %v1587 = vmul.f32 %v1242, %v1521
    %v1588 = vmul.f32 %v1244, %v1522
    %v1589 = vmul.f32 %v1246, %v1523
    %v1590 = vmul.f32 %v1248, %v1524
    %v1591 = vmul.f32 %v1250, %v1523
    %v1592 = vmul.f32 %v1252, %v1524
    %v1593 = vmul.f32 %v1254, %v1523
    %v1594 = vmul.f32 %v1256, %v1524
    %v1595 = vmul.f32 %v1258, %v1523
    %v1596 = vmul.f32 %v1260, %v1524
    %v1597 = vmul.f32 %v1262, %v1523
    %v1598 = vmul.f32 %v1264, %v1524
    %v1599 = vmul.f32 %v1266, %v1523
    %v1600 = vmul.f32 %v1268, %v1524
    %v1601 = vmul.f32 %v1270, %v1523
    %v1602 = vmul.f32 %v1272, %v1524
    %v1603 = vmul.f32 %v1274, %v1523
    %v1604 = vmul.f32 %v1276, %v1524
    %v1605 = vmul.f32 %v1278, %v1523
    %v1606 = vmul.f32 %v1280, %v1524
    %v1607 = vmul.f32 %v1282, %v1523
    %v1608 = vmul.f32 %v1284, %v1524
    %v1609 = vmul.f32 %v1286, %v1523
    %v1610 = vmul.f32 %v1288, %v1524
    %v1611 = vmul.f32 %v1290, %v1523
    %v1612 = vmul.f32 %v1292, %v1524
    %v1613 = vmul.f32 %v1294, %v1523
    %v1614 = vmul.f32 %v1296, %v1524
    %v1615 = vmul.f32 %v1298, %v1523
    %v1616 = vmul.f32 %v1300, %v1524
    %v1617 = vmul.f32 %v1302, %v1523
    %v1618 = vmul.f32 %v1304, %v1524
    %v1619 = vmul.f32 %v1306, %v1523
    %v1620 = vmul.f32 %v1308, %v1524
    %v1621 = vmul.f32 %v1310, %v1523
    %v1622 = vmul.f32 %v1312, %v1524
    %v1623 = vmul.f32 %v1314, %v1523
    %v1624 = vmul.f32 %v1316, %v1524
    %v1625 = vmul.f32 %v1318, %v1523
    %v1626 = vmul.f32 %v1320, %v1524
    %v1627 = vmul.f32 %v1322, %v1523
    %v1628 = vmul.f32 %v1324, %v1524
    %v1629 = vmul.f32 %v1326, %v1523
    %v1630 = vmul.f32 %v1328, %v1524
    %v1631 = vmul.f32 %v1330, %v1523
    %v1632 = vmul.f32 %v1332, %v1524
    %v1633 = vmul.f32 %v1334, %v1523
    %v1634 = vmul.f32 %v1336, %v1524
    %v1635 = vmul.f32 %v1338, %v1523
    %v1636 = vmul.f32 %v1340, %v1524
    %v1637 = vmul.f32 %v1342, %v1523
    %v1638 = vmul.f32 %v1344, %v1524
    %v1639 = vmul.f32 %v1346, %v1523
    %v1640 = vmul.f32 %v1348, %v1524
    %v1641 = vmul.f32 %v1350, %v1523
    %v1642 = vmul.f32 %v1352, %v1524
    %v1643 = vmul.f32 %v1354, %v1523
    %v1644 = vmul.f32 %v1356, %v1524
    %v1645 = vmul.f32 %v1358, %v1523
    %v1646 = vmul.f32 %v1360, %v1524
    %v1647 = vmul.f32 %v1362, %v1523
    %v1648 = vmul.f32 %v1364, %v1524
    %v1649 = vmul.f32 %v1366, %v1523
    %v1650 = vmul.f32 %v1368, %v1524
    %v1651 = vmul.f32 %v1370, %v1523
    %v1652 = vmul.f32 %v1372, %v1524
    %1653 = vst [vmem:[#allocation5] sm:$0xff] %v1525
    %1654 = vst [vmem:[#allocation5 + $0x8] sm:$0xff] %v1526
    %1655 = vst [vmem:[#allocation5 + $0x10] sm:$0xff] %v1527
    %1656 = vst [vmem:[#allocation5 + $0x18] sm:$0xff] %v1528
    %1657 = vst [vmem:[#allocation5 + $0x20] sm:$0xff] %v1529
    %1658 = vst [vmem:[#allocation5 + $0x28] sm:$0xff] %v1530
    %1659 = vst [vmem:[#allocation5 + $0x30] sm:$0xff] %v1531
    %1660 = vst [vmem:[#allocation5 + $0x38] sm:$0xff] %v1532
    %1661 = vst [vmem:[#allocation5 + $0x40] sm:$0xff] %v1533
    %1662 = vst [vmem:[#allocation5 + $0x48] sm:$0xff] %v1534
    %1663 = vst [vmem:[#allocation5 + $0x50] sm:$0xff] %v1535
    %1664 = vst [vmem:[#allocation5 + $0x58] sm:$0xff] %v1536
    %1665 = vst [vmem:[#allocation5 + $0x60] sm:$0xff] %v1537
    %1666 = vst [vmem:[#allocation5 + $0x68] sm:$0xff] %v1538
    %1667 = vst [vmem:[#allocation5 + $0x70] sm:$0xff] %v1539
    %1668 = vst [vmem:[#allocation5 + $0x78] sm:$0xff] %v1540
    %1669 = vst [vmem:[#allocation5 + $0x80] sm:$0xff] %v1541
    %1670 = vst [vmem:[#allocation5 + $0x88] sm:$0xff] %v1542
    %1671 = vst [vmem:[#allocation5 + $0x90] sm:$0xff] %v1543
    %1672 = vst [vmem:[#allocation5 + $0x98] sm:$0xff] %v1544
    %1673 = vst [vmem:[#allocation5 + $0xa0] sm:$0xff] %v1545
    %1674 = vst [vmem:[#allocation5 + $0xa8] sm:$0xff] %v1546
    %1675 = vst [vmem:[#allocation5 + $0xb0] sm:$0xff] %v1547
    %1676 = vst [vmem:[#allocation5 + $0xb8] sm:$0xff] %v1548
    %1677 = vst [vmem:[#allocation5 + $0xc0] sm:$0xff] %v1549
    %1678 = vst [vmem:[#allocation5 + $0xc8] sm:$0xff] %v1550
    %1679 = vst [vmem:[#allocation5 + $0xd0] sm:$0xff] %v1551
    %1680 = vst [vmem:[#allocation5 + $0xd8] sm:$0xff] %v1552
    %1681 = vst [vmem:[#allocation5 + $0xe0] sm:$0xff] %v1553
    %1682 = vst [vmem:[#allocation5 + $0xe8] sm:$0xff] %v1554
    %1683 = vst [vmem:[#allocation5 + $0xf0] sm:$0xff] %v1555
    %1684 = vst [vmem:[#allocation5 + $0xf8] sm:$0xff] %v1556
    %1685 = vst [vmem:[#allocation5 + $0x100] sm:$0xff] %v1557
    %1686 = vst [vmem:[#allocation5 + $0x108] sm:$0xff] %v1558
    %1687 = vst [vmem:[#allocation5 + $0x110] sm:$0xff] %v1559
    %1688 = vst [vmem:[#allocation5 + $0x118] sm:$0xff] %v1560
    %1689 = vst [vmem:[#allocation5 + $0x120] sm:$0xff] %v1561
    %1690 = vst [vmem:[#allocation5 + $0x128] sm:$0xff] %v1562
    %1691 = vst [vmem:[#allocation5 + $0x130] sm:$0xff] %v1563
    %1692 = vst [vmem:[#allocation5 + $0x138] sm:$0xff] %v1564
    %1693 = vst [vmem:[#allocation5 + $0x140] sm:$0xff] %v1565
    %1694 = vst [vmem:[#allocation5 + $0x148] sm:$0xff] %v1566
    %1695 = vst [vmem:[#allocation5 + $0x150] sm:$0xff] %v1567
    %1696 = vst [vmem:[#allocation5 + $0x158] sm:$0xff] %v1568
    %1697 = vst [vmem:[#allocation5 + $0x160] sm:$0xff] %v1569
    %1698 = vst [vmem:[#allocation5 + $0x168] sm:$0xff] %v1570
    %1699 = vst [vmem:[#allocation5 + $0x170] sm:$0xff] %v1571
    %1700 = vst [vmem:[#allocation5 + $0x178] sm:$0xff] %v1572
    %1701 = vst [vmem:[#allocation5 + $0x180] sm:$0xff] %v1573
    %1702 = vst [vmem:[#allocation5 + $0x188] sm:$0xff] %v1574
    %1703 = vst [vmem:[#allocation5 + $0x190] sm:$0xff] %v1575
    %1704 = vst [vmem:[#allocation5 + $0x198] sm:$0xff] %v1576
    %1705 = vst [vmem:[#allocation5 + $0x1a0] sm:$0xff] %v1577
    %1706 = vst [vmem:[#allocation5 + $0x1a8] sm:$0xff] %v1578
    %1707 = vst [vmem:[#allocation5 + $0x1b0] sm:$0xff] %v1579
    %1708 = vst [vmem:[#allocation5 + $0x1b8] sm:$0xff] %v1580
    %1709 = vst [vmem:[#allocation5 + $0x1c0] sm:$0xff] %v1581
    %1710 = vst [vmem:[#allocation5 + $0x1c8] sm:$0xff] %v1582
    %1711 = vst [vmem:[#allocation5 + $0x1d0] sm:$0xff] %v1583
    %1712 = vst [vmem:[#allocation5 + $0x1d8] sm:$0xff] %v1584
    %1713 = vst [vmem:[#allocation5 + $0x1e0] sm:$0xff] %v1585
    %1714 = vst [vmem:[#allocation5 + $0x1e8] sm:$0xff] %v1586
    %1715 = vst [vmem:[#allocation5 + $0x1f0] sm:$0xff] %v1587
    %1716 = vst [vmem:[#allocation5 + $0x1f8] sm:$0xff] %v1588
    %1717 = vst [vmem:[#allocation5 + $0x200] sm:$0xff] %v1589
    %1718 = vst [vmem:[#allocation5 + $0x208] sm:$0xff] %v1590
    %1719 = vst [vmem:[#allocation5 + $0x210] sm:$0xff] %v1591
    %1720 = vst [vmem:[#allocation5 + $0x218] sm:$0xff] %v1592
    %1721 = vst [vmem:[#allocation5 + $0x220] sm:$0xff] %v1593
    %1722 = vst [vmem:[#allocation5 + $0x228] sm:$0xff] %v1594
    %1723 = vst [vmem:[#allocation5 + $0x230] sm:$0xff] %v1595
    %1724 = vst [vmem:[#allocation5 + $0x238] sm:$0xff] %v1596
    %1725 = vst [vmem:[#allocation5 + $0x240] sm:$0xff] %v1597
    %1726 = vst [vmem:[#allocation5 + $0x248] sm:$0xff] %v1598
    %1727 = vst [vmem:[#allocation5 + $0x250] sm:$0xff] %v1599
    %1728 = vst [vmem:[#allocation5 + $0x258] sm:$0xff] %v1600
    %1729 = vst [vmem:[#allocation5 + $0x260] sm:$0xff] %v1601
    %1730 = vst [vmem:[#allocation5 + $0x268] sm:$0xff] %v1602
    %1731 = vst [vmem:[#allocation5 + $0x270] sm:$0xff] %v1603
    %1732 = vst [vmem:[#allocation5 + $0x278] sm:$0xff] %v1604
    %1733 = vst [vmem:[#allocation5 + $0x280] sm:$0xff] %v1605
    %1734 = vst [vmem:[#allocation5 + $0x288] sm:$0xff] %v1606
    %1735 = vst [vmem:[#allocation5 + $0x290] sm:$0xff] %v1607
    %1736 = vst [vmem:[#allocation5 + $0x298] sm:$0xff] %v1608
    %1737 = vst [vmem:[#allocation5 + $0x2a0] sm:$0xff] %v1609
    %1738 = vst [vmem:[#allocation5 + $0x2a8] sm:$0xff] %v1610
    %1739 = vst [vmem:[#allocation5 + $0x2b0] sm:$0xff] %v1611
    %1740 = vst [vmem:[#allocation5 + $0x2b8] sm:$0xff] %v1612
    %1741 = vst [vmem:[#allocation5 + $0x2c0] sm:$0xff] %v1613
    %1742 = vst [vmem:[#allocation5 + $0x2c8] sm:$0xff] %v1614
    %1743 = vst [vmem:[#allocation5 + $0x2d0] sm:$0xff] %v1615
    %1744 = vst [vmem:[#allocation5 + $0x2d8] sm:$0xff] %v1616
    %1745 = vst [vmem:[#allocation5 + $0x2e0] sm:$0xff] %v1617
    %1746 = vst [vmem:[#allocation5 + $0x2e8] sm:$0xff] %v1618
    %1747 = vst [vmem:[#allocation5 + $0x2f0] sm:$0xff] %v1619
    %1748 = vst [vmem:[#allocation5 + $0x2f8] sm:$0xff] %v1620
    %1749 = vst [vmem:[#allocation5 + $0x300] sm:$0xff] %v1621
    %1750 = vst [vmem:[#allocation5 + $0x308] sm:$0xff] %v1622
    %1751 = vst [vmem:[#allocation5 + $0x310] sm:$0xff] %v1623
    %1752 = vst [vmem:[#allocation5 + $0x318] sm:$0xff] %v1624
    %1753 = vst [vmem:[#allocation5 + $0x320] sm:$0xff] %v1625
    %1754 = vst [vmem:[#allocation5 + $0x328] sm:$0xff] %v1626
    %1755 = vst [vmem:[#allocation5 + $0x330] sm:$0xff] %v1627
    %1756 = vst [vmem:[#allocation5 + $0x338] sm:$0xff] %v1628
    %1757 = vst [vmem:[#allocation5 + $0x340] sm:$0xff] %v1629
    %1758 = vst [vmem:[#allocation5 + $0x348] sm:$0xff] %v1630
    %1759 = vst [vmem:[#allocation5 + $0x350] sm:$0xff] %v1631
    %1760 = vst [vmem:[#allocation5 + $0x358] sm:$0xff] %v1632
    %1761 = vst [vmem:[#allocation5 + $0x360] sm:$0xff] %v1633
    %1762 = vst [vmem:[#allocation5 + $0x368] sm:$0xff] %v1634
    %1763 = vst [vmem:[#allocation5 + $0x370] sm:$0xff] %v1635
    %1764 = vst [vmem:[#allocation5 + $0x378] sm:$0xff] %v1636
    %1765 = vst [vmem:[#allocation5 + $0x380] sm:$0xff] %v1637
    %1766 = vst [vmem:[#allocation5 + $0x388] sm:$0xff] %v1638
    %1767 = vst [vmem:[#allocation5 + $0x390] sm:$0xff] %v1639
    %1768 = vst [vmem:[#allocation5 + $0x398] sm:$0xff] %v1640
    %1769 = vst [vmem:[#allocation5 + $0x3a0] sm:$0xff] %v1641
    %1770 = vst [vmem:[#allocation5 + $0x3a8] sm:$0xff] %v1642
    %1771 = vst [vmem:[#allocation5 + $0x3b0] sm:$0xff] %v1643
    %1772 = vst [vmem:[#allocation5 + $0x3b8] sm:$0xff] %v1644
    %1773 = vst [vmem:[#allocation5 + $0x3c0] sm:$0xff] %v1645
    %1774 = vst [vmem:[#allocation5 + $0x3c8] sm:$0xff] %v1646
    %1775 = vst [vmem:[#allocation5 + $0x3d0] sm:$0xff] %v1647
    %1776 = vst [vmem:[#allocation5 + $0x3d8] sm:$0xff] %v1648
    %1777 = vst [vmem:[#allocation5 + $0x3e0] sm:$0xff] %v1649
    %1778 = vst [vmem:[#allocation5 + $0x3e8] sm:$0xff] %v1650
    %1779 = vst [vmem:[#allocation5 + $0x3f0] sm:$0xff] %v1651
    %1780 = vst [vmem:[#allocation5 + $0x3f8] sm:$0xff] %v1652
    %v1781 = vadd.f32 %v1525, 0.0001
    %v1782 = vadd.f32 %v1526, 0.0001
    %v1783 = vadd.f32 %v1527, 0.0001
    %v1784 = vadd.f32 %v1528, 0.0001
    %v1785 = vadd.f32 %v1529, 0.0001
    %v1786 = vadd.f32 %v1530, 0.0001
    %v1787 = vadd.f32 %v1531, 0.0001
    %v1788 = vadd.f32 %v1532, 0.0001
    %v1789 = vadd.f32 %v1533, 0.0001
    %v1790 = vadd.f32 %v1534, 0.0001
    %v1791 = vadd.f32 %v1535, 0.0001
    %v1792 = vadd.f32 %v1536, 0.0001
    %v1793 = vadd.f32 %v1537, 0.0001
    %v1794 = vadd.f32 %v1538, 0.0001
    %v1795 = vadd.f32 %v1539, 0.0001
    %v1796 = vadd.f32 %v1540, 0.0001
    %v1797 = vadd.f32 %v1541, 0.0001
    %v1798 = vadd.f32 %v1542, 0.0001
    %v1799 = vadd.f32 %v1543, 0.0001
    %v1800 = vadd.f32 %v1544, 0.0001
    %v1801 = vadd.f32 %v1545, 0.0001
    %v1802 = vadd.f32 %v1546, 0.0001
    %v1803 = vadd.f32 %v1547, 0.0001
    %v1804 = vadd.f32 %v1548, 0.0001
    %v1805 = vadd.f32 %v1549, 0.0001
    %v1806 = vadd.f32 %v1550, 0.0001
    %v1807 = vadd.f32 %v1551, 0.0001
    %v1808 = vadd.f32 %v1552, 0.0001
    %v1809 = vadd.f32 %v1553, 0.0001
    %v1810 = vadd.f32 %v1554, 0.0001
    %v1811 = vadd.f32 %v1555, 0.0001
    %v1812 = vadd.f32 %v1556, 0.0001
    %v1813 = vadd.f32 %v1557, 0.0001
    %v1814 = vadd.f32 %v1558, 0.0001
    %v1815 = vadd.f32 %v1559, 0.0001
    %v1816 = vadd.f32 %v1560, 0.0001
    %v1817 = vadd.f32 %v1561, 0.0001
    %v1818 = vadd.f32 %v1562, 0.0001
    %v1819 = vadd.f32 %v1563, 0.0001
    %v1820 = vadd.f32 %v1564, 0.0001
    %v1821 = vadd.f32 %v1565, 0.0001
    %v1822 = vadd.f32 %v1566, 0.0001
    %v1823 = vadd.f32 %v1567, 0.0001
    %v1824 = vadd.f32 %v1568, 0.0001
    %v1825 = vadd.f32 %v1569, 0.0001
    %v1826 = vadd.f32 %v1570, 0.0001
    %v1827 = vadd.f32 %v1571, 0.0001
    %v1828 = vadd.f32 %v1572, 0.0001
    %v1829 = vadd.f32 %v1573, 0.0001
    %v1830 = vadd.f32 %v1574, 0.0001
    %v1831 = vadd.f32 %v1575, 0.0001
    %v1832 = vadd.f32 %v1576, 0.0001
    %v1833 = vadd.f32 %v1577, 0.0001
    %v1834 = vadd.f32 %v1578, 0.0001
    %v1835 = vadd.f32 %v1579, 0.0001
    %v1836 = vadd.f32 %v1580, 0.0001
    %v1837 = vadd.f32 %v1581, 0.0001
    %v1838 = vadd.f32 %v1582, 0.0001
    %v1839 = vadd.f32 %v1583, 0.0001
    %v1840 = vadd.f32 %v1584, 0.0001
    %v1841 = vadd.f32 %v1585, 0.0001
    %v1842 = vadd.f32 %v1586, 0.0001
    %v1843 = vadd.f32 %v1587, 0.0001
    %v1844 = vadd.f32 %v1588, 0.0001
    %v1845 = vadd.f32 %v1589, 0.0001
    %v1846 = vadd.f32 %v1590, 0.0001
    %v1847 = vadd.f32 %v1591, 0.0001
    %v1848 = vadd.f32 %v1592, 0.0001
    %v1849 = vadd.f32 %v1593, 0.0001
    %v1850 = vadd.f32 %v1594, 0.0001
    %v1851 = vadd.f32 %v1595, 0.0001
    %v1852 = vadd.f32 %v1596, 0.0001
    %v1853 = vadd.f32 %v1597, 0.0001
    %v1854 = vadd.f32 %v1598, 0.0001
    %v1855 = vadd.f32 %v1599, 0.0001
    %v1856 = vadd.f32 %v1600, 0.0001
    %v1857 = vadd.f32 %v1601, 0.0001
    %v1858 = vadd.f32 %v1602, 0.0001
    %v1859 = vadd.f32 %v1603, 0.0001
    %v1860 = vadd.f32 %v1604, 0.0001
    %v1861 = vadd.f32 %v1605, 0.0001
    %v1862 = vadd.f32 %v1606, 0.0001
    %v1863 = vadd.f32 %v1607, 0.0001
    %v1864 = vadd.f32 %v1608, 0.0001
    %v1865 = vadd.f32 %v1609, 0.0001
    %v1866 = vadd.f32 %v1610, 0.0001
    %v1867 = vadd.f32 %v1611, 0.0001
    %v1868 = vadd.f32 %v1612, 0.0001
    %v1869 = vadd.f32 %v1613, 0.0001
    %v1870 = vadd.f32 %v1614, 0.0001
    %v1871 = vadd.f32 %v1615, 0.0001
    %v1872 = vadd.f32 %v1616, 0.0001
    %v1873 = vadd.f32 %v1617, 0.0001
    %v1874 = vadd.f32 %v1618, 0.0001
    %v1875 = vadd.f32 %v1619, 0.0001
    %v1876 = vadd.f32 %v1620, 0.0001
    %v1877 = vadd.f32 %v1621, 0.0001
    %v1878 = vadd.f32 %v1622, 0.0001
    %v1879 = vadd.f32 %v1623, 0.0001
    %v1880 = vadd.f32 %v1624, 0.0001
    %v1881 = vadd.f32 %v1625, 0.0001
    %v1882 = vadd.f32 %v1626, 0.0001
    %v1883 = vadd.f32 %v1627, 0.0001
    %v1884 = vadd.f32 %v1628, 0.0001
    %v1885 = vadd.f32 %v1629, 0.0001
    %v1886 = vadd.f32 %v1630, 0.0001
    %v1887 = vadd.f32 %v1631, 0.0001
    %v1888 = vadd.f32 %v1632, 0.0001
    %v1889 = vadd.f32 %v1633, 0.0001
    %v1890 = vadd.f32 %v1634, 0.0001
    %v1891 = vadd.f32 %v1635, 0.0001
    %v1892 = vadd.f32 %v1636, 0.0001
    %v1893 = vadd.f32 %v1637, 0.0001
    %v1894 = vadd.f32 %v1638, 0.0001
    %v1895 = vadd.f32 %v1639, 0.0001
    %v1896 = vadd.f32 %v1640, 0.0001
    %v1897 = vadd.f32 %v1641, 0.0001
    %v1898 = vadd.f32 %v1642, 0.0001
    %v1899 = vadd.f32 %v1643, 0.0001
    %v1900 = vadd.f32 %v1644, 0.0001
    %v1901 = vadd.f32 %v1645, 0.0001
    %v1902 = vadd.f32 %v1646, 0.0001
    %v1903 = vadd.f32 %v1647, 0.0001
    %v1904 = vadd.f32 %v1648, 0.0001
    %v1905 = vadd.f32 %v1649, 0.0001
    %v1906 = vadd.f32 %v1650, 0.0001
    %v1907 = vadd.f32 %v1651, 0.0001
    %v1908 = vadd.f32 %v1652, 0.0001
    %v1909 = vlog2.pop %v1781
    %v1910 = vmul.f32 %v1909, 0.6931472
    %v1911 = vlog2.pop %v1782
    %v1912 = vmul.f32 %v1911, 0.6931472
    %v1913 = vlog2.pop %v1783
    %v1914 = vmul.f32 %v1913, 0.6931472
    %v1915 = vlog2.pop %v1784
    %v1916 = vmul.f32 %v1915, 0.6931472
    %v1917 = vlog2.pop %v1785
    %v1918 = vmul.f32 %v1917, 0.6931472
    %v1919 = vlog2.pop %v1786
    %v1920 = vmul.f32 %v1919, 0.6931472
    %v1921 = vlog2.pop %v1787
    %v1922 = vmul.f32 %v1921, 0.6931472
    %v1923 = vlog2.pop %v1788
    %v1924 = vmul.f32 %v1923, 0.6931472
    %v1925 = vlog2.pop %v1789
    %v1926 = vmul.f32 %v1925, 0.6931472
    %v1927 = vlog2.pop %v1790
    %v1928 = vmul.f32 %v1927, 0.6931472
    %v1929 = vlog2.pop %v1791
    %v1930 = vmul.f32 %v1929, 0.6931472
    %v1931 = vlog2.pop %v1792
    %v1932 = vmul.f32 %v1931, 0.6931472
    %v1933 = vlog2.pop %v1793
    %v1934 = vmul.f32 %v1933, 0.6931472
    %v1935 = vlog2.pop %v1794
    %v1936 = vmul.f32 %v1935, 0.6931472
    %v1937 = vlog2.pop %v1795
    %v1938 = vmul.f32 %v1937, 0.6931472
    %v1939 = vlog2.pop %v1796
    %v1940 = vmul.f32 %v1939, 0.6931472
    %v1941 = vlog2.pop %v1797
    %v1942 = vmul.f32 %v1941, 0.6931472
    %v1943 = vlog2.pop %v1798
    %v1944 = vmul.f32 %v1943, 0.6931472
    %v1945 = vlog2.pop %v1799
    %v1946 = vmul.f32 %v1945, 0.6931472
    %v1947 = vlog2.pop %v1800
    %v1948 = vmul.f32 %v1947, 0.6931472
    %v1949 = vlog2.pop %v1801
    %v1950 = vmul.f32 %v1949, 0.6931472
    %v1951 = vlog2.pop %v1802
    %v1952 = vmul.f32 %v1951, 0.6931472
    %v1953 = vlog2.pop %v1803
    %v1954 = vmul.f32 %v1953, 0.6931472
    %v1955 = vlog2.pop %v1804
    %v1956 = vmul.f32 %v1955, 0.6931472
    %v1957 = vlog2.pop %v1805
    %v1958 = vmul.f32 %v1957, 0.6931472
    %v1959 = vlog2.pop %v1806
    %v1960 = vmul.f32 %v1959, 0.6931472
    %v1961 = vlog2.pop %v1807
    %v1962 = vmul.f32 %v1961, 0.6931472
    %v1963 = vlog2.pop %v1808
    %v1964 = vmul.f32 %v1963, 0.6931472
    %v1965 = vlog2.pop %v1809
    %v1966 = vmul.f32 %v1965, 0.6931472
    %v1967 = vlog2.pop %v1810
    %v1968 = vmul.f32 %v1967, 0.6931472
    %v1969 = vlog2.pop %v1811
    %v1970 = vmul.f32 %v1969, 0.6931472
    %v1971 = vlog2.pop %v1812
    %v1972 = vmul.f32 %v1971, 0.6931472
    %v1973 = vlog2.pop %v1813
    %v1974 = vmul.f32 %v1973, 0.6931472
    %v1975 = vlog2.pop %v1814
    %v1976 = vmul.f32 %v1975, 0.6931472
    %v1977 = vlog2.pop %v1815
    %v1978 = vmul.f32 %v1977, 0.6931472
    %v1979 = vlog2.pop %v1816
    %v1980 = vmul.f32 %v1979, 0.6931472
    %v1981 = vlog2.pop %v1817
    %v1982 = vmul.f32 %v1981, 0.6931472
    %v1983 = vlog2.pop %v1818
    %v1984 = vmul.f32 %v1983, 0.6931472
    %v1985 = vlog2.pop %v1819
    %v1986 = vmul.f32 %v1985, 0.6931472
    %v1987 = vlog2.pop %v1820
    %v1988 = vmul.f32 %v1987, 0.6931472
    %v1989 = vlog2.pop %v1821
    %v1990 = vmul.f32 %v1989, 0.6931472
    %v1991 = vlog2.pop %v1822
    %v1992 = vmul.f32 %v1991, 0.6931472
    %v1993 = vlog2.pop %v1823
    %v1994 = vmul.f32 %v1993, 0.6931472
    %v1995 = vlog2.pop %v1824
    %v1996 = vmul.f32 %v1995, 0.6931472
    %v1997 = vlog2.pop %v1825
    %v1998 = vmul.f32 %v1997, 0.6931472
    %v1999 = vlog2.pop %v1826
    %v2000 = vmul.f32 %v1999, 0.6931472
    %v2001 = vlog2.pop %v1827
    %v2002 = vmul.f32 %v2001, 0.6931472
    %v2003 = vlog2.pop %v1828
    %v2004 = vmul.f32 %v2003, 0.6931472
    %v2005 = vlog2.pop %v1829
    %v2006 = vmul.f32 %v2005, 0.6931472
    %v2007 = vlog2.pop %v1830
    %v2008 = vmul.f32 %v2007, 0.6931472
    %v2009 = vlog2.pop %v1831
    %v2010 = vmul.f32 %v2009, 0.6931472
    %v2011 = vlog2.pop %v1832
    %v2012 = vmul.f32 %v2011, 0.6931472
    %v2013 = vlog2.pop %v1833
    %v2014 = vmul.f32 %v2013, 0.6931472
    %v2015 = vlog2.pop %v1834
    %v2016 = vmul.f32 %v2015, 0.6931472
    %v2017 = vlog2.pop %v1835
    %v2018 = vmul.f32 %v2017, 0.6931472
    %v2019 = vlog2.pop %v1836
    %v2020 = vmul.f32 %v2019, 0.6931472
    %v2021 = vlog2.pop %v1837
    %v2022 = vmul.f32 %v2021, 0.6931472
    %v2023 = vlog2.pop %v1838
    %v2024 = vmul.f32 %v2023, 0.6931472
    %v2025 = vlog2.pop %v1839
    %v2026 = vmul.f32 %v2025, 0.6931472
    %v2027 = vlog2.pop %v1840
    %v2028 = vmul.f32 %v2027, 0.6931472
    %v2029 = vlog2.pop %v1841
    %v2030 = vmul.f32 %v2029, 0.6931472
    %v2031 = vlog2.pop %v1842
    %v2032 = vmul.f32 %v2031, 0.6931472
    %v2033 = vlog2.pop %v1843
    %v2034 = vmul.f32 %v2033, 0.6931472
    %v2035 = vlog2.pop %v1844
    %v2036 = vmul.f32 %v2035, 0.6931472
    %v2037 = vlog2.pop %v1845
    %v2038 = vmul.f32 %v2037, 0.6931472
    %v2039 = vlog2.pop %v1846
    %v2040 = vmul.f32 %v2039, 0.6931472
    %v2041 = vlog2.pop %v1847
    %v2042 = vmul.f32 %v2041, 0.6931472
    %v2043 = vlog2.pop %v1848
    %v2044 = vmul.f32 %v2043, 0.6931472
    %v2045 = vlog2.pop %v1849
    %v2046 = vmul.f32 %v2045, 0.6931472
    %v2047 = vlog2.pop %v1850
    %v2048 = vmul.f32 %v2047, 0.6931472
    %v2049 = vlog2.pop %v1851
    %v2050 = vmul.f32 %v2049, 0.6931472
    %v2051 = vlog2.pop %v1852
    %v2052 = vmul.f32 %v2051, 0.6931472
    %v2053 = vlog2.pop %v1853
    %v2054 = vmul.f32 %v2053, 0.6931472
    %v2055 = vlog2.pop %v1854
    %v2056 = vmul.f32 %v2055, 0.6931472
    %v2057 = vlog2.pop %v1855
    %v2058 = vmul.f32 %v2057, 0.6931472
    %v2059 = vlog2.pop %v1856
    %v2060 = vmul.f32 %v2059, 0.6931472
    %v2061 = vlog2.pop %v1857
    %v2062 = vmul.f32 %v2061, 0.6931472
    %v2063 = vlog2.pop %v1858
    %v2064 = vmul.f32 %v2063, 0.6931472
    %v2065 = vlog2.pop %v1859
    %v2066 = vmul.f32 %v2065, 0.6931472
    %v2067 = vlog2.pop %v1860
    %v2068 = vmul.f32 %v2067, 0.6931472
    %v2069 = vlog2.pop %v1861
    %v2070 = vmul.f32 %v2069, 0.6931472
    %v2071 = vlog2.pop %v1862
    %v2072 = vmul.f32 %v2071, 0.6931472
    %v2073 = vlog2.pop %v1863
    %v2074 = vmul.f32 %v2073, 0.6931472
    %v2075 = vlog2.pop %v1864
    %v2076 = vmul.f32 %v2075, 0.6931472
    %v2077 = vlog2.pop %v1865
    %v2078 = vmul.f32 %v2077, 0.6931472
    %v2079 = vlog2.pop %v1866
    %v2080 = vmul.f32 %v2079, 0.6931472
    %v2081 = vlog2.pop %v1867
    %v2082 = vmul.f32 %v2081, 0.6931472
    %v2083 = vlog2.pop %v1868
    %v2084 = vmul.f32 %v2083, 0.6931472
    %v2085 = vlog2.pop %v1869
    %v2086 = vmul.f32 %v2085, 0.6931472
    %v2087 = vlog2.pop %v1870
    %v2088 = vmul.f32 %v2087, 0.6931472
    %v2089 = vlog2.pop %v1871
    %v2090 = vmul.f32 %v2089, 0.6931472
    %v2091 = vlog2.pop %v1872
    %v2092 = vmul.f32 %v2091, 0.6931472
    %v2093 = vlog2.pop %v1873
    %v2094 = vmul.f32 %v2093, 0.6931472
    %v2095 = vlog2.pop %v1874
    %v2096 = vmul.f32 %v2095, 0.6931472
    %v2097 = vlog2.pop %v1875
    %v2098 = vmul.f32 %v2097, 0.6931472
    %v2099 = vlog2.pop %v1876
    %v2100 = vmul.f32 %v2099, 0.6931472
    %v2101 = vlog2.pop %v1877
    %v2102 = vmul.f32 %v2101, 0.6931472
    %v2103 = vlog2.pop %v1878
    %v2104 = vmul.f32 %v2103, 0.6931472
    %v2105 = vlog2.pop %v1879
    %v2106 = vmul.f32 %v2105, 0.6931472
    %v2107 = vlog2.pop %v1880
    %v2108 = vmul.f32 %v2107, 0.6931472
    %v2109 = vlog2.pop %v1881
    %v2110 = vmul.f32 %v2109, 0.6931472
    %v2111 = vlog2.pop %v1882
    %v2112 = vmul.f32 %v2111, 0.6931472
    %v2113 = vlog2.pop %v1883
    %v2114 = vmul.f32 %v2113, 0.6931472
    %v2115 = vlog2.pop %v1884
    %v2116 = vmul.f32 %v2115, 0.6931472
    %v2117 = vlog2.pop %v1885
    %v2118 = vmul.f32 %v2117, 0.6931472
    %v2119 = vlog2.pop %v1886
    %v2120 = vmul.f32 %v2119, 0.6931472
    %v2121 = vlog2.pop %v1887
    %v2122 = vmul.f32 %v2121, 0.6931472
    %v2123 = vlog2.pop %v1888
    %v2124 = vmul.f32 %v2123, 0.6931472
    %v2125 = vlog2.pop %v1889
    %v2126 = vmul.f32 %v2125, 0.6931472
    %v2127 = vlog2.pop %v1890
    %v2128 = vmul.f32 %v2127, 0.6931472
    %v2129 = vlog2.pop %v1891
    %v2130 = vmul.f32 %v2129, 0.6931472
    %v2131 = vlog2.pop %v1892
    %v2132 = vmul.f32 %v2131, 0.6931472
    %v2133 = vlog2.pop %v1893
    %v2134 = vmul.f32 %v2133, 0.6931472
    %v2135 = vlog2.pop %v1894
    %v2136 = vmul.f32 %v2135, 0.6931472
    %v2137 = vlog2.pop %v1895
    %v2138 = vmul.f32 %v2137, 0.6931472
    %v2139 = vlog2.pop %v1896
    %v2140 = vmul.f32 %v2139, 0.6931472
    %v2141 = vlog2.pop %v1897
    %v2142 = vmul.f32 %v2141, 0.6931472
    %v2143 = vlog2.pop %v1898
    %v2144 = vmul.f32 %v2143, 0.6931472
    %v2145 = vlog2.pop %v1899
    %v2146 = vmul.f32 %v2145, 0.6931472
    %v2147 = vlog2.pop %v1900
    %v2148 = vmul.f32 %v2147, 0.6931472
    %v2149 = vlog2.pop %v1901
    %v2150 = vmul.f32 %v2149, 0.6931472
    %v2151 = vlog2.pop %v1902
    %v2152 = vmul.f32 %v2151, 0.6931472
    %v2153 = vlog2.pop %v1903
    %v2154 = vmul.f32 %v2153, 0.6931472
    %v2155 = vlog2.pop %v1904
    %v2156 = vmul.f32 %v2155, 0.6931472
    %v2157 = vlog2.pop %v1905
    %v2158 = vmul.f32 %v2157, 0.6931472
    %v2159 = vlog2.pop %v1906
    %v2160 = vmul.f32 %v2159, 0.6931472
    %v2161 = vlog2.pop %v1907
    %v2162 = vmul.f32 %v2161, 0.6931472
    %v2163 = vlog2.pop %v1908
    %v2164 = vmul.f32 %v2163, 0.6931472
    %v2165 = vmul.f32 %v1525, %v1910
    %v2166 = vmul.f32 %v1526, %v1912
    %v2167 = vmul.f32 %v1527, %v1914
    %v2168 = vmul.f32 %v1528, %v1916
    %v2169 = vmul.f32 %v1529, %v1918
    %v2170 = vmul.f32 %v1530, %v1920
    %v2171 = vmul.f32 %v1531, %v1922
    %v2172 = vmul.f32 %v1532, %v1924
    %v2173 = vmul.f32 %v1533, %v1926
    %v2174 = vmul.f32 %v1534, %v1928
    %v2175 = vmul.f32 %v1535, %v1930
    %v2176 = vmul.f32 %v1536, %v1932
    %v2177 = vmul.f32 %v1537, %v1934
    %v2178 = vmul.f32 %v1538, %v1936
    %v2179 = vmul.f32 %v1539, %v1938
    %v2180 = vmul.f32 %v1540, %v1940
    %v2181 = vmul.f32 %v1541, %v1942
    %v2182 = vmul.f32 %v1542, %v1944
    %v2183 = vmul.f32 %v1543, %v1946
    %v2184 = vmul.f32 %v1544, %v1948
    %v2185 = vmul.f32 %v1545, %v1950
    %v2186 = vmul.f32 %v1546, %v1952
    %v2187 = vmul.f32 %v1547, %v1954
    %v2188 = vmul.f32 %v1548, %v1956
    %v2189 = vmul.f32 %v1549, %v1958
    %v2190 = vmul.f32 %v1550, %v1960
    %v2191 = vmul.f32 %v1551, %v1962
    %v2192 = vmul.f32 %v1552, %v1964
    %v2193 = vmul.f32 %v1553, %v1966
    %v2194 = vmul.f32 %v1554, %v1968
    %v2195 = vmul.f32 %v1555, %v1970
    %v2196 = vmul.f32 %v1556, %v1972
    %v2197 = vmul.f32 %v1557, %v1974
    %v2198 = vmul.f32 %v1558, %v1976
    %v2199 = vmul.f32 %v1559, %v1978
    %v2200 = vmul.f32 %v1560, %v1980
    %v2201 = vmul.f32 %v1561, %v1982
    %v2202 = vmul.f32 %v1562, %v1984
    %v2203 = vmul.f32 %v1563, %v1986
    %v2204 = vmul.f32 %v1564, %v1988
    %v2205 = vmul.f32 %v1565, %v1990
    %v2206 = vmul.f32 %v1566, %v1992
    %v2207 = vmul.f32 %v1567, %v1994
    %v2208 = vmul.f32 %v1568, %v1996
    %v2209 = vmul.f32 %v1569, %v1998
    %v2210 = vmul.f32 %v1570, %v2000
    %v2211 = vmul.f32 %v1571, %v2002
    %v2212 = vmul.f32 %v1572, %v2004
    %v2213 = vmul.f32 %v1573, %v2006
    %v2214 = vmul.f32 %v1574, %v2008
    %v2215 = vmul.f32 %v1575, %v2010
    %v2216 = vmul.f32 %v1576, %v2012
    %v2217 = vmul.f32 %v1577, %v2014
    %v2218 = vmul.f32 %v1578, %v2016
    %v2219 = vmul.f32 %v1579, %v2018
    %v2220 = vmul.f32 %v1580, %v2020
    %v2221 = vmul.f32 %v1581, %v2022
    %v2222 = vmul.f32 %v1582, %v2024
    %v2223 = vmul.f32 %v1583, %v2026
    %v2224 = vmul.f32 %v1584, %v2028
    %v2225 = vmul.f32 %v1585, %v2030
    %v2226 = vmul.f32 %v1586, %v2032
    %v2227 = vmul.f32 %v1587, %v2034
    %v2228 = vmul.f32 %v1588, %v2036
    %v2229 = vmul.f32 %v1589, %v2038
    %v2230 = vmul.f32 %v1590, %v2040
    %v2231 = vmul.f32 %v1591, %v2042
    %v2232 = vmul.f32 %v1592, %v2044
    %v2233 = vmul.f32 %v1593, %v2046
    %v2234 = vmul.f32 %v1594, %v2048
    %v2235 = vmul.f32 %v1595, %v2050
    %v2236 = vmul.f32 %v1596, %v2052
    %v2237 = vmul.f32 %v1597, %v2054
    %v2238 = vmul.f32 %v1598, %v2056
    %v2239 = vmul.f32 %v1599, %v2058
    %v2240 = vmul.f32 %v1600, %v2060
    %v2241 = vmul.f32 %v1601, %v2062
    %v2242 = vmul.f32 %v1602, %v2064
    %v2243 = vmul.f32 %v1603, %v2066
    %v2244 = vmul.f32 %v1604, %v2068
    %v2245 = vmul.f32 %v1605, %v2070
    %v2246 = vmul.f32 %v1606, %v2072
    %v2247 = vmul.f32 %v1607, %v2074
    %v2248 = vmul.f32 %v1608, %v2076
    %v2249 = vmul.f32 %v1609, %v2078
    %v2250 = vmul.f32 %v1610, %v2080
    %v2251 = vmul.f32 %v1611, %v2082
    %v2252 = vmul.f32 %v1612, %v2084
    %v2253 = vmul.f32 %v1613, %v2086
    %v2254 = vmul.f32 %v1614, %v2088
    %v2255 = vmul.f32 %v1615, %v2090
    %v2256 = vmul.f32 %v1616, %v2092
    %v2257 = vmul.f32 %v1617, %v2094
    %v2258 = vmul.f32 %v1618, %v2096
    %v2259 = vmul.f32 %v1619, %v2098
    %v2260 = vmul.f32 %v1620, %v2100
    %v2261 = vmul.f32 %v1621, %v2102
    %v2262 = vmul.f32 %v1622, %v2104
    %v2263 = vmul.f32 %v1623, %v2106
    %v2264 = vmul.f32 %v1624, %v2108
    %v2265 = vmul.f32 %v1625, %v2110
    %v2266 = vmul.f32 %v1626, %v2112
    %v2267 = vmul.f32 %v1627, %v2114
    %v2268 = vmul.f32 %v1628, %v2116
    %v2269 = vmul.f32 %v1629, %v2118
    %v2270 = vmul.f32 %v1630, %v2120
    %v2271 = vmul.f32 %v1631, %v2122
    %v2272 = vmul.f32 %v1632, %v2124
    %v2273 = vmul.f32 %v1633, %v2126
    %v2274 = vmul.f32 %v1634, %v2128
    %v2275 = vmul.f32 %v1635, %v2130
    %v2276 = vmul.f32 %v1636, %v2132
    %v2277 = vmul.f32 %v1637, %v2134
    %v2278 = vmul.f32 %v1638, %v2136
    %v2279 = vmul.f32 %v1639, %v2138
    %v2280 = vmul.f32 %v1640, %v2140
    %v2281 = vmul.f32 %v1641, %v2142
    %v2282 = vmul.f32 %v1642, %v2144
    %v2283 = vmul.f32 %v1643, %v2146
    %v2284 = vmul.f32 %v1644, %v2148
    %v2285 = vmul.f32 %v1645, %v2150
    %v2286 = vmul.f32 %v1646, %v2152
    %v2287 = vmul.f32 %v1647, %v2154
    %v2288 = vmul.f32 %v1648, %v2156
    %v2289 = vmul.f32 %v1649, %v2158
    %v2290 = vmul.f32 %v1650, %v2160
    %v2291 = vmul.f32 %v1651, %v2162
    %v2292 = vmul.f32 %v1652, %v2164
    %v2293 = vadd.f32 %v2165, %v2167
    %v2294 = vadd.f32 %v2293, %v2169
    %v2295 = vadd.f32 %v2294, %v2171
    %v2296 = vadd.f32 %v2295, %v2173
    %v2297 = vadd.f32 %v2296, %v2175
    %v2298 = vadd.f32 %v2297, %v2177
    %v2299 = vadd.f32 %v2298, %v2179
    %v2300 = vadd.f32 %v2299, %v2181
    %v2301 = vadd.f32 %v2300, %v2183
    %v2302 = vadd.f32 %v2301, %v2185
    %v2303 = vadd.f32 %v2302, %v2187
    %v2304 = vadd.f32 %v2303, %v2189
    %v2305 = vadd.f32 %v2304, %v2191
    %v2306 = vadd.f32 %v2305, %v2193
    %v2307 = vadd.f32 %v2306, %v2195
    %v2308 = vadd.f32 %v2307, %v2197
    %v2309 = vadd.f32 %v2308, %v2199
    %v2310 = vadd.f32 %v2309, %v2201
    %v2311 = vadd.f32 %v2310, %v2203
    %v2312 = vadd.f32 %v2311, %v2205
    %v2313 = vadd.f32 %v2312, %v2207
    %v2314 = vadd.f32 %v2313, %v2209
    %v2315 = vadd.f32 %v2314, %v2211
    %v2316 = vadd.f32 %v2315, %v2213
    %v2317 = vadd.f32 %v2316, %v2215
    %v2318 = vadd.f32 %v2317, %v2217
    %v2319 = vadd.f32 %v2318, %v2219
    %v2320 = vadd.f32 %v2319, %v2221
    %v2321 = vadd.f32 %v2320, %v2223
    %v2322 = vadd.f32 %v2321, %v2225
    %v2323 = vadd.f32 %v2322, %v2227
    %v2324 = vrot.slane %v2323, 4
    %v2325 = vadd.f32 %v2323, %v2324
    %v2326 = vrot.slane %v2325, 2
    %v2327 = vadd.f32 %v2325, %v2326
    %v2328 = vrot.slane %v2327, 1
    %v2329 = vadd.f32 %v2327, %v2328
    %v2330 = vadd.f32 %v2166, %v2168
    %v2331 = vadd.f32 %v2330, %v2170
    %v2332 = vadd.f32 %v2331, %v2172
    %v2333 = vadd.f32 %v2332, %v2174
    %v2334 = vadd.f32 %v2333, %v2176
    %v2335 = vadd.f32 %v2334, %v2178
    %v2336 = vadd.f32 %v2335, %v2180
    %v2337 = vadd.f32 %v2336, %v2182
    %v2338 = vadd.f32 %v2337, %v2184
    %v2339 = vadd.f32 %v2338, %v2186
    %v2340 = vadd.f32 %v2339, %v2188
    %v2341 = vadd.f32 %v2340, %v2190
    %v2342 = vadd.f32 %v2341, %v2192
    %v2343 = vadd.f32 %v2342, %v2194
    %v2344 = vadd.f32 %v2343, %v2196
    %v2345 = vadd.f32 %v2344, %v2198
    %v2346 = vadd.f32 %v2345, %v2200
    %v2347 = vadd.f32 %v2346, %v2202
    %v2348 = vadd.f32 %v2347, %v2204
    %v2349 = vadd.f32 %v2348, %v2206
    %v2350 = vadd.f32 %v2349, %v2208
    %v2351 = vadd.f32 %v2350, %v2210
    %v2352 = vadd.f32 %v2351, %v2212
    %v2353 = vadd.f32 %v2352, %v2214
    %v2354 = vadd.f32 %v2353, %v2216
    %v2355 = vadd.f32 %v2354, %v2218
    %v2356 = vadd.f32 %v2355, %v2220
    %v2357 = vadd.f32 %v2356, %v2222
    %v2358 = vadd.f32 %v2357, %v2224
    %v2359 = vadd.f32 %v2358, %v2226
    %v2360 = vadd.f32 %v2359, %v2228
    %v2361 = vrot.slane %v2360, 4
    %v2362 = vadd.f32 %v2360, %v2361
    %v2363 = vrot.slane %v2362, 2
    %v2364 = vadd.f32 %v2362, %v2363
    %v2365 = vrot.slane %v2364, 1
    %v2366 = vadd.f32 %v2364, %v2365
    %v2367 = vadd.f32 %v2229, %v2231
    %v2368 = vadd.f32 %v2367, %v2233
    %v2369 = vadd.f32 %v2368, %v2235
    %v2370 = vadd.f32 %v2369, %v2237
    %v2371 = vadd.f32 %v2370, %v2239
    %v2372 = vadd.f32 %v2371, %v2241
    %v2373 = vadd.f32 %v2372, %v2243
    %v2374 = vadd.f32 %v2373, %v2245
    %v2375 = vadd.f32 %v2374, %v2247
    %v2376 = vadd.f32 %v2375, %v2249
    %v2377 = vadd.f32 %v2376, %v2251
    %v2378 = vadd.f32 %v2377, %v2253
    %v2379 = vadd.f32 %v2378, %v2255
    %v2380 = vadd.f32 %v2379, %v2257
    %v2381 = vadd.f32 %v2380, %v2259
    %v2382 = vadd.f32 %v2381, %v2261
    %v2383 = vadd.f32 %v2382, %v2263
    %v2384 = vadd.f32 %v2383, %v2265
    %v2385 = vadd.f32 %v2384, %v2267
    %v2386 = vadd.f32 %v2385, %v2269
    %v2387 = vadd.f32 %v2386, %v2271
    %v2388 = vadd.f32 %v2387, %v2273
    %v2389 = vadd.f32 %v2388, %v2275
    %v2390 = vadd.f32 %v2389, %v2277
    %v2391 = vadd.f32 %v2390, %v2279
    %v2392 = vadd.f32 %v2391, %v2281
    %v2393 = vadd.f32 %v2392, %v2283
    %v2394 = vadd.f32 %v2393, %v2285
    %v2395 = vadd.f32 %v2394, %v2287
    %v2396 = vadd.f32 %v2395, %v2289
    %v2397 = vadd.f32 %v2396, %v2291
    %v2398 = vrot.slane %v2397, 4
    %v2399 = vadd.f32 %v2397, %v2398
    %v2400 = vrot.slane %v2399, 2
    %v2401 = vadd.f32 %v2399, %v2400
    %v2402 = vrot.slane %v2401, 1
    %v2403 = vadd.f32 %v2401, %v2402
    %v2404 = vadd.f32 %v2230, %v2232
    %v2405 = vadd.f32 %v2404, %v2234
    %v2406 = vadd.f32 %v2405, %v2236
    %v2407 = vadd.f32 %v2406, %v2238
    %v2408 = vadd.f32 %v2407, %v2240
    %v2409 = vadd.f32 %v2408, %v2242
    %v2410 = vadd.f32 %v2409, %v2244
    %v2411 = vadd.f32 %v2410, %v2246
    %v2412 = vadd.f32 %v2411, %v2248
    %v2413 = vadd.f32 %v2412, %v2250
    %v2414 = vadd.f32 %v2413, %v2252
    %v2415 = vadd.f32 %v2414, %v2254
    %v2416 = vadd.f32 %v2415, %v2256
    %v2417 = vadd.f32 %v2416, %v2258
    %v2418 = vadd.f32 %v2417, %v2260
    %v2419 = vadd.f32 %v2418, %v2262
    %v2420 = vadd.f32 %v2419, %v2264
    %v2421 = vadd.f32 %v2420, %v2266
    %v2422 = vadd.f32 %v2421, %v2268
    %v2423 = vadd.f32 %v2422, %v2270
    %v2424 = vadd.f32 %v2423, %v2272
    %v2425 = vadd.f32 %v2424, %v2274
    %v2426 = vadd.f32 %v2425, %v2276
    %v2427 = vadd.f32 %v2426, %v2278
    %v2428 = vadd.f32 %v2427, %v2280
    %v2429 = vadd.f32 %v2428, %v2282
    %v2430 = vadd.f32 %v2429, %v2284
    %v2431 = vadd.f32 %v2430, %v2286
    %v2432 = vadd.f32 %v2431, %v2288
    %v2433 = vadd.f32 %v2432, %v2290
    %v2434 = vadd.f32 %v2433, %v2292
    %v2435 = vrot.slane %v2434, 4
    %v2436 = vadd.f32 %v2434, %v2435
    %v2437 = vrot.slane %v2436, 2
    %v2438 = vadd.f32 %v2436, %v2437
    %v2439 = vrot.slane %v2438, 1
    %v2440 = vadd.f32 %v2438, %v2439
    %v2441 = vsub.f32 0.0, %v2329
    %v2442 = vsub.f32 0.0, %v2366
    %v2443 = vsub.f32 0.0, %v2403
    %v2444 = vsub.f32 0.0, %v2440
    %v2449 = vcombine.low %v2441, %v2442
    %v2451 = vunpack.c.l.s4 1966171168
    %v2452 = vunpack.c.0.s8 %v2451
    %v2453 = vlaneseq
    %v2454 = vshrl.u32 %v2453, 7
    %v2455 = vsub.s32 %v2452, %v2454
    %v2456 = vrot.slane %v2449, %v2455
    %v2458 = vunpack.c.l.s4 1966171168
    %v2459 = vunpack.c.0.s8 %v2458
    %v2460 = vlaneseq
    %v2461 = vshrl.u32 %v2460, 7
    %v2462 = vsub.s32 %v2459, %v2461
    %v2463 = vrot.slane %v2456, %v2462
    %v2464 = vcombine.low %v2443, %v2444
    %v2466 = vunpack.c.l.s4 1966171168
    %v2467 = vunpack.c.0.s8 %v2466
    %v2468 = vlaneseq
    %v2469 = vshrl.u32 %v2468, 7
    %v2470 = vsub.s32 %v2467, %v2469
    %v2471 = vrot.slane %v2464, %v2470
    %v2473 = vunpack.c.l.s4 1966171168
    %v2474 = vunpack.c.0.s8 %v2473
    %v2475 = vlaneseq
    %v2476 = vshrl.u32 %v2475, 7
    %v2477 = vsub.s32 %v2474, %v2476
    %v2478 = vrot.slane %v2471, %v2477
    %v2481 = vlaneseq
    %vm2482 = vcmp.ge.s32.totalorder %v2481, 0
    %vm2483 = vcmp.lt.s32.totalorder %v2481, 256
    %vm2484 = vmand %vm2482, %vm2483
    %s2485 = scalar_lea.vmem [#allocation6], 1
    %2486 = vst.msk [vmem:[%s2485] ss:$2 sm:$0x3] %vm2484, %v2463
    %s2487 = scalar_lea.vmem [#allocation6], 5
    %2488 = vst.msk [vmem:[%s2487] ss:$2 sm:$0x3] %vm2484, %v2478
    %v2489 = vld [vmem:[%s1] sm:$0xff]
    %v2490 = vld [vmem:[%s1 + $0x8] sm:$0xff]
    %v2491 = vld [vmem:[%s1 + $0x10] sm:$0xff]
    %v2492 = vld [vmem:[%s1 + $0x18] sm:$0xff]
    %v2493 = vld [vmem:[%s1 + $0x20] sm:$0xff]
    %v2494 = vld [vmem:[%s1 + $0x28] sm:$0xff]
    %v2495 = vld [vmem:[%s1 + $0x30] sm:$0xff]
    %v2496 = vld [vmem:[%s1 + $0x38] sm:$0xff]
    %v2497 = vld [vmem:[%s1 + $0x40] sm:$0xff]
    %v2498 = vld [vmem:[%s1 + $0x48] sm:$0xff]
    %v2499 = vld [vmem:[%s1 + $0x50] sm:$0xff]
    %v2500 = vld [vmem:[%s1 + $0x58] sm:$0xff]
    %v2501 = vld [vmem:[%s1 + $0x60] sm:$0xff]
    %v2502 = vld [vmem:[%s1 + $0x68] sm:$0xff]
    %v2503 = vld [vmem:[%s1 + $0x70] sm:$0xff]
    %v2504 = vld [vmem:[%s1 + $0x78] sm:$0xff]
    %v2505 = vld [vmem:[%s1 + $0x80] sm:$0xff]
    %v2506 = vld [vmem:[%s1 + $0x88] sm:$0xff]
    %v2507 = vld [vmem:[%s1 + $0x90] sm:$0xff]
    %v2508 = vld [vmem:[%s1 + $0x98] sm:$0xff]
    %v2509 = vld [vmem:[%s1 + $0xa0] sm:$0xff]
    %v2510 = vld [vmem:[%s1 + $0xa8] sm:$0xff]
    %v2511 = vld [vmem:[%s1 + $0xb0] sm:$0xff]
    %v2512 = vld [vmem:[%s1 + $0xb8] sm:$0xff]
    %v2513 = vld [vmem:[%s1 + $0xc0] sm:$0xff]
    %v2514 = vld [vmem:[%s1 + $0xc8] sm:$0xff]
    %v2515 = vld [vmem:[%s1 + $0xd0] sm:$0xff]
    %v2516 = vld [vmem:[%s1 + $0xd8] sm:$0xff]
    %v2517 = vld [vmem:[%s1 + $0xe0] sm:$0xff]
    %v2518 = vld [vmem:[%s1 + $0xe8] sm:$0xff]
    %v2519 = vld [vmem:[%s1 + $0xf0] sm:$0xff]
    %v2520 = vld [vmem:[%s1 + $0xf8] sm:$0xff]
    %v2521 = vld [vmem:[%s1 + $0x100] sm:$0xff]
    %v2522 = vld [vmem:[%s1 + $0x108] sm:$0xff]
    %v2523 = vld [vmem:[%s1 + $0x110] sm:$0xff]
    %v2524 = vld [vmem:[%s1 + $0x118] sm:$0xff]
    %v2525 = vld [vmem:[%s1 + $0x120] sm:$0xff]
    %v2526 = vld [vmem:[%s1 + $0x128] sm:$0xff]
    %v2527 = vld [vmem:[%s1 + $0x130] sm:$0xff]
    %v2528 = vld [vmem:[%s1 + $0x138] sm:$0xff]
    %v2529 = vld [vmem:[%s1 + $0x140] sm:$0xff]
    %v2530 = vld [vmem:[%s1 + $0x148] sm:$0xff]
    %v2531 = vld [vmem:[%s1 + $0x150] sm:$0xff]
    %v2532 = vld [vmem:[%s1 + $0x158] sm:$0xff]
    %v2533 = vld [vmem:[%s1 + $0x160] sm:$0xff]
    %v2534 = vld [vmem:[%s1 + $0x168] sm:$0xff]
    %v2535 = vld [vmem:[%s1 + $0x170] sm:$0xff]
    %v2536 = vld [vmem:[%s1 + $0x178] sm:$0xff]
    %v2537 = vld [vmem:[%s1 + $0x180] sm:$0xff]
    %v2538 = vld [vmem:[%s1 + $0x188] sm:$0xff]
    %v2539 = vld [vmem:[%s1 + $0x190] sm:$0xff]
    %v2540 = vld [vmem:[%s1 + $0x198] sm:$0xff]
    %v2541 = vld [vmem:[%s1 + $0x1a0] sm:$0xff]
    %v2542 = vld [vmem:[%s1 + $0x1a8] sm:$0xff]
    %v2543 = vld [vmem:[%s1 + $0x1b0] sm:$0xff]
    %v2544 = vld [vmem:[%s1 + $0x1b8] sm:$0xff]
    %v2545 = vld [vmem:[%s1 + $0x1c0] sm:$0xff]
    %v2546 = vld [vmem:[%s1 + $0x1c8] sm:$0xff]
    %v2547 = vld [vmem:[%s1 + $0x1d0] sm:$0xff]
    %v2548 = vld [vmem:[%s1 + $0x1d8] sm:$0xff]
    %v2549 = vld [vmem:[%s1 + $0x1e0] sm:$0xff]
    %v2550 = vld [vmem:[%s1 + $0x1e8] sm:$0xff]
    %v2551 = vld [vmem:[%s1 + $0x1f0] sm:$0xff]
    %v2552 = vld [vmem:[%s1 + $0x1f8] sm:$0xff]
    %2554 = vset.pattern.permute.xlu0 0
    %2555 = vperm.xlu0 %2554, %v2489
    %v2556 = vpop.permute.xlu0 %2555
    %2559 = vset.pattern.permute.xlu0 0
    %2560 = vperm.xlu0 %2559, %v2490
    %v2561 = vpop.permute.xlu0 %2560
    %2564 = vset.pattern.permute.xlu0 0
    %2565 = vperm.xlu0 %2564, %v2491
    %v2566 = vpop.permute.xlu0 %2565
    %2569 = vset.pattern.permute.xlu0 0
    %2570 = vperm.xlu0 %2569, %v2492
    %v2571 = vpop.permute.xlu0 %2570
    %2574 = vset.pattern.permute.xlu0 0
    %2575 = vperm.xlu0 %2574, %v2493
    %v2576 = vpop.permute.xlu0 %2575
    %2579 = vset.pattern.permute.xlu0 0
    %2580 = vperm.xlu0 %2579, %v2494
    %v2581 = vpop.permute.xlu0 %2580
    %2584 = vset.pattern.permute.xlu0 0
    %2585 = vperm.xlu0 %2584, %v2495
    %v2586 = vpop.permute.xlu0 %2585
    %2589 = vset.pattern.permute.xlu0 0
    %2590 = vperm.xlu0 %2589, %v2496
    %v2591 = vpop.permute.xlu0 %2590
    %2594 = vset.pattern.permute.xlu0 0
    %2595 = vperm.xlu0 %2594, %v2497
    %v2596 = vpop.permute.xlu0 %2595
    %2599 = vset.pattern.permute.xlu0 0
    %2600 = vperm.xlu0 %2599, %v2498
    %v2601 = vpop.permute.xlu0 %2600
    %2604 = vset.pattern.permute.xlu0 0
    %2605 = vperm.xlu0 %2604, %v2499
    %v2606 = vpop.permute.xlu0 %2605
    %2609 = vset.pattern.permute.xlu0 0
    %2610 = vperm.xlu0 %2609, %v2500
    %v2611 = vpop.permute.xlu0 %2610
    %2614 = vset.pattern.permute.xlu0 0
    %2615 = vperm.xlu0 %2614, %v2501
    %v2616 = vpop.permute.xlu0 %2615
    %2619 = vset.pattern.permute.xlu0 0
    %2620 = vperm.xlu0 %2619, %v2502
    %v2621 = vpop.permute.xlu0 %2620
    %2624 = vset.pattern.permute.xlu0 0
    %2625 = vperm.xlu0 %2624, %v2503
    %v2626 = vpop.permute.xlu0 %2625
    %2629 = vset.pattern.permute.xlu0 0
    %2630 = vperm.xlu0 %2629, %v2504
    %v2631 = vpop.permute.xlu0 %2630
    %2634 = vset.pattern.permute.xlu0 0
    %2635 = vperm.xlu0 %2634, %v2505
    %v2636 = vpop.permute.xlu0 %2635
    %2639 = vset.pattern.permute.xlu0 0
    %2640 = vperm.xlu0 %2639, %v2506
    %v2641 = vpop.permute.xlu0 %2640
    %2644 = vset.pattern.permute.xlu0 0
    %2645 = vperm.xlu0 %2644, %v2507
    %v2646 = vpop.permute.xlu0 %2645
    %2649 = vset.pattern.permute.xlu0 0
    %2650 = vperm.xlu0 %2649, %v2508
    %v2651 = vpop.permute.xlu0 %2650
    %2654 = vset.pattern.permute.xlu0 0
    %2655 = vperm.xlu0 %2654, %v2509
    %v2656 = vpop.permute.xlu0 %2655
    %2659 = vset.pattern.permute.xlu0 0
    %2660 = vperm.xlu0 %2659, %v2510
    %v2661 = vpop.permute.xlu0 %2660
    %2664 = vset.pattern.permute.xlu0 0
    %2665 = vperm.xlu0 %2664, %v2511
    %v2666 = vpop.permute.xlu0 %2665
    %2669 = vset.pattern.permute.xlu0 0
    %2670 = vperm.xlu0 %2669, %v2512
    %v2671 = vpop.permute.xlu0 %2670
    %2674 = vset.pattern.permute.xlu0 0
    %2675 = vperm.xlu0 %2674, %v2513
    %v2676 = vpop.permute.xlu0 %2675
    %2679 = vset.pattern.permute.xlu0 0
    %2680 = vperm.xlu0 %2679, %v2514
    %v2681 = vpop.permute.xlu0 %2680
    %2684 = vset.pattern.permute.xlu0 0
    %2685 = vperm.xlu0 %2684, %v2515
    %v2686 = vpop.permute.xlu0 %2685
    %2689 = vset.pattern.permute.xlu0 0
    %2690 = vperm.xlu0 %2689, %v2516
    %v2691 = vpop.permute.xlu0 %2690
    %2694 = vset.pattern.permute.xlu0 0
    %2695 = vperm.xlu0 %2694, %v2517
    %v2696 = vpop.permute.xlu0 %2695
    %2699 = vset.pattern.permute.xlu0 0
    %2700 = vperm.xlu0 %2699, %v2518
    %v2701 = vpop.permute.xlu0 %2700
    %2704 = vset.pattern.permute.xlu0 0
    %2705 = vperm.xlu0 %2704, %v2519
    %v2706 = vpop.permute.xlu0 %2705
    %2709 = vset.pattern.permute.xlu0 0
    %2710 = vperm.xlu0 %2709, %v2520
    %v2711 = vpop.permute.xlu0 %2710
    %2714 = vset.pattern.permute.xlu0 0
    %2715 = vperm.xlu0 %2714, %v2521
    %v2716 = vpop.permute.xlu0 %2715
    %2719 = vset.pattern.permute.xlu0 0
    %2720 = vperm.xlu0 %2719, %v2522
    %v2721 = vpop.permute.xlu0 %2720
    %2724 = vset.pattern.permute.xlu0 0
    %2725 = vperm.xlu0 %2724, %v2523
    %v2726 = vpop.permute.xlu0 %2725
    %2729 = vset.pattern.permute.xlu0 0
    %2730 = vperm.xlu0 %2729, %v2524
    %v2731 = vpop.permute.xlu0 %2730
    %2734 = vset.pattern.permute.xlu0 0
    %2735 = vperm.xlu0 %2734, %v2525
    %v2736 = vpop.permute.xlu0 %2735
    %2739 = vset.pattern.permute.xlu0 0
    %2740 = vperm.xlu0 %2739, %v2526
    %v2741 = vpop.permute.xlu0 %2740
    %2744 = vset.pattern.permute.xlu0 0
    %2745 = vperm.xlu0 %2744, %v2527
    %v2746 = vpop.permute.xlu0 %2745
    %2749 = vset.pattern.permute.xlu0 0
    %2750 = vperm.xlu0 %2749, %v2528
    %v2751 = vpop.permute.xlu0 %2750
    %2754 = vset.pattern.permute.xlu0 0
    %2755 = vperm.xlu0 %2754, %v2529
    %v2756 = vpop.permute.xlu0 %2755
    %2759 = vset.pattern.permute.xlu0 0
    %2760 = vperm.xlu0 %2759, %v2530
    %v2761 = vpop.permute.xlu0 %2760
    %2764 = vset.pattern.permute.xlu0 0
    %2765 = vperm.xlu0 %2764, %v2531
    %v2766 = vpop.permute.xlu0 %2765
    %2769 = vset.pattern.permute.xlu0 0
    %2770 = vperm.xlu0 %2769, %v2532
    %v2771 = vpop.permute.xlu0 %2770
    %2774 = vset.pattern.permute.xlu0 0
    %2775 = vperm.xlu0 %2774, %v2533
    %v2776 = vpop.permute.xlu0 %2775
    %2779 = vset.pattern.permute.xlu0 0
    %2780 = vperm.xlu0 %2779, %v2534
    %v2781 = vpop.permute.xlu0 %2780
    %2784 = vset.pattern.permute.xlu0 0
    %2785 = vperm.xlu0 %2784, %v2535
    %v2786 = vpop.permute.xlu0 %2785
    %2789 = vset.pattern.permute.xlu0 0
    %2790 = vperm.xlu0 %2789, %v2536
    %v2791 = vpop.permute.xlu0 %2790
    %2794 = vset.pattern.permute.xlu0 0
    %2795 = vperm.xlu0 %2794, %v2537
    %v2796 = vpop.permute.xlu0 %2795
    %2799 = vset.pattern.permute.xlu0 0
    %2800 = vperm.xlu0 %2799, %v2538
    %v2801 = vpop.permute.xlu0 %2800
    %2804 = vset.pattern.permute.xlu0 0
    %2805 = vperm.xlu0 %2804, %v2539
    %v2806 = vpop.permute.xlu0 %2805
    %2809 = vset.pattern.permute.xlu0 0
    %2810 = vperm.xlu0 %2809, %v2540
    %v2811 = vpop.permute.xlu0 %2810
    %2814 = vset.pattern.permute.xlu0 0
    %2815 = vperm.xlu0 %2814, %v2541
    %v2816 = vpop.permute.xlu0 %2815
    %2819 = vset.pattern.permute.xlu0 0
    %2820 = vperm.xlu0 %2819, %v2542
    %v2821 = vpop.permute.xlu0 %2820
    %2824 = vset.pattern.permute.xlu0 0
    %2825 = vperm.xlu0 %2824, %v2543
    %v2826 = vpop.permute.xlu0 %2825
    %2829 = vset.pattern.permute.xlu0 0
    %2830 = vperm.xlu0 %2829, %v2544
    %v2831 = vpop.permute.xlu0 %2830
    %2834 = vset.pattern.permute.xlu0 0
    %2835 = vperm.xlu0 %2834, %v2545
    %v2836 = vpop.permute.xlu0 %2835
    %2839 = vset.pattern.permute.xlu0 0
    %2840 = vperm.xlu0 %2839, %v2546
    %v2841 = vpop.permute.xlu0 %2840
    %2844 = vset.pattern.permute.xlu0 0
    %2845 = vperm.xlu0 %2844, %v2547
    %v2846 = vpop.permute.xlu0 %2845
    %2849 = vset.pattern.permute.xlu0 0
    %2850 = vperm.xlu0 %2849, %v2548
    %v2851 = vpop.permute.xlu0 %2850
    %2854 = vset.pattern.permute.xlu0 0
    %2855 = vperm.xlu0 %2854, %v2549
    %v2856 = vpop.permute.xlu0 %2855
    %2859 = vset.pattern.permute.xlu0 0
    %2860 = vperm.xlu0 %2859, %v2550
    %v2861 = vpop.permute.xlu0 %2860
    %2864 = vset.pattern.permute.xlu0 0
    %2865 = vperm.xlu0 %2864, %v2551
    %v2866 = vpop.permute.xlu0 %2865
    %2869 = vset.pattern.permute.xlu0 0
    %2870 = vperm.xlu0 %2869, %v2552
    %v2871 = vpop.permute.xlu0 %2870
    %v2873 = vmul.f32 %v1525, %v2556
    %v2874 = vmul.f32 %v1526, %v2556
    %v2875 = vmul.f32 %v1527, %v2561
    %v2876 = vmul.f32 %v1528, %v2561
    %v2877 = vmul.f32 %v1529, %v2566
    %v2878 = vmul.f32 %v1530, %v2566
    %v2879 = vmul.f32 %v1531, %v2571
    %v2880 = vmul.f32 %v1532, %v2571
    %v2881 = vmul.f32 %v1533, %v2576
    %v2882 = vmul.f32 %v1534, %v2576
    %v2883 = vmul.f32 %v1535, %v2581
    %v2884 = vmul.f32 %v1536, %v2581
    %v2885 = vmul.f32 %v1537, %v2586
    %v2886 = vmul.f32 %v1538, %v2586
    %v2887 = vmul.f32 %v1539, %v2591
    %v2888 = vmul.f32 %v1540, %v2591
    %v2889 = vmul.f32 %v1541, %v2596
    %v2890 = vmul.f32 %v1542, %v2596
    %v2891 = vmul.f32 %v1543, %v2601
    %v2892 = vmul.f32 %v1544, %v2601
    %v2893 = vmul.f32 %v1545, %v2606
    %v2894 = vmul.f32 %v1546, %v2606
    %v2895 = vmul.f32 %v1547, %v2611
    %v2896 = vmul.f32 %v1548, %v2611
    %v2897 = vmul.f32 %v1549, %v2616
    %v2898 = vmul.f32 %v1550, %v2616
    %v2899 = vmul.f32 %v1551, %v2621
    %v2900 = vmul.f32 %v1552, %v2621
    %v2901 = vmul.f32 %v1553, %v2626
    %v2902 = vmul.f32 %v1554, %v2626
    %v2903 = vmul.f32 %v1555, %v2631
    %v2904 = vmul.f32 %v1556, %v2631
    %v2905 = vmul.f32 %v1557, %v2636
    %v2906 = vmul.f32 %v1558, %v2636
    %v2907 = vmul.f32 %v1559, %v2641
    %v2908 = vmul.f32 %v1560, %v2641
    %v2909 = vmul.f32 %v1561, %v2646
    %v2910 = vmul.f32 %v1562, %v2646
    %v2911 = vmul.f32 %v1563, %v2651
    %v2912 = vmul.f32 %v1564, %v2651
    %v2913 = vmul.f32 %v1565, %v2656
    %v2914 = vmul.f32 %v1566, %v2656
    %v2915 = vmul.f32 %v1567, %v2661
    %v2916 = vmul.f32 %v1568, %v2661
    %v2917 = vmul.f32 %v1569, %v2666
    %v2918 = vmul.f32 %v1570, %v2666
    %v2919 = vmul.f32 %v1571, %v2671
    %v2920 = vmul.f32 %v1572, %v2671
    %v2921 = vmul.f32 %v1573, %v2676
    %v2922 = vmul.f32 %v1574, %v2676
    %v2923 = vmul.f32 %v1575, %v2681
    %v2924 = vmul.f32 %v1576, %v2681
    %v2925 = vmul.f32 %v1577, %v2686
    %v2926 = vmul.f32 %v1578, %v2686
    %v2927 = vmul.f32 %v1579, %v2691
    %v2928 = vmul.f32 %v1580, %v2691
    %v2929 = vmul.f32 %v1581, %v2696
    %v2930 = vmul.f32 %v1582, %v2696
    %v2931 = vmul.f32 %v1583, %v2701
    %v2932 = vmul.f32 %v1584, %v2701
    %v2933 = vmul.f32 %v1585, %v2706
    %v2934 = vmul.f32 %v1586, %v2706
    %v2935 = vmul.f32 %v1587, %v2711
    %v2936 = vmul.f32 %v1588, %v2711
    %v2937 = vmul.f32 %v1589, %v2716
    %v2938 = vmul.f32 %v1590, %v2716
    %v2939 = vmul.f32 %v1591, %v2721
    %v2940 = vmul.f32 %v1592, %v2721
    %v2941 = vmul.f32 %v1593, %v2726
    %v2942 = vmul.f32 %v1594, %v2726
    %v2943 = vmul.f32 %v1595, %v2731
    %v2944 = vmul.f32 %v1596, %v2731
    %v2945 = vmul.f32 %v1597, %v2736
    %v2946 = vmul.f32 %v1598, %v2736
    %v2947 = vmul.f32 %v1599, %v2741
    %v2948 = vmul.f32 %v1600, %v2741
    %v2949 = vmul.f32 %v1601, %v2746
    %v2950 = vmul.f32 %v1602, %v2746
    %v2951 = vmul.f32 %v1603, %v2751
    %v2952 = vmul.f32 %v1604, %v2751
    %v2953 = vmul.f32 %v1605, %v2756
    %v2954 = vmul.f32 %v1606, %v2756
    %v2955 = vmul.f32 %v1607, %v2761
    %v2956 = vmul.f32 %v1608, %v2761
    %v2957 = vmul.f32 %v1609, %v2766
    %v2958 = vmul.f32 %v1610, %v2766
    %v2959 = vmul.f32 %v1611, %v2771
    %v2960 = vmul.f32 %v1612, %v2771
    %v2961 = vmul.f32 %v1613, %v2776
    %v2962 = vmul.f32 %v1614, %v2776
    %v2963 = vmul.f32 %v1615, %v2781
    %v2964 = vmul.f32 %v1616, %v2781
    %v2965 = vmul.f32 %v1617, %v2786
    %v2966 = vmul.f32 %v1618, %v2786
    %v2967 = vmul.f32 %v1619, %v2791
    %v2968 = vmul.f32 %v1620, %v2791
    %v2969 = vmul.f32 %v1621, %v2796
    %v2970 = vmul.f32 %v1622, %v2796
    %v2971 = vmul.f32 %v1623, %v2801
    %v2972 = vmul.f32 %v1624, %v2801
    %v2973 = vmul.f32 %v1625, %v2806
    %v2974 = vmul.f32 %v1626, %v2806
    %v2975 = vmul.f32 %v1627, %v2811
    %v2976 = vmul.f32 %v1628, %v2811
    %v2977 = vmul.f32 %v1629, %v2816
    %v2978 = vmul.f32 %v1630, %v2816
    %v2979 = vmul.f32 %v1631, %v2821
    %v2980 = vmul.f32 %v1632, %v2821
    %v2981 = vmul.f32 %v1633, %v2826
    %v2982 = vmul.f32 %v1634, %v2826
    %v2983 = vmul.f32 %v1635, %v2831
    %v2984 = vmul.f32 %v1636, %v2831
    %v2985 = vmul.f32 %v1637, %v2836
    %v2986 = vmul.f32 %v1638, %v2836
    %v2987 = vmul.f32 %v1639, %v2841
    %v2988 = vmul.f32 %v1640, %v2841
    %v2989 = vmul.f32 %v1641, %v2846
    %v2990 = vmul.f32 %v1642, %v2846
    %v2991 = vmul.f32 %v1643, %v2851
    %v2992 = vmul.f32 %v1644, %v2851
    %v2993 = vmul.f32 %v1645, %v2856
    %v2994 = vmul.f32 %v1646, %v2856
    %v2995 = vmul.f32 %v1647, %v2861
    %v2996 = vmul.f32 %v1648, %v2861
    %v2997 = vmul.f32 %v1649, %v2866
    %v2998 = vmul.f32 %v1650, %v2866
    %v2999 = vmul.f32 %v1651, %v2871
    %v3000 = vmul.f32 %v1652, %v2871
    %v3001 = vadd.f32 %v2873, %v2875
    %v3002 = vadd.f32 %v3001, %v2877
    %v3003 = vadd.f32 %v3002, %v2879
    %v3004 = vadd.f32 %v3003, %v2881
    %v3005 = vadd.f32 %v3004, %v2883
    %v3006 = vadd.f32 %v3005, %v2885
    %v3007 = vadd.f32 %v3006, %v2887
    %v3008 = vadd.f32 %v3007, %v2889
    %v3009 = vadd.f32 %v3008, %v2891
    %v3010 = vadd.f32 %v3009, %v2893
    %v3011 = vadd.f32 %v3010, %v2895
    %v3012 = vadd.f32 %v3011, %v2897
    %v3013 = vadd.f32 %v3012, %v2899
    %v3014 = vadd.f32 %v3013, %v2901
    %v3015 = vadd.f32 %v3014, %v2903
    %v3016 = vadd.f32 %v3015, %v2905
    %v3017 = vadd.f32 %v3016, %v2907
    %v3018 = vadd.f32 %v3017, %v2909
    %v3019 = vadd.f32 %v3018, %v2911
    %v3020 = vadd.f32 %v3019, %v2913
    %v3021 = vadd.f32 %v3020, %v2915
    %v3022 = vadd.f32 %v3021, %v2917
    %v3023 = vadd.f32 %v3022, %v2919
    %v3024 = vadd.f32 %v3023, %v2921
    %v3025 = vadd.f32 %v3024, %v2923
    %v3026 = vadd.f32 %v3025, %v2925
    %v3027 = vadd.f32 %v3026, %v2927
    %v3028 = vadd.f32 %v3027, %v2929
    %v3029 = vadd.f32 %v3028, %v2931
    %v3030 = vadd.f32 %v3029, %v2933
    %v3031 = vadd.f32 %v3030, %v2935
    %v3032 = vrot.slane %v3031, 4
    %v3033 = vadd.f32 %v3031, %v3032
    %v3034 = vrot.slane %v3033, 2
    %v3035 = vadd.f32 %v3033, %v3034
    %v3036 = vrot.slane %v3035, 1
    %v3037 = vadd.f32 %v3035, %v3036
    %v3038 = vadd.f32 %v2874, %v2876
    %v3039 = vadd.f32 %v3038, %v2878
    %v3040 = vadd.f32 %v3039, %v2880
    %v3041 = vadd.f32 %v3040, %v2882
    %v3042 = vadd.f32 %v3041, %v2884
    %v3043 = vadd.f32 %v3042, %v2886
    %v3044 = vadd.f32 %v3043, %v2888
    %v3045 = vadd.f32 %v3044, %v2890
    %v3046 = vadd.f32 %v3045, %v2892
    %v3047 = vadd.f32 %v3046, %v2894
    %v3048 = vadd.f32 %v3047, %v2896
    %v3049 = vadd.f32 %v3048, %v2898
    %v3050 = vadd.f32 %v3049, %v2900
    %v3051 = vadd.f32 %v3050, %v2902
    %v3052 = vadd.f32 %v3051, %v2904
    %v3053 = vadd.f32 %v3052, %v2906
    %v3054 = vadd.f32 %v3053, %v2908
    %v3055 = vadd.f32 %v3054, %v2910
    %v3056 = vadd.f32 %v3055, %v2912
    %v3057 = vadd.f32 %v3056, %v2914
    %v3058 = vadd.f32 %v3057, %v2916
    %v3059 = vadd.f32 %v3058, %v2918
    %v3060 = vadd.f32 %v3059, %v2920
    %v3061 = vadd.f32 %v3060, %v2922
    %v3062 = vadd.f32 %v3061, %v2924
    %v3063 = vadd.f32 %v3062, %v2926
    %v3064 = vadd.f32 %v3063, %v2928
    %v3065 = vadd.f32 %v3064, %v2930
    %v3066 = vadd.f32 %v3065, %v2932
    %v3067 = vadd.f32 %v3066, %v2934
    %v3068 = vadd.f32 %v3067, %v2936
    %v3069 = vrot.slane %v3068, 4
    %v3070 = vadd.f32 %v3068, %v3069
    %v3071 = vrot.slane %v3070, 2
    %v3072 = vadd.f32 %v3070, %v3071
    %v3073 = vrot.slane %v3072, 1
    %v3074 = vadd.f32 %v3072, %v3073
    %v3075 = vadd.f32 %v2937, %v2939
    %v3076 = vadd.f32 %v3075, %v2941
    %v3077 = vadd.f32 %v3076, %v2943
    %v3078 = vadd.f32 %v3077, %v2945
    %v3079 = vadd.f32 %v3078, %v2947
    %v3080 = vadd.f32 %v3079, %v2949
    %v3081 = vadd.f32 %v3080, %v2951
    %v3082 = vadd.f32 %v3081, %v2953
    %v3083 = vadd.f32 %v3082, %v2955
    %v3084 = vadd.f32 %v3083, %v2957
    %v3085 = vadd.f32 %v3084, %v2959
    %v3086 = vadd.f32 %v3085, %v2961
    %v3087 = vadd.f32 %v3086, %v2963
    %v3088 = vadd.f32 %v3087, %v2965
    %v3089 = vadd.f32 %v3088, %v2967
    %v3090 = vadd.f32 %v3089, %v2969
    %v3091 = vadd.f32 %v3090, %v2971
    %v3092 = vadd.f32 %v3091, %v2973
    %v3093 = vadd.f32 %v3092, %v2975
    %v3094 = vadd.f32 %v3093, %v2977
    %v3095 = vadd.f32 %v3094, %v2979
    %v3096 = vadd.f32 %v3095, %v2981
    %v3097 = vadd.f32 %v3096, %v2983
    %v3098 = vadd.f32 %v3097, %v2985
    %v3099 = vadd.f32 %v3098, %v2987
    %v3100 = vadd.f32 %v3099, %v2989
    %v3101 = vadd.f32 %v3100, %v2991
    %v3102 = vadd.f32 %v3101, %v2993
    %v3103 = vadd.f32 %v3102, %v2995
    %v3104 = vadd.f32 %v3103, %v2997
    %v3105 = vadd.f32 %v3104, %v2999
    %v3106 = vrot.slane %v3105, 4
    %v3107 = vadd.f32 %v3105, %v3106
    %v3108 = vrot.slane %v3107, 2
    %v3109 = vadd.f32 %v3107, %v3108
    %v3110 = vrot.slane %v3109, 1
    %v3111 = vadd.f32 %v3109, %v3110
    %v3112 = vadd.f32 %v2938, %v2940
    %v3113 = vadd.f32 %v3112, %v2942
    %v3114 = vadd.f32 %v3113, %v2944
    %v3115 = vadd.f32 %v3114, %v2946
    %v3116 = vadd.f32 %v3115, %v2948
    %v3117 = vadd.f32 %v3116, %v2950
    %v3118 = vadd.f32 %v3117, %v2952
    %v3119 = vadd.f32 %v3118, %v2954
    %v3120 = vadd.f32 %v3119, %v2956
    %v3121 = vadd.f32 %v3120, %v2958
    %v3122 = vadd.f32 %v3121, %v2960
    %v3123 = vadd.f32 %v3122, %v2962
    %v3124 = vadd.f32 %v3123, %v2964
    %v3125 = vadd.f32 %v3124, %v2966
    %v3126 = vadd.f32 %v3125, %v2968
    %v3127 = vadd.f32 %v3126, %v2970
    %v3128 = vadd.f32 %v3127, %v2972
    %v3129 = vadd.f32 %v3128, %v2974
    %v3130 = vadd.f32 %v3129, %v2976
    %v3131 = vadd.f32 %v3130, %v2978
    %v3132 = vadd.f32 %v3131, %v2980
    %v3133 = vadd.f32 %v3132, %v2982
    %v3134 = vadd.f32 %v3133, %v2984
    %v3135 = vadd.f32 %v3134, %v2986
    %v3136 = vadd.f32 %v3135, %v2988
    %v3137 = vadd.f32 %v3136, %v2990
    %v3138 = vadd.f32 %v3137, %v2992
    %v3139 = vadd.f32 %v3138, %v2994
    %v3140 = vadd.f32 %v3139, %v2996
    %v3141 = vadd.f32 %v3140, %v2998
    %v3142 = vadd.f32 %v3141, %v3000
    %v3143 = vrot.slane %v3142, 4
    %v3144 = vadd.f32 %v3142, %v3143
    %v3145 = vrot.slane %v3144, 2
    %v3146 = vadd.f32 %v3144, %v3145
    %v3147 = vrot.slane %v3146, 1
    %v3148 = vadd.f32 %v3146, %v3147
    %v3149 = vmax.f32 %v3037, %v3074
    %3150 = vmax.xlane.f32.xlu0 %v3149
    %v3151 = vpop.xlane.xlu0 %3150
    %v3152 = vmax.f32 %v3111, %v3148
    %3153 = vmax.xlane.f32.xlu0 %v3152
    %v3154 = vpop.xlane.xlu0 %3153
    %v3155 = vsub.f32 %v3037, %v3151
    %v3156 = vsub.f32 %v3074, %v3151
    %v3157 = vsub.f32 %v3111, %v3154
    %v3158 = vsub.f32 %v3148, %v3154
    %v3159 = vmul.f32 %v3155, 1.442695
    %v3160 = vpow.pop %v3159
    %v3161 = vmul.f32 %v3156, 1.442695
    %v3162 = vpow.pop %v3161
    %v3163 = vmul.f32 %v3157, 1.442695
    %v3164 = vpow.pop %v3163
    %v3165 = vmul.f32 %v3158, 1.442695
    %v3166 = vpow.pop %v3165
    %v3167 = vadd.f32 %v3160, %v3162
    %3168 = vadd.xlane.f32.xlu0 %v3167
    %v3169 = vpop.xlane.xlu0 %3168
    %v3170 = vadd.f32 %v3164, %v3166
    %3171 = vadd.xlane.f32.xlu0 %v3170
    %v3172 = vpop.xlane.xlu0 %3171
    %v3173 = vrcp.pop %v3169
    %v3174 = vrcp.pop %v3172
    %v3175 = vmul.f32 %v3160, %v3173
    %v3176 = vmul.f32 %v3162, %v3173
    %v3177 = vmul.f32 %v3164, %v3174
    %v3178 = vmul.f32 %v3166, %v3174
    %v3183 = vcombine.low %v3175, %v3176
    %v3185 = vunpack.c.l.s4 1966171168
    %v3186 = vunpack.c.0.s8 %v3185
    %v3187 = vlaneseq
    %v3188 = vshrl.u32 %v3187, 7
    %v3189 = vsub.s32 %v3186, %v3188
    %v3190 = vrot.slane %v3183, %v3189
    %v3192 = vunpack.c.l.s4 1966171168
    %v3193 = vunpack.c.0.s8 %v3192
    %v3194 = vlaneseq
    %v3195 = vshrl.u32 %v3194, 7
    %v3196 = vsub.s32 %v3193, %v3195
    %v3197 = vrot.slane %v3190, %v3196
    %v3198 = vcombine.low %v3177, %v3178
    %v3200 = vunpack.c.l.s4 1966171168
    %v3201 = vunpack.c.0.s8 %v3200
    %v3202 = vlaneseq
    %v3203 = vshrl.u32 %v3202, 7
    %v3204 = vsub.s32 %v3201, %v3203
    %v3205 = vrot.slane %v3198, %v3204
    %v3207 = vunpack.c.l.s4 1966171168
    %v3208 = vunpack.c.0.s8 %v3207
    %v3209 = vlaneseq
    %v3210 = vshrl.u32 %v3209, 7
    %v3211 = vsub.s32 %v3208, %v3210
    %v3212 = vrot.slane %v3205, %v3211
    %3215 = vst.msk [vmem:[#allocation6] ss:$2 sm:$0x3] %vm2484, %v3197
    %s3216 = scalar_lea.vmem [#allocation6], 4
    %3217 = vst.msk [vmem:[%s3216] ss:$2 sm:$0x3] %vm2484, %v3212
    // Predicated region
    $region14: #{tpu_custom_call.1} parent=1 // pred_check
      _
    $region15: #{tpu_custom_call.1} parent=1 // pred_check_branch
      %3219 = sbr.rel (0) target = $region17
    $region16: #{tpu_custom_call.1} parent=1 // pred_region
      %s3221 = ssub.s32 16384, 16384
      %3222 = vsyncadd [#allocation4], %s3221
      %s3223 = sshll.u32 [#allocation5], 4
      %s3224 = int_to_ptr.vmem [resolvable:$true] %s3223
      %3229 = dma.vmem_to_hbm [thread:$0]  %s3224, 16384, %s2, [#allocation4], 256, 256, 16
    $region17: #{tpu_custom_call.1} parent=1 // pred_fallthru
      _
    // Predicated region
    $region18: #{tpu_custom_call.1} parent=1 // pred_check
      _
    $region19: #{tpu_custom_call.1} parent=1 // pred_check_branch
      %3231 = sbr.rel (0) target = $region21
    $region20: #{tpu_custom_call.1} parent=1 // pred_region
      %s3233 = ssub.s32 128, 128
      %3234 = vsyncadd [#allocation7], %s3233
      %s3235 = sshll.u32 [#allocation6], 4
      %s3236 = int_to_ptr.vmem [resolvable:$true] %s3235
      %3241 = dma.vmem_to_hbm [thread:$0]  %s3236, 128, %s3, [#allocation7], 64, 64, 4
    $region21: #{tpu_custom_call.1} parent=1 // pred_fallthru
      _
    // Predicated region
    $region22: #{tpu_custom_call.1} parent=1 // pred_check
      _
    $region23: #{tpu_custom_call.1} parent=1 // pred_check_branch
      %3243 = sbr.rel (0) target = $region25
    $region24: #{tpu_custom_call.1} parent=1 // pred_region
      %3244 = dma.done [#allocation4], 16384
    $region25: #{tpu_custom_call.1} parent=1 // pred_fallthru
      _
    // Predicated region
    $region26: #{tpu_custom_call.1} parent=1 // pred_check
      _
    $region27: #{tpu_custom_call.1} parent=1 // pred_check_branch
      %3246 = sbr.rel (0) target = $region29
    $region28: #{tpu_custom_call.1} parent=1 // pred_region
      %3247 = dma.done [#allocation7], 128
    $region29: #{tpu_custom_call.1} parent=1 // pred_fallthru
      _
    %3248 = vsyncpa [#allocation3], 1
    %3249 = vsyncpa [#allocation4], 1
    %3250 = vsyncpa [#allocation7], 1

</llo_original>
